<compile_context>
chip_gen: v6e
topology: v6e:2x2x1
jax: 0.10.0
libtpu: 0.0.40
codegen_flags: <defaults>
</compile_context>

<pallas_src>
import functools

import jax
import jax.numpy as jnp
from jax.experimental import pallas as pl
from jax.experimental.pallas import tpu as pltpu


def _round_up(x, m):
    return ((x + m - 1) // m) * m


def _default_vmem_limit():
    """Generation-aware scoped-VMEM limit (~35 MiB on v7x, ~70 MiB on v5e/v6e)."""
    try:
        cap = pltpu.get_tpu_info().vmem_capacity_bytes
    except Exception:
        cap = 64 * 1024 * 1024
    return int(min(cap * 0.55, 100 * 1024 * 1024))


_VMEM_LIMIT = _default_vmem_limit()


def _pick_tile(dim, pref, align):
    """Largest block <= pref that exactly tiles `dim` (full dim if unaligned).

    TODO(synk): very large non-aligned dims fall back to a full-dim block;
    pad on the host in that (unused here) corner case.
    """
    if dim <= pref or dim % align != 0:
        return dim
    t = (pref // align) * align
    while dim % t:
        t -= align
    return t


# ---------------------------------------------------------------------------
# Tiled matmul: f32 activations cast to bf16 in-kernel, bf16 weights, f32
# accumulator, fused bias + activation, configurable output dtype.
# ---------------------------------------------------------------------------
def _matmul_kernel(a_ref, b_ref, bias_ref, o_ref, acc_ref, *, activation):
    @pl.when(pl.program_id(2) == 0)
    def _():
        acc_ref[...] = jnp.zeros_like(acc_ref)

    acc_ref[...] += jnp.dot(a_ref[...].astype(jnp.bfloat16),
                            b_ref[...].astype(jnp.bfloat16),
                            preferred_element_type=jnp.float32)

    @pl.when(pl.program_id(2) == pl.num_programs(2) - 1)
    def _():
        out = acc_ref[...] + bias_ref[...]
        if activation == "relu":
            out = jnp.maximum(out, 0.0)
        elif activation == "tanh":
            out = jnp.tanh(out)
        o_ref[...] = out.astype(o_ref.dtype)


def matmul(a, b, bias, activation="none", out_dtype=jnp.float32,
           tm=512, tn=1024, tk=1024):
    """(M, K) @ (K, N) + bias; weights pre-padded so N % 128 == 0."""
    M, K = a.shape
    K2, N = b.shape
    assert K == K2
    assert N % 128 == 0, "pre-pad weight columns to a lane multiple at init"
    tm = _pick_tile(M, tm, 8)
    tk = _pick_tile(K, tk, 128)
    tn = _pick_tile(N, tn, 128)
    grid = (M // tm, N // tn, K // tk)
    bias2 = bias.reshape(1, N).astype(jnp.float32)

    cost = pl.CostEstimate(
        flops=2 * M * N * K,
        transcendentals=M * N if activation == "tanh" else 0,
        bytes_accessed=(M * K * a.dtype.itemsize + K * N * 2 + 4 * N
                        + M * N * jnp.dtype(out_dtype).itemsize),
    )
    return pl.pallas_call(
        functools.partial(_matmul_kernel, activation=activation),
        out_shape=jax.ShapeDtypeStruct((M, N), out_dtype),
        grid=grid,
        in_specs=[
            pl.BlockSpec((tm, tk), lambda i, j, k: (i, k)),
            pl.BlockSpec((tk, tn), lambda i, j, k: (k, j)),
            pl.BlockSpec((1, tn), lambda i, j, k: (0, j)),
        ],
        out_specs=pl.BlockSpec((tm, tn), lambda i, j, k: (i, j)),
        scratch_shapes=[pltpu.VMEM((tm, tn), jnp.float32)],
        compiler_params=pltpu.CompilerParams(
            dimension_semantics=("parallel", "parallel", "arbitrary"),
            vmem_limit_bytes=_VMEM_LIMIT),
        cost_estimate=cost,
    )(a, b, bias2)


# ---------------------------------------------------------------------------
# Fused audio tower on the MXU (representative ConvNetMel2D):
#   3x3 valid conv -> ReLU -> global mean pool -> Linear(Cmid -> Fp).
# The conv is a single matmul against a banded weight (built once at init);
# the pool+linear is a second matmul.  Bb samples per grid step, Fp=128 lanes.
# ---------------------------------------------------------------------------
def _conv_tower_kernel(x_ref, band_ref, brow_ref, proj_ref, lb_ref, o_ref,
                       *, bb, oh):
    x = x_ref[...]                                   # (Bb, H, Cin*W) f32
    band = band_ref[...]                             # (3*Cin*W, ow*Cmid) bf16
    proj = proj_ref[...]                             # (ow*Cmid, Fp) bf16

    # Patch matrix: per sample, concat the 3 tap-row slabs on the lane axis,
    # then stack samples on the sublane axis.  Everything stays 2-D.
    rows = []
    for s in range(bb):
        xs = x[s]                                    # (H, Cin*W)
        rows.append(jnp.concatenate([xs[i:i + oh, :] for i in range(3)],
                                    axis=1))         # (oh, 3*Cin*W)
    a = jnp.concatenate(rows, axis=0)                # (Bb*oh, 3*Cin*W)

    act = jnp.dot(a.astype(jnp.bfloat16), band,
                  preferred_element_type=jnp.float32) + brow_ref[...]
    act = jnp.maximum(act, 0.0)                      # (Bb*oh, ow*Cmid)

    pooled = jnp.concatenate(
        [jnp.sum(act[s * oh:(s + 1) * oh, :], axis=0, keepdims=True)
         for s in range(bb)], axis=0)                # (Bb, ow*Cmid)

    feat = jnp.dot(pooled.astype(jnp.bfloat16), proj,
                   preferred_element_type=jnp.float32) + lb_ref[...]
    o_ref[...] = feat                                # (Bb, Fp) lane-dense


def conv_net(params, x):
    B, cin, mel, time = x.shape
    band = params["conv_band_w"]
    brow = params["conv_band_b"]
    proj = params["conv_pool_w"]
    lb = params["conv_lin_b"]
    oh = mel - 2
    Fp = proj.shape[1]
    # Layout plumbing only: (B, Cin, H, W) -> (B, H, Cin*W) so in-kernel slices
    # stay 2-D (no in-kernel reshapes).
    xr = jnp.transpose(x, (0, 2, 1, 3)).reshape(B, mel, cin * time)
    xr = xr.astype(jnp.float32)
    bb = 8 if B % 8 == 0 else B                      # 4-8 samples per grid step

    return pl.pallas_call(
        functools.partial(_conv_tower_kernel, bb=bb, oh=oh),
        out_shape=jax.ShapeDtypeStruct((B, Fp), jnp.float32),
        grid=(B // bb,),
        in_specs=[
            pl.BlockSpec((bb, mel, cin * time), lambda i: (i, 0, 0)),
            pl.BlockSpec(band.shape, lambda i: (0, 0)),
            pl.BlockSpec(brow.shape, lambda i: (0, 0)),
            pl.BlockSpec(proj.shape, lambda i: (0, 0)),
            pl.BlockSpec(lb.shape, lambda i: (0, 0)),
        ],
        out_specs=pl.BlockSpec((bb, Fp), lambda i: (i, 0)),
        compiler_params=pltpu.CompilerParams(
            dimension_semantics=("parallel",),
            vmem_limit_bytes=_VMEM_LIMIT),
    )(xr, band, brow, proj, lb)


# ---------------------------------------------------------------------------
# GRU recurrence: the grid IS the time loop.  xg / hseq are streamed one
# timestep per grid step (auto double-buffered), the hidden state is carried
# in a VMEM scratch, whh stays resident (constant index map).  hseq is bf16.
# PyTorch gate packing [r | z | n] for gru_wih / gru_whh / biases.
# ---------------------------------------------------------------------------
def _gru_step_kernel(xg_ref, h0_ref, whh_ref, bhh_ref, hseq_ref, h_scr,
                     *, hidden):
    t = pl.program_id(0)

    @pl.when(t == 0)
    def _():
        h_scr[...] = h0_ref[...]

    H = hidden
    h = h_scr[...]                                    # (Bn, H) f32 carry
    hg = jnp.dot(h.astype(jnp.bfloat16), whh_ref[...],
                 preferred_element_type=jnp.float32) + bhh_ref[...]
    xg = xg_ref[0].astype(jnp.float32)                # (Bn, 3H)
    r = jax.nn.sigmoid(xg[:, 0:H] + hg[:, 0:H])
    z = jax.nn.sigmoid(xg[:, H:2 * H] + hg[:, H:2 * H])
    n = jnp.tanh(xg[:, 2 * H:3 * H] + r * hg[:, 2 * H:3 * H])
    h_new = (1.0 - z) * n + z * h
    h_scr[...] = h_new
    hseq_ref[0] = h_new.astype(hseq_ref.dtype)


def gru_sequence(xg, h0, whh, bhh):
    """xg: (L, Bn, 3H) bf16 time-major input gates -> hseq (L, Bn, H) bf16."""
    L, Bn, threeH = xg.shape
    H = threeH // 3
    # TODO(synk): at production sizes split Bn across the two v7x TensorCores
    # and keep whh pinned in MXU staging (pltpu.matmul_push_rhs).
    return pl.pallas_call(
        functools.partial(_gru_step_kernel, hidden=H),
        out_shape=jax.ShapeDtypeStruct((L, Bn, H), jnp.bfloat16),
        grid=(L,),
        in_specs=[
            pl.BlockSpec((1, Bn, threeH), lambda t: (t, 0, 0)),
            pl.BlockSpec((Bn, H), lambda t: (0, 0)),
            pl.BlockSpec((H, threeH), lambda t: (0, 0)),
            pl.BlockSpec((1, threeH), lambda t: (0, 0)),
        ],
        out_specs=pl.BlockSpec((1, Bn, H), lambda t: (t, 0, 0)),
        scratch_shapes=[pltpu.VMEM((Bn, H), jnp.float32)],
        compiler_params=pltpu.CompilerParams(
            dimension_semantics=("arbitrary",),
            vmem_limit_bytes=_VMEM_LIMIT),
    )(xg, h0, whh, bhh)


# ---------------------------------------------------------------------------
# Vocab projection fused with log-softmax, row-tiled over (Bn*L) rows.
# The padded (H, Vp) weight stays resident across the row grid.
# ---------------------------------------------------------------------------
def _proj_logsoftmax_kernel(h_ref, w_ref, b_ref, o_ref):
    logits = jnp.dot(h_ref[...], w_ref[...],
                     preferred_element_type=jnp.float32) + b_ref[...]
    m = jnp.max(logits, axis=-1, keepdims=True)
    z = logits - m
    lse = jnp.log(jnp.sum(jnp.exp(z), axis=-1, keepdims=True))
    o_ref[...] = z - lse


def proj_logsoftmax(h2d, w, b):
    """h2d: (rows, H) bf16 -> (rows, Vp) f32 log-probs (padded lanes invalid)."""
    rows, H = h2d.shape
    Vp = w.shape[1]
    V = b.shape[0]
    b_p = b.reshape(1, V).astype(jnp.float32)
    if Vp != V:
        b_p = jnp.concatenate(
            [b_p, jnp.full((1, Vp - V), -1e30, jnp.float32)], axis=1)
    R = _pick_tile(rows, 256, 8)

    # TODO(synk): at production vocab sizes (H*Vp bf16 > VMEM, esp. v7x 64 MiB)
    # add a V grid axis with an online softmax / streamed weight tiles.
    cost = pl.CostEstimate(
        flops=2 * rows * H * Vp,
        transcendentals=rows * Vp,
        bytes_accessed=2 * (rows * H + H * Vp) + 4 * (rows * Vp + Vp),
    )
    return pl.pallas_call(
        _proj_logsoftmax_kernel,
        out_shape=jax.ShapeDtypeStruct((rows, Vp), jnp.float32),
        grid=(rows // R,),
        in_specs=[
            pl.BlockSpec((R, H), lambda r: (r, 0)),
            pl.BlockSpec((H, Vp), lambda r: (0, 0)),
            pl.BlockSpec((1, Vp), lambda r: (0, 0)),
        ],
        out_specs=pl.BlockSpec((R, Vp), lambda r: (r, 0)),
        compiler_params=pltpu.CompilerParams(
            dimension_semantics=("parallel",),
            vmem_limit_bytes=_VMEM_LIMIT),
        cost_estimate=cost,
    )(h2d.astype(jnp.bfloat16), w, b_p)


# ---------------------------------------------------------------------------
# Tiny ops kept in plain XLA per perf feedback (pure launch overhead as Pallas).
# ---------------------------------------------------------------------------
def _cosine(a, b, eps=1e-8):
    num = jnp.sum(a * b, axis=-1)
    den = jnp.sqrt(jnp.sum(a * a, axis=-1)) * jnp.sqrt(jnp.sum(b * b, axis=-1))
    return num / jnp.maximum(den, eps)


def user_embed(params, u):
    """UserEmbeddings: lookup -> Linear (feature dim padded to 128 with zeros)."""
    emb = jnp.take(params["user_emb_table"], u, axis=0)       # (B, U)
    return emb @ params["user_lin_w"] + params["user_lin_b"]  # (B, Fp)


# ---------------------------------------------------------------------------
# Language model (GRU conditioned on conv feature vectors).
# ---------------------------------------------------------------------------
def language_model(params, seq, convfeat):
    Bn, L = seq.shape
    emb = jnp.take(params["word_emb"], seq.T, axis=0)          # (L, Bn, Wd)
    Wd = emb.shape[-1]

    h0 = matmul(convfeat, params["init_w"], params["init_b"],
                activation="tanh")                             # (Bn, H) f32
    xg = matmul(emb.reshape(L * Bn, Wd), params["gru_wih"], params["gru_bih"],
                out_dtype=jnp.bfloat16)                        # (L*Bn, 3H) bf16
    H = xg.shape[1] // 3
    xg = xg.reshape(L, Bn, 3 * H)

    hseq = gru_sequence(xg, h0, params["gru_whh"], params["gru_bhh"])

    # Transpose the small H-wide hseq (bf16) instead of the V-wide log-probs.
    h_bm = jnp.transpose(hseq, (1, 0, 2)).reshape(Bn * L, H)
    logp = proj_logsoftmax(h_bm, params["out_w"], params["out_b"])
    V = params["out_b"].shape[0]
    outputs = logp.reshape(Bn, L, -1)[:, :, :V]                # (Bn, L, V)

    h_final = hseq[-1].astype(jnp.float32)                     # (Bn, H)
    featvects = matmul(jnp.concatenate([convfeat, h_final], axis=-1),
                       params["feat_w"], params["feat_b"], activation="tanh")
    return featvects, outputs


def dcuelm_forward(params, u, pos, posseq, neg=None, negseq=None):
    """Mirror of DCUELMNet.forward."""
    u_featvects = user_embed(params, u)                        # (B, Fp)
    B = u_featvects.shape[0]

    if neg is not None and negseq is not None:
        bsz, nn, c, h, w = neg.shape
        # One conv pass and one LM pass over the concatenated pos+neg batch.
        audio = jnp.concatenate([pos, neg.reshape(bsz * nn, c, h, w)], axis=0)
        convfeat = conv_net(params, audio)                     # (B + B*Nn, Fp)
        seqs = jnp.concatenate([posseq, negseq], axis=0)
        featvects, outputs = language_model(params, seqs, convfeat)
        pos_feat = featvects[:B]
        neg_feat = featvects[B:].reshape(B, nn, -1)
        pos_scores = _cosine(u_featvects, pos_feat)            # (B,)
        neg_scores = _cosine(u_featvects[:, None, :], neg_feat)  # (B, Nn)
        scores = pos_scores[:, None] - neg_scores
    else:
        convfeat = conv_net(params, pos)
        featvects, outputs = language_model(params, posseq, convfeat)
        scores = _cosine(u_featvects, featvects)[:, None]      # (B, 1)
    return scores, outputs


# ---------------------------------------------------------------------------
# Parameter init: weights pre-cast to bf16 and pre-padded to lane multiples
# ONCE; conv weights pre-transformed into the banded / pooled MXU matrices.
# Padded feature lanes carry exact zeros, so cosine scores are unaffected.
# ---------------------------------------------------------------------------
def init_params(key, *, user_count, user_embdim, feature_dim, word_embdim,
                hidden_size, vocab_size, conv_mid, conv_in, mel, time):
    assert hidden_size % 128 == 0, "hidden size must be lane-aligned"
    ks = jax.random.split(key, 12)
    s = 0.1
    F, H, Wd, V, U = feature_dim, hidden_size, word_embdim, vocab_size, user_embdim
    Fp = _round_up(F, 128)
    Vp = _round_up(V, 128)
    oh, ow = mel - 2, time - 2
    f32, bf16 = jnp.float32, jnp.bfloat16

    def pad_cols(w, n):
        return jnp.pad(w, ((0, 0), (0, n - w.shape[1])))

    # Conv tower (representative ConvNetMel2D): 3x3 conv weights -> banded
    # matrix band[(i, ci, w), (xo, c)] = wc[ci, i, w - xo, c].
    wc = s * jax.random.normal(ks[0], (conv_in, 3, 3, conv_mid))
    cb = jnp.zeros((conv_mid,), f32)
    lin_w = pad_cols(s * jax.random.normal(ks[1], (conv_mid, F)), Fp)
    band = jnp.zeros((3, conv_in, time, ow, conv_mid), f32)
    xo = jnp.arange(ow)
    for j in range(3):
        band = band.at[:, :, xo + j, xo, :].add(
            jnp.transpose(wc[:, :, j, :], (1, 0, 2))[:, :, None, :])
    band = band.reshape(3 * conv_in * time, ow * conv_mid)
    brow = jnp.broadcast_to(cb, (ow, conv_mid)).reshape(1, ow * conv_mid)
    pool_w = (jnp.broadcast_to(lin_w[None], (ow, conv_mid, Fp))
              .reshape(ow * conv_mid, Fp) / float(oh * ow))

    fw = s * jax.random.normal(ks[8], (F + H, F))
    feat_w = jnp.zeros((Fp + H, Fp), f32)
    feat_w = feat_w.at[:F, :F].set(fw[:F]).at[Fp:Fp + H, :F].set(fw[F:])

    return {
        "user_emb_table": (s * jax.random.normal(ks[2], (user_count, U))).astype(f32),
        "user_lin_w": pad_cols(s * jax.random.normal(ks[3], (U, F)), Fp).astype(f32),
        "user_lin_b": jnp.zeros((Fp,), f32),
        "conv_band_w": band.astype(bf16),
        "conv_band_b": brow.astype(f32),
        "conv_pool_w": pool_w.astype(bf16),
        "conv_lin_b": jnp.zeros((1, Fp), f32),
        "word_emb": (s * jax.random.normal(ks[4], (V, Wd))).astype(f32),
        "init_w": jnp.pad(s * jax.random.normal(ks[5], (F, H)),
                          ((0, Fp - F), (0, 0))).astype(bf16),
        "init_b": jnp.zeros((H,), f32),
        "gru_wih": (s * jax.random.normal(ks[6], (Wd, 3 * H))).astype(bf16),
        "gru_bih": jnp.zeros((3 * H,), f32),
        "gru_whh": (s * jax.random.normal(ks[7], (H, 3 * H))).astype(bf16),
        "gru_bhh": jnp.zeros((1, 3 * H), f32),
        "feat_w": feat_w.astype(bf16),
        "feat_b": jnp.zeros((Fp,), f32),
        "out_w": pad_cols(s * jax.random.normal(ks[9], (H, V)), Vp).astype(bf16),
        "out_b": jnp.zeros((V,), f32),
    }


# ---------------------------------------------------------------------------
# Demo
# ---------------------------------------------------------------------------
if __name__ == "__main__":
    B = 2            # batch
    NNEG = 3         # negative samples per positive
    MEL, TIME = 16, 16
    FEATURE_DIM = 32
    USER_EMBDIM = 16
    USER_COUNT = 10
    WORD_EMBDIM = 32
    HIDDEN = 128     # lane-aligned hidden size -> aligned GRU gate slices
    VOCAB = 50
    SEQLEN = 8
    CONV_MID = 16

    key = jax.random.PRNGKey(0)
    kp, k1, k2, k3, k4, k5 = jax.random.split(key, 6)

    params = init_params(kp, user_count=USER_COUNT, user_embdim=USER_EMBDIM,
                         feature_dim=FEATURE_DIM, word_embdim=WORD_EMBDIM,
                         hidden_size=HIDDEN, vocab_size=VOCAB,
                         conv_mid=CONV_MID, conv_in=1, mel=MEL, time=TIME)

    u = jax.random.randint(k1, (B,), 0, USER_COUNT, dtype=jnp.int32)
    pos = jax.random.normal(k2, (B, 1, MEL, TIME), jnp.float32)
    posseq = jax.random.randint(k3, (B, SEQLEN), 0, VOCAB, dtype=jnp.int32)
    neg = jax.random.normal(k4, (B, NNEG, 1, MEL, TIME), jnp.float32)
    negseq = jax.random.randint(k5, (B * NNEG, SEQLEN), 0, VOCAB, dtype=jnp.int32)

    fwd = jax.jit(dcuelm_forward)
    scores, outputs = fwd(params, u, pos, posseq, neg, negseq)
    jax.block_until_ready((scores, outputs))
    assert scores.shape == (B, NNEG), scores.shape
    assert outputs.shape == (B + B * NNEG, SEQLEN, VOCAB), outputs.shape
    assert bool(jnp.all(jnp.isfinite(scores))) and bool(jnp.all(jnp.isfinite(outputs)))

    # positive-only path (neg=None) of DCUELMNet.forward
    fwd_pos = jax.jit(lambda p, uu, pp, ps: dcuelm_forward(p, uu, pp, ps))
    s2, o2 = fwd_pos(params, u, pos, posseq)
    jax.block_until_ready((s2, o2))
    assert s2.shape == (B, 1), s2.shape
    assert o2.shape == (B, SEQLEN, VOCAB), o2.shape
    assert bool(jnp.all(jnp.isfinite(s2))) and bool(jnp.all(jnp.isfinite(o2)))

    print("KERNEL_OK")
</pallas_src>

<mosaic_0001>
module attributes {stable_mosaic.version = 11 : i64} {
  func.func @_matmul_kernel(%arg0: i32, %arg1: i32, %arg2: i32, %arg3: memref<8x128xf32, #tpu.memory_space<vmem>>, %arg4: memref<128x128xbf16, #tpu.memory_space<vmem>>, %arg5: memref<1x128xf32, #tpu.memory_space<vmem>>, %arg6: memref<8x128xf32, #tpu.memory_space<vmem>>, %arg7: memref<8x128xf32, #tpu.memory_space<vmem>>) attributes {dimension_semantics = [#tpu.dimension_semantics<parallel>, #tpu.dimension_semantics<parallel>, #tpu.dimension_semantics<arbitrary>], iteration_bounds = array<i64: 1, 1, 1>, scalar_prefetch = 0 : i64, scratch_operands = 1 : i64, tpu.core_type = #tpu.core_type<tc>, window_params = [{transform_indices = @transform_0, window_bounds = array<i64: 8, 128>}, {transform_indices = @transform_1, window_bounds = array<i64: 128, 128>}, {transform_indices = @transform_2, window_bounds = array<i64: 1, 128>}, {transform_indices = @transform_3, window_bounds = array<i64: 8, 128>}]} {
    %c0_i32 = arith.constant 0 : i32
    %0 = arith.cmpi eq, %arg2, %c0_i32 : i32
    %1 = arith.extui %0 : i1 to i32
    %c0_i32_0 = arith.constant 0 : i32
    %2 = arith.cmpi ne, %1, %c0_i32_0 : i32
    scf.if %2 {
      %cst_10 = arith.constant 0.000000e+00 : f32
      %13 = vector.broadcast %cst_10 : f32 to vector<8x128xf32>
      %c0_11 = arith.constant 0 : index
      %c0_12 = arith.constant 0 : index
      %14 = vector.load %arg7[%c0_11, %c0_12] : memref<8x128xf32, #tpu.memory_space<vmem>>, vector<8x128xf32>
      tpu.vector_store %arg7[%c0_11, %c0_12], %13 {strides = array<i32>} : memref<8x128xf32, #tpu.memory_space<vmem>>, vector<8x128xf32>,
    } else {
    }
    %c0 = arith.constant 0 : index
    %c0_1 = arith.constant 0 : index
    %3 = vector.load %arg7[%c0, %c0_1] : memref<8x128xf32, #tpu.memory_space<vmem>>, vector<8x128xf32>
    %c0_2 = arith.constant 0 : index
    %c0_3 = arith.constant 0 : index
    %4 = vector.load %arg3[%c0_2, %c0_3] : memref<8x128xf32, #tpu.memory_space<vmem>>, vector<8x128xf32>
    %5 = arith.truncf %4 : vector<8x128xf32> to vector<8x128xbf16>
    %c0_4 = arith.constant 0 : index
    %c0_5 = arith.constant 0 : index
    %6 = vector.load %arg4[%c0_4, %c0_5] : memref<128x128xbf16, #tpu.memory_space<vmem>>, vector<128x128xbf16>
    %cst = arith.constant dense<0.000000e+00> : vector<8x128xf32>
    %7 = tpu.matmul %5, %6, %cst {dimension_numbers = #tpu.dot_dimension_numbers<[1], [0], [0], [1], [0, 0, 1, 1], [], []>} : vector<8x128xbf16>, vector<128x128xbf16>, vector<8x128xf32> -> vector<8x128xf32>
    %8 = arith.addf %3, %7 : vector<8x128xf32>
    %c0_6 = arith.constant 0 : index
    %c0_7 = arith.constant 0 : index
    %9 = vector.load %arg7[%c0_6, %c0_7] : memref<8x128xf32, #tpu.memory_space<vmem>>, vector<8x128xf32>
    tpu.vector_store %arg7[%c0_6, %c0_7], %8 {strides = array<i32>} : memref<8x128xf32, #tpu.memory_space<vmem>>, vector<8x128xf32>,
    %c0_i32_8 = arith.constant 0 : i32
    %10 = arith.cmpi eq, %arg2, %c0_i32_8 : i32
    %11 = arith.extui %10 : i1 to i32
    %c0_i32_9 = arith.constant 0 : i32
    %12 = arith.cmpi ne, %11, %c0_i32_9 : i32
    scf.if %12 {
      %c0_10 = arith.constant 0 : index
      %c0_11 = arith.constant 0 : index
      %13 = vector.load %arg7[%c0_10, %c0_11] : memref<8x128xf32, #tpu.memory_space<vmem>>, vector<8x128xf32>
      %c0_12 = arith.constant 0 : index
      %c0_13 = arith.constant 0 : index
      %14 = vector.load %arg5[%c0_12, %c0_13] : memref<1x128xf32, #tpu.memory_space<vmem>>, vector<1x128xf32>
      %15 = vector.broadcast %14 : vector<1x128xf32> to vector<8x128xf32>
      %16 = arith.addf %13, %15 : vector<8x128xf32>
      %17 = math.tanh %16 : vector<8x128xf32>
      %c0_14 = arith.constant 0 : index
      %c0_15 = arith.constant 0 : index
      %18 = vector.load %arg6[%c0_14, %c0_15] : memref<8x128xf32, #tpu.memory_space<vmem>>, vector<8x128xf32>
      tpu.vector_store %arg6[%c0_14, %c0_15], %17 {strides = array<i32>} : memref<8x128xf32, #tpu.memory_space<vmem>>, vector<8x128xf32>,
    } else {
    }
    return
  }
  func.func @transform_0(%arg0: i32, %arg1: i32, %arg2: i32) -> (i32, i32) {
    %c0_i32 = arith.constant 0 : i32
    return %arg0, %arg2 : i32, i32
  }
  func.func @transform_1(%arg0: i32, %arg1: i32, %arg2: i32) -> (i32, i32) {
    %c0_i32 = arith.constant 0 : i32
    return %arg2, %arg1 : i32, i32
  }
  func.func @transform_2(%arg0: i32, %arg1: i32, %arg2: i32) -> (i32, i32) {
    %c0_i32 = arith.constant 0 : i32
    %c0_i32_0 = arith.constant 0 : i32
    return %c0_i32, %arg1 : i32, i32
  }
  func.func @transform_3(%arg0: i32, %arg1: i32, %arg2: i32) -> (i32, i32) {
    %c0_i32 = arith.constant 0 : i32
    return %arg0, %arg1 : i32, i32
  }
}

module attributes {stable_mosaic.version = 11 : i64} {
  func.func @_matmul_kernel(%arg0: i32, %arg1: i32, %arg2: i32, %arg3: memref<64x32xf32, #tpu.memory_space<vmem>>, %arg4: memref<32x384xbf16, #tpu.memory_space<vmem>>, %arg5: memref<1x384xf32, #tpu.memory_space<vmem>>, %arg6: memref<64x384xbf16, #tpu.memory_space<vmem>>, %arg7: memref<64x384xf32, #tpu.memory_space<vmem>>) attributes {dimension_semantics = [#tpu.dimension_semantics<parallel>, #tpu.dimension_semantics<parallel>, #tpu.dimension_semantics<arbitrary>], iteration_bounds = array<i64: 1, 1, 1>, scalar_prefetch = 0 : i64, scratch_operands = 1 : i64, tpu.core_type = #tpu.core_type<tc>, window_params = [{transform_indices = @transform_0, window_bounds = array<i64: 64, 32>}, {transform_indices = @transform_1, window_bounds = array<i64: 32, 384>}, {transform_indices = @transform_2, window_bounds = array<i64: 1, 384>}, {transform_indices = @transform_3, window_bounds = array<i64: 64, 384>}]} {
    %c0_i32 = arith.constant 0 : i32
    %0 = arith.cmpi eq, %arg2, %c0_i32 : i32
    %1 = arith.extui %0 : i1 to i32
    %c0_i32_0 = arith.constant 0 : i32
    %2 = arith.cmpi ne, %1, %c0_i32_0 : i32
    scf.if %2 {
      %cst_10 = arith.constant 0.000000e+00 : f32
      %13 = vector.broadcast %cst_10 : f32 to vector<64x384xf32>
      %c0_11 = arith.constant 0 : index
      %c0_12 = arith.constant 0 : index
      %14 = vector.load %arg7[%c0_11, %c0_12] : memref<64x384xf32, #tpu.memory_space<vmem>>, vector<64x384xf32>
      tpu.vector_store %arg7[%c0_11, %c0_12], %13 {strides = array<i32>} : memref<64x384xf32, #tpu.memory_space<vmem>>, vector<64x384xf32>,
    } else {
    }
    %c0 = arith.constant 0 : index
    %c0_1 = arith.constant 0 : index
    %3 = vector.load %arg7[%c0, %c0_1] : memref<64x384xf32, #tpu.memory_space<vmem>>, vector<64x384xf32>
    %c0_2 = arith.constant 0 : index
    %c0_3 = arith.constant 0 : index
    %4 = vector.load %arg3[%c0_2, %c0_3] : memref<64x32xf32, #tpu.memory_space<vmem>>, vector<64x32xf32>
    %5 = arith.truncf %4 : vector<64x32xf32> to vector<64x32xbf16>
    %c0_4 = arith.constant 0 : index
    %c0_5 = arith.constant 0 : index
    %6 = vector.load %arg4[%c0_4, %c0_5] : memref<32x384xbf16, #tpu.memory_space<vmem>>, vector<32x384xbf16>
    %cst = arith.constant dense<0.000000e+00> : vector<64x384xf32>
    %7 = tpu.matmul %5, %6, %cst {dimension_numbers = #tpu.dot_dimension_numbers<[1], [0], [0], [1], [0, 0, 1, 1], [], []>} : vector<64x32xbf16>, vector<32x384xbf16>, vector<64x384xf32> -> vector<64x384xf32>
    %8 = arith.addf %3, %7 : vector<64x384xf32>
    %c0_6 = arith.constant 0 : index
    %c0_7 = arith.constant 0 : index
    %9 = vector.load %arg7[%c0_6, %c0_7] : memref<64x384xf32, #tpu.memory_space<vmem>>, vector<64x384xf32>
    tpu.vector_store %arg7[%c0_6, %c0_7], %8 {strides = array<i32>} : memref<64x384xf32, #tpu.memory_space<vmem>>, vector<64x384xf32>,
    %c0_i32_8 = arith.constant 0 : i32
    %10 = arith.cmpi eq, %arg2, %c0_i32_8 : i32
    %11 = arith.extui %10 : i1 to i32
    %c0_i32_9 = arith.constant 0 : i32
    %12 = arith.cmpi ne, %11, %c0_i32_9 : i32
    scf.if %12 {
      %c0_10 = arith.constant 0 : index
      %c0_11 = arith.constant 0 : index
      %13 = vector.load %arg7[%c0_10, %c0_11] : memref<64x384xf32, #tpu.memory_space<vmem>>, vector<64x384xf32>
      %c0_12 = arith.constant 0 : index
      %c0_13 = arith.constant 0 : index
      %14 = vector.load %arg5[%c0_12, %c0_13] : memref<1x384xf32, #tpu.memory_space<vmem>>, vector<1x384xf32>
      %15 = vector.broadcast %14 : vector<1x384xf32> to vector<64x384xf32>
      %16 = arith.addf %13, %15 : vector<64x384xf32>
      %17 = arith.truncf %16 : vector<64x384xf32> to vector<64x384xbf16>
      %c0_14 = arith.constant 0 : index
      %c0_15 = arith.constant 0 : index
      %18 = vector.load %arg6[%c0_14, %c0_15] : memref<64x384xbf16, #tpu.memory_space<vmem>>, vector<64x384xbf16>
      tpu.vector_store %arg6[%c0_14, %c0_15], %17 {strides = array<i32>} : memref<64x384xbf16, #tpu.memory_space<vmem>>, vector<64x384xbf16>,
    } else {
    }
    return
  }
  func.func @transform_0(%arg0: i32, %arg1: i32, %arg2: i32) -> (i32, i32) {
    %c0_i32 = arith.constant 0 : i32
    return %arg0, %arg2 : i32, i32
  }
  func.func @transform_1(%arg0: i32, %arg1: i32, %arg2: i32) -> (i32, i32) {
    %c0_i32 = arith.constant 0 : i32
    return %arg2, %arg1 : i32, i32
  }
  func.func @transform_2(%arg0: i32, %arg1: i32, %arg2: i32) -> (i32, i32) {
    %c0_i32 = arith.constant 0 : i32
    %c0_i32_0 = arith.constant 0 : i32
    return %c0_i32, %arg1 : i32, i32
  }
  func.func @transform_3(%arg0: i32, %arg1: i32, %arg2: i32) -> (i32, i32) {
    %c0_i32 = arith.constant 0 : i32
    return %arg0, %arg1 : i32, i32
  }
}

module attributes {stable_mosaic.version = 11 : i64} {
  func.func @_gru_step_kernel(%arg0: i32, %arg1: memref<1x8x384xbf16, #tpu.memory_space<vmem>>, %arg2: memref<8x128xf32, #tpu.memory_space<vmem>>, %arg3: memref<128x384xbf16, #tpu.memory_space<vmem>>, %arg4: memref<1x384xf32, #tpu.memory_space<vmem>>, %arg5: memref<1x8x128xbf16, #tpu.memory_space<vmem>>, %arg6: memref<8x128xf32, #tpu.memory_space<vmem>>) attributes {dimension_semantics = [#tpu.dimension_semantics<arbitrary>], iteration_bounds = array<i64: 8>, scalar_prefetch = 0 : i64, scratch_operands = 1 : i64, tpu.core_type = #tpu.core_type<tc>, window_params = [{transform_indices = @transform_0, window_bounds = array<i64: 1, 8, 384>}, {pipeline_mode = #tpu.pipeline_mode<synchronous>, transform_indices = @transform_1, window_bounds = array<i64: 8, 128>}, {pipeline_mode = #tpu.pipeline_mode<synchronous>, transform_indices = @transform_2, window_bounds = array<i64: 128, 384>}, {pipeline_mode = #tpu.pipeline_mode<synchronous>, transform_indices = @transform_3, window_bounds = array<i64: 1, 384>}, {transform_indices = @transform_4, window_bounds = array<i64: 1, 8, 128>}]} {
    %c0_i32 = arith.constant 0 : i32
    %0 = arith.cmpi eq, %arg0, %c0_i32 : i32
    %1 = arith.extui %0 : i1 to i32
    %c0_i32_0 = arith.constant 0 : i32
    %2 = arith.cmpi ne, %1, %c0_i32_0 : i32
    scf.if %2 {
      %c0_17 = arith.constant 0 : index
      %c0_18 = arith.constant 0 : index
      %44 = vector.load %arg2[%c0_17, %c0_18] : memref<8x128xf32, #tpu.memory_space<vmem>>, vector<8x128xf32>
      %c0_19 = arith.constant 0 : index
      %c0_20 = arith.constant 0 : index
      %45 = vector.load %arg6[%c0_19, %c0_20] : memref<8x128xf32, #tpu.memory_space<vmem>>, vector<8x128xf32>
      tpu.vector_store %arg6[%c0_19, %c0_20], %44 {strides = array<i32>} : memref<8x128xf32, #tpu.memory_space<vmem>>, vector<8x128xf32>,
    } else {
    }
    %c0 = arith.constant 0 : index
    %c0_1 = arith.constant 0 : index
    %3 = vector.load %arg6[%c0, %c0_1] : memref<8x128xf32, #tpu.memory_space<vmem>>, vector<8x128xf32>
    %4 = arith.truncf %3 : vector<8x128xf32> to vector<8x128xbf16>
    %c0_2 = arith.constant 0 : index
    %c0_3 = arith.constant 0 : index
    %5 = vector.load %arg3[%c0_2, %c0_3] : memref<128x384xbf16, #tpu.memory_space<vmem>>, vector<128x384xbf16>
    %cst = arith.constant dense<0.000000e+00> : vector<8x384xf32>
    %6 = tpu.matmul %4, %5, %cst {dimension_numbers = #tpu.dot_dimension_numbers<[1], [0], [0], [1], [0, 0, 1, 1], [], []>} : vector<8x128xbf16>, vector<128x384xbf16>, vector<8x384xf32> -> vector<8x384xf32>
    %c0_4 = arith.constant 0 : index
    %c0_5 = arith.constant 0 : index
    %7 = vector.load %arg4[%c0_4, %c0_5] : memref<1x384xf32, #tpu.memory_space<vmem>>, vector<1x384xf32>
    %8 = vector.broadcast %7 : vector<1x384xf32> to vector<8x384xf32>
    %9 = arith.addf %6, %8 : vector<8x384xf32>
    %c0_6 = arith.constant 0 : index
    %c0_7 = arith.constant 0 : index
    %c0_8 = arith.constant 0 : index
    %10 = vector.load %arg1[%c0_6, %c0_7, %c0_8] : memref<1x8x384xbf16, #tpu.memory_space<vmem>>, vector<1x8x384xbf16>
    %11 = vector.shape_cast %10 : vector<1x8x384xbf16> to vector<8x384xbf16>
    %12 = arith.extf %11 : vector<8x384xbf16> to vector<8x384xf32>
    %13 = vector.extract_strided_slice %12 {offsets = [0, 0], sizes = [8, 128], strides = [1, 1]} : vector<8x384xf32> to vector<8x128xf32>
    %14 = vector.extract_strided_slice %9 {offsets = [0, 0], sizes = [8, 128], strides = [1, 1]} : vector<8x384xf32> to vector<8x128xf32>
    %15 = arith.addf %13, %14 : vector<8x128xf32>
    %16 = arith.negf %15 : vector<8x128xf32>
    %17 = math.exp %16 : vector<8x128xf32>
    %cst_9 = arith.constant 1.000000e+00 : f32
    %18 = vector.broadcast %cst_9 : f32 to vector<8x128xf32>
    %19 = arith.addf %18, %17 : vector<8x128xf32>
    %20 = arith.divf %18, %19 : vector<8x128xf32>
    %21 = vector.extract_strided_slice %12 {offsets = [0, 128], sizes = [8, 128], strides = [1, 1]} : vector<8x384xf32> to vector<8x128xf32>
    %22 = vector.extract_strided_slice %9 {offsets = [0, 128], sizes = [8, 128], strides = [1, 1]} : vector<8x384xf32> to vector<8x128xf32>
    %23 = arith.addf %21, %22 : vector<8x128xf32>
    %24 = arith.negf %23 : vector<8x128xf32>
    %25 = math.exp %24 : vector<8x128xf32>
    %cst_10 = arith.constant 1.000000e+00 : f32
    %26 = vector.broadcast %cst_10 : f32 to vector<8x128xf32>
    %27 = arith.addf %26, %25 : vector<8x128xf32>
    %28 = arith.divf %26, %27 : vector<8x128xf32>
    %29 = vector.extract_strided_slice %12 {offsets = [0, 256], sizes = [8, 128], strides = [1, 1]} : vector<8x384xf32> to vector<8x128xf32>
    %30 = vector.extract_strided_slice %9 {offsets = [0, 256], sizes = [8, 128], strides = [1, 1]} : vector<8x384xf32> to vector<8x128xf32>
    %31 = arith.mulf %20, %30 : vector<8x128xf32>
    %32 = arith.addf %29, %31 : vector<8x128xf32>
    %33 = math.tanh %32 : vector<8x128xf32>
    %cst_11 = arith.constant 1.000000e+00 : f32
    %34 = vector.broadcast %cst_11 : f32 to vector<8x128xf32>
    %35 = arith.subf %34, %28 : vector<8x128xf32>
    %36 = arith.mulf %35, %33 : vector<8x128xf32>
    %37 = arith.mulf %28, %3 : vector<8x128xf32>
    %38 = arith.addf %36, %37 : vector<8x128xf32>
    %c0_12 = arith.constant 0 : index
    %c0_13 = arith.constant 0 : index
    %39 = vector.load %arg6[%c0_12, %c0_13] : memref<8x128xf32, #tpu.memory_space<vmem>>, vector<8x128xf32>
    tpu.vector_store %arg6[%c0_12, %c0_13], %38 {strides = array<i32>} : memref<8x128xf32, #tpu.memory_space<vmem>>, vector<8x128xf32>,
    %40 = arith.truncf %38 : vector<8x128xf32> to vector<8x128xbf16>
    %c0_14 = arith.constant 0 : index
    %c0_15 = arith.constant 0 : index
    %c0_16 = arith.constant 0 : index
    %41 = vector.load %arg5[%c0_14, %c0_15, %c0_16] : memref<1x8x128xbf16, #tpu.memory_space<vmem>>, vector<1x8x128xbf16>
    %42 = vector.shape_cast %41 : vector<1x8x128xbf16> to vector<8x128xbf16>
    %43 = vector.shape_cast %40 : vector<8x128xbf16> to vector<1x8x128xbf16>
    tpu.vector_store %arg5[%c0_14, %c0_15, %c0_16], %43 {strides = array<i32>} : memref<1x8x128xbf16, #tpu.memory_space<vmem>>, vector<1x8x128xbf16>,
    return
  }
  func.func @transform_0(%arg0: i32) -> (i32, i32, i32) {
    %c0_i32 = arith.constant 0 : i32
    %c0_i32_0 = arith.constant 0 : i32
    %c0_i32_1 = arith.constant 0 : i32
    return %arg0, %c0_i32, %c0_i32_0 : i32, i32, i32
  }
  func.func @transform_1(%arg0: i32) -> (i32, i32) {
    %c0_i32 = arith.constant 0 : i32
    %c0_i32_0 = arith.constant 0 : i32
    %c0_i32_1 = arith.constant 0 : i32
    return %c0_i32, %c0_i32_0 : i32, i32
  }
  func.func @transform_2(%arg0: i32) -> (i32, i32) {
    %c0_i32 = arith.constant 0 : i32
    %c0_i32_0 = arith.constant 0 : i32
    %c0_i32_1 = arith.constant 0 : i32
    return %c0_i32, %c0_i32_0 : i32, i32
  }
  func.func @transform_3(%arg0: i32) -> (i32, i32) {
    %c0_i32 = arith.constant 0 : i32
    %c0_i32_0 = arith.constant 0 : i32
    %c0_i32_1 = arith.constant 0 : i32
    return %c0_i32, %c0_i32_0 : i32, i32
  }
  func.func @transform_4(%arg0: i32) -> (i32, i32, i32) {
    %c0_i32 = arith.constant 0 : i32
    %c0_i32_0 = arith.constant 0 : i32
    %c0_i32_1 = arith.constant 0 : i32
    return %arg0, %c0_i32, %c0_i32_0 : i32, i32, i32
  }
}

module attributes {stable_mosaic.version = 11 : i64} {
  func.func @_conv_tower_kernel(%arg0: i32, %arg1: memref<8x16x16xf32, #tpu.memory_space<vmem>>, %arg2: memref<48x224xbf16, #tpu.memory_space<vmem>>, %arg3: memref<1x224xf32, #tpu.memory_space<vmem>>, %arg4: memref<224x128xbf16, #tpu.memory_space<vmem>>, %arg5: memref<1x128xf32, #tpu.memory_space<vmem>>, %arg6: memref<8x128xf32, #tpu.memory_space<vmem>>) attributes {dimension_semantics = [#tpu.dimension_semantics<parallel>], iteration_bounds = array<i64: 1>, scalar_prefetch = 0 : i64, scratch_operands = 0 : i64, tpu.core_type = #tpu.core_type<tc>, window_params = [{transform_indices = @transform_0, window_bounds = array<i64: 8, 16, 16>}, {pipeline_mode = #tpu.pipeline_mode<synchronous>, transform_indices = @transform_1, window_bounds = array<i64: 48, 224>}, {pipeline_mode = #tpu.pipeline_mode<synchronous>, transform_indices = @transform_2, window_bounds = array<i64: 1, 224>}, {pipeline_mode = #tpu.pipeline_mode<synchronous>, transform_indices = @transform_3, window_bounds = array<i64: 224, 128>}, {pipeline_mode = #tpu.pipeline_mode<synchronous>, transform_indices = @transform_4, window_bounds = array<i64: 1, 128>}, {transform_indices = @transform_5, window_bounds = array<i64: 8, 128>}]} {
    %c0 = arith.constant 0 : index
    %c0_0 = arith.constant 0 : index
    %c0_1 = arith.constant 0 : index
    %0 = vector.load %arg1[%c0, %c0_0, %c0_1] : memref<8x16x16xf32, #tpu.memory_space<vmem>>, vector<8x16x16xf32>
    %c0_2 = arith.constant 0 : index
    %c0_3 = arith.constant 0 : index
    %1 = vector.load %arg2[%c0_2, %c0_3] : memref<48x224xbf16, #tpu.memory_space<vmem>>, vector<48x224xbf16>
    %c0_4 = arith.constant 0 : index
    %c0_5 = arith.constant 0 : index
    %2 = vector.load %arg4[%c0_4, %c0_5] : memref<224x128xbf16, #tpu.memory_space<vmem>>, vector<224x128xbf16>
    %3 = vector.extract_strided_slice %0 {offsets = [0, 0, 0], sizes = [1, 16, 16], strides = [1, 1, 1]} : vector<8x16x16xf32> to vector<1x16x16xf32>
    %4 = vector.shape_cast %3 : vector<1x16x16xf32> to vector<16x16xf32>
    %5 = vector.extract_strided_slice %4 {offsets = [0, 0], sizes = [14, 16], strides = [1, 1]} : vector<16x16xf32> to vector<14x16xf32>
    %6 = vector.extract_strided_slice %4 {offsets = [1, 0], sizes = [14, 16], strides = [1, 1]} : vector<16x16xf32> to vector<14x16xf32>
    %7 = vector.extract_strided_slice %4 {offsets = [2, 0], sizes = [14, 16], strides = [1, 1]} : vector<16x16xf32> to vector<14x16xf32>
    %8 = tpu.concatenate %5, %6, %7 in 1 : vector<14x16xf32>, vector<14x16xf32>, vector<14x16xf32> -> vector<14x48xf32>
    %9 = vector.extract_strided_slice %0 {offsets = [1, 0, 0], sizes = [1, 16, 16], strides = [1, 1, 1]} : vector<8x16x16xf32> to vector<1x16x16xf32>
    %10 = vector.shape_cast %9 : vector<1x16x16xf32> to vector<16x16xf32>
    %11 = vector.extract_strided_slice %10 {offsets = [0, 0], sizes = [14, 16], strides = [1, 1]} : vector<16x16xf32> to vector<14x16xf32>
    %12 = vector.extract_strided_slice %10 {offsets = [1, 0], sizes = [14, 16], strides = [1, 1]} : vector<16x16xf32> to vector<14x16xf32>
    %13 = vector.extract_strided_slice %10 {offsets = [2, 0], sizes = [14, 16], strides = [1, 1]} : vector<16x16xf32> to vector<14x16xf32>
    %14 = tpu.concatenate %11, %12, %13 in 1 : vector<14x16xf32>, vector<14x16xf32>, vector<14x16xf32> -> vector<14x48xf32>
    %15 = vector.extract_strided_slice %0 {offsets = [2, 0, 0], sizes = [1, 16, 16], strides = [1, 1, 1]} : vector<8x16x16xf32> to vector<1x16x16xf32>
    %16 = vector.shape_cast %15 : vector<1x16x16xf32> to vector<16x16xf32>
    %17 = vector.extract_strided_slice %16 {offsets = [0, 0], sizes = [14, 16], strides = [1, 1]} : vector<16x16xf32> to vector<14x16xf32>
    %18 = vector.extract_strided_slice %16 {offsets = [1, 0], sizes = [14, 16], strides = [1, 1]} : vector<16x16xf32> to vector<14x16xf32>
    %19 = vector.extract_strided_slice %16 {offsets = [2, 0], sizes = [14, 16], strides = [1, 1]} : vector<16x16xf32> to vector<14x16xf32>
    %20 = tpu.concatenate %17, %18, %19 in 1 : vector<14x16xf32>, vector<14x16xf32>, vector<14x16xf32> -> vector<14x48xf32>
    %21 = vector.extract_strided_slice %0 {offsets = [3, 0, 0], sizes = [1, 16, 16], strides = [1, 1, 1]} : vector<8x16x16xf32> to vector<1x16x16xf32>
    %22 = vector.shape_cast %21 : vector<1x16x16xf32> to vector<16x16xf32>
    %23 = vector.extract_strided_slice %22 {offsets = [0, 0], sizes = [14, 16], strides = [1, 1]} : vector<16x16xf32> to vector<14x16xf32>
    %24 = vector.extract_strided_slice %22 {offsets = [1, 0], sizes = [14, 16], strides = [1, 1]} : vector<16x16xf32> to vector<14x16xf32>
    %25 = vector.extract_strided_slice %22 {offsets = [2, 0], sizes = [14, 16], strides = [1, 1]} : vector<16x16xf32> to vector<14x16xf32>
    %26 = tpu.concatenate %23, %24, %25 in 1 : vector<14x16xf32>, vector<14x16xf32>, vector<14x16xf32> -> vector<14x48xf32>
    %27 = vector.extract_strided_slice %0 {offsets = [4, 0, 0], sizes = [1, 16, 16], strides = [1, 1, 1]} : vector<8x16x16xf32> to vector<1x16x16xf32>
    %28 = vector.shape_cast %27 : vector<1x16x16xf32> to vector<16x16xf32>
    %29 = vector.extract_strided_slice %28 {offsets = [0, 0], sizes = [14, 16], strides = [1, 1]} : vector<16x16xf32> to vector<14x16xf32>
    %30 = vector.extract_strided_slice %28 {offsets = [1, 0], sizes = [14, 16], strides = [1, 1]} : vector<16x16xf32> to vector<14x16xf32>
    %31 = vector.extract_strided_slice %28 {offsets = [2, 0], sizes = [14, 16], strides = [1, 1]} : vector<16x16xf32> to vector<14x16xf32>
    %32 = tpu.concatenate %29, %30, %31 in 1 : vector<14x16xf32>, vector<14x16xf32>, vector<14x16xf32> -> vector<14x48xf32>
    %33 = vector.extract_strided_slice %0 {offsets = [5, 0, 0], sizes = [1, 16, 16], strides = [1, 1, 1]} : vector<8x16x16xf32> to vector<1x16x16xf32>
    %34 = vector.shape_cast %33 : vector<1x16x16xf32> to vector<16x16xf32>
    %35 = vector.extract_strided_slice %34 {offsets = [0, 0], sizes = [14, 16], strides = [1, 1]} : vector<16x16xf32> to vector<14x16xf32>
    %36 = vector.extract_strided_slice %34 {offsets = [1, 0], sizes = [14, 16], strides = [1, 1]} : vector<16x16xf32> to vector<14x16xf32>
    %37 = vector.extract_strided_slice %34 {offsets = [2, 0], sizes = [14, 16], strides = [1, 1]} : vector<16x16xf32> to vector<14x16xf32>
    %38 = tpu.concatenate %35, %36, %37 in 1 : vector<14x16xf32>, vector<14x16xf32>, vector<14x16xf32> -> vector<14x48xf32>
    %39 = vector.extract_strided_slice %0 {offsets = [6, 0, 0], sizes = [1, 16, 16], strides = [1, 1, 1]} : vector<8x16x16xf32> to vector<1x16x16xf32>
    %40 = vector.shape_cast %39 : vector<1x16x16xf32> to vector<16x16xf32>
    %41 = vector.extract_strided_slice %40 {offsets = [0, 0], sizes = [14, 16], strides = [1, 1]} : vector<16x16xf32> to vector<14x16xf32>
    %42 = vector.extract_strided_slice %40 {offsets = [1, 0], sizes = [14, 16], strides = [1, 1]} : vector<16x16xf32> to vector<14x16xf32>
    %43 = vector.extract_strided_slice %40 {offsets = [2, 0], sizes = [14, 16], strides = [1, 1]} : vector<16x16xf32> to vector<14x16xf32>
    %44 = tpu.concatenate %41, %42, %43 in 1 : vector<14x16xf32>, vector<14x16xf32>, vector<14x16xf32> -> vector<14x48xf32>
    %45 = vector.extract_strided_slice %0 {offsets = [7, 0, 0], sizes = [1, 16, 16], strides = [1, 1, 1]} : vector<8x16x16xf32> to vector<1x16x16xf32>
    %46 = vector.shape_cast %45 : vector<1x16x16xf32> to vector<16x16xf32>
    %47 = vector.extract_strided_slice %46 {offsets = [0, 0], sizes = [14, 16], strides = [1, 1]} : vector<16x16xf32> to vector<14x16xf32>
    %48 = vector.extract_strided_slice %46 {offsets = [1, 0], sizes = [14, 16], strides = [1, 1]} : vector<16x16xf32> to vector<14x16xf32>
    %49 = vector.extract_strided_slice %46 {offsets = [2, 0], sizes = [14, 16], strides = [1, 1]} : vector<16x16xf32> to vector<14x16xf32>
    %50 = tpu.concatenate %47, %48, %49 in 1 : vector<14x16xf32>, vector<14x16xf32>, vector<14x16xf32> -> vector<14x48xf32>
    %51 = tpu.concatenate %8, %14, %20, %26, %32, %38, %44, %50 in 0 : vector<14x48xf32>, vector<14x48xf32>, vector<14x48xf32>, vector<14x48xf32>, vector<14x48xf32>, vector<14x48xf32>, vector<14x48xf32>, vector<14x48xf32> -> vector<112x48xf32>
    %52 = arith.truncf %51 : vector<112x48xf32> to vector<112x48xbf16>
    %cst = arith.constant dense<0.000000e+00> : vector<112x224xf32>
    %53 = tpu.matmul %52, %1, %cst {dimension_numbers = #tpu.dot_dimension_numbers<[1], [0], [0], [1], [0, 0, 1, 1], [], []>} : vector<112x48xbf16>, vector<48x224xbf16>, vector<112x224xf32> -> vector<112x224xf32>
    %c0_6 = arith.constant 0 : index
    %c0_7 = arith.constant 0 : index
    %54 = vector.load %arg3[%c0_6, %c0_7] : memref<1x224xf32, #tpu.memory_space<vmem>>, vector<1x224xf32>
    %55 = vector.broadcast %54 : vector<1x224xf32> to vector<112x224xf32>
    %56 = arith.addf %53, %55 : vector<112x224xf32>
    %cst_8 = arith.constant 0.000000e+00 : f32
    %57 = vector.broadcast %cst_8 : f32 to vector<112x224xf32>
    %58 = arith.maximumf %56, %57 : vector<112x224xf32>
    %59 = vector.extract_strided_slice %58 {offsets = [0, 0], sizes = [14, 224], strides = [1, 1]} : vector<112x224xf32> to vector<14x224xf32>
    %cst_9 = arith.constant dense<0.000000e+00> : vector<224xf32>
    %60 = vector.multi_reduction <add>, %59, %cst_9 [0] : vector<14x224xf32> to vector<224xf32>
    %61 = vector.shape_cast %60 : vector<224xf32> to vector<1x224xf32>
    %62 = vector.extract_strided_slice %58 {offsets = [14, 0], sizes = [14, 224], strides = [1, 1]} : vector<112x224xf32> to vector<14x224xf32>
    %cst_10 = arith.constant dense<0.000000e+00> : vector<224xf32>
    %63 = vector.multi_reduction <add>, %62, %cst_10 [0] : vector<14x224xf32> to vector<224xf32>
    %64 = vector.shape_cast %63 : vector<224xf32> to vector<1x224xf32>
    %65 = vector.extract_strided_slice %58 {offsets = [28, 0], sizes = [14, 224], strides = [1, 1]} : vector<112x224xf32> to vector<14x224xf32>
    %cst_11 = arith.constant dense<0.000000e+00> : vector<224xf32>
    %66 = vector.multi_reduction <add>, %65, %cst_11 [0] : vector<14x224xf32> to vector<224xf32>
    %67 = vector.shape_cast %66 : vector<224xf32> to vector<1x224xf32>
    %68 = vector.extract_strided_slice %58 {offsets = [42, 0], sizes = [14, 224], strides = [1, 1]} : vector<112x224xf32> to vector<14x224xf32>
    %cst_12 = arith.constant dense<0.000000e+00> : vector<224xf32>
    %69 = vector.multi_reduction <add>, %68, %cst_12 [0] : vector<14x224xf32> to vector<224xf32>
    %70 = vector.shape_cast %69 : vector<224xf32> to vector<1x224xf32>
    %71 = vector.extract_strided_slice %58 {offsets = [56, 0], sizes = [14, 224], strides = [1, 1]} : vector<112x224xf32> to vector<14x224xf32>
    %cst_13 = arith.constant dense<0.000000e+00> : vector<224xf32>
    %72 = vector.multi_reduction <add>, %71, %cst_13 [0] : vector<14x224xf32> to vector<224xf32>
    %73 = vector.shape_cast %72 : vector<224xf32> to vector<1x224xf32>
    %74 = vector.extract_strided_slice %58 {offsets = [70, 0], sizes = [14, 224], strides = [1, 1]} : vector<112x224xf32> to vector<14x224xf32>
    %cst_14 = arith.constant dense<0.000000e+00> : vector<224xf32>
    %75 = vector.multi_reduction <add>, %74, %cst_14 [0] : vector<14x224xf32> to vector<224xf32>
    %76 = vector.shape_cast %75 : vector<224xf32> to vector<1x224xf32>
    %77 = vector.extract_strided_slice %58 {offsets = [84, 0], sizes = [14, 224], strides = [1, 1]} : vector<112x224xf32> to vector<14x224xf32>
    %cst_15 = arith.constant dense<0.000000e+00> : vector<224xf32>
    %78 = vector.multi_reduction <add>, %77, %cst_15 [0] : vector<14x224xf32> to vector<224xf32>
    %79 = vector.shape_cast %78 : vector<224xf32> to vector<1x224xf32>
    %80 = vector.extract_strided_slice %58 {offsets = [98, 0], sizes = [14, 224], strides = [1, 1]} : vector<112x224xf32> to vector<14x224xf32>
    %cst_16 = arith.constant dense<0.000000e+00> : vector<224xf32>
    %81 = vector.multi_reduction <add>, %80, %cst_16 [0] : vector<14x224xf32> to vector<224xf32>
    %82 = vector.shape_cast %81 : vector<224xf32> to vector<1x224xf32>
    %83 = tpu.concatenate %61, %64, %67, %70, %73, %76, %79, %82 in 0 : vector<1x224xf32>, vector<1x224xf32>, vector<1x224xf32>, vector<1x224xf32>, vector<1x224xf32>, vector<1x224xf32>, vector<1x224xf32>, vector<1x224xf32> -> vector<8x224xf32>
    %84 = arith.truncf %83 : vector<8x224xf32> to vector<8x224xbf16>
    %cst_17 = arith.constant dense<0.000000e+00> : vector<8x128xf32>
    %85 = tpu.matmul %84, %2, %cst_17 {dimension_numbers = #tpu.dot_dimension_numbers<[1], [0], [0], [1], [0, 0, 1, 1], [], []>} : vector<8x224xbf16>, vector<224x128xbf16>, vector<8x128xf32> -> vector<8x128xf32>
    %c0_18 = arith.constant 0 : index
    %c0_19 = arith.constant 0 : index
    %86 = vector.load %arg5[%c0_18, %c0_19] : memref<1x128xf32, #tpu.memory_space<vmem>>, vector<1x128xf32>
    %87 = vector.broadcast %86 : vector<1x128xf32> to vector<8x128xf32>
    %88 = arith.addf %85, %87 : vector<8x128xf32>
    %c0_20 = arith.constant 0 : index
    %c0_21 = arith.constant 0 : index
    %89 = vector.load %arg6[%c0_20, %c0_21] : memref<8x128xf32, #tpu.memory_space<vmem>>, vector<8x128xf32>
    tpu.vector_store %arg6[%c0_20, %c0_21], %88 {strides = array<i32>} : memref<8x128xf32, #tpu.memory_space<vmem>>, vector<8x128xf32>,
    return
  }
  func.func @transform_0(%arg0: i32) -> (i32, i32, i32) {
    %c0_i32 = arith.constant 0 : i32
    %c0_i32_0 = arith.constant 0 : i32
    %c0_i32_1 = arith.constant 0 : i32
    return %arg0, %c0_i32, %c0_i32_0 : i32, i32, i32
  }
  func.func @transform_1(%arg0: i32) -> (i32, i32) {
    %c0_i32 = arith.constant 0 : i32
    %c0_i32_0 = arith.constant 0 : i32
    %c0_i32_1 = arith.constant 0 : i32
    return %c0_i32, %c0_i32_0 : i32, i32
  }
  func.func @transform_2(%arg0: i32) -> (i32, i32) {
    %c0_i32 = arith.constant 0 : i32
    %c0_i32_0 = arith.constant 0 : i32
    %c0_i32_1 = arith.constant 0 : i32
    return %c0_i32, %c0_i32_0 : i32, i32
  }
  func.func @transform_3(%arg0: i32) -> (i32, i32) {
    %c0_i32 = arith.constant 0 : i32
    %c0_i32_0 = arith.constant 0 : i32
    %c0_i32_1 = arith.constant 0 : i32
    return %c0_i32, %c0_i32_0 : i32, i32
  }
  func.func @transform_4(%arg0: i32) -> (i32, i32) {
    %c0_i32 = arith.constant 0 : i32
    %c0_i32_0 = arith.constant 0 : i32
    %c0_i32_1 = arith.constant 0 : i32
    return %c0_i32, %c0_i32_0 : i32, i32
  }
  func.func @transform_5(%arg0: i32) -> (i32, i32) {
    %c0_i32 = arith.constant 0 : i32
    %c0_i32_0 = arith.constant 0 : i32
    return %arg0, %c0_i32 : i32, i32
  }
}

module attributes {stable_mosaic.version = 11 : i64} {
  func.func @_matmul_kernel(%arg0: i32, %arg1: i32, %arg2: i32, %arg3: memref<8x256xf32, #tpu.memory_space<vmem>>, %arg4: memref<256x128xbf16, #tpu.memory_space<vmem>>, %arg5: memref<1x128xf32, #tpu.memory_space<vmem>>, %arg6: memref<8x128xf32, #tpu.memory_space<vmem>>, %arg7: memref<8x128xf32, #tpu.memory_space<vmem>>) attributes {dimension_semantics = [#tpu.dimension_semantics<parallel>, #tpu.dimension_semantics<parallel>, #tpu.dimension_semantics<arbitrary>], iteration_bounds = array<i64: 1, 1, 1>, scalar_prefetch = 0 : i64, scratch_operands = 1 : i64, tpu.core_type = #tpu.core_type<tc>, window_params = [{transform_indices = @transform_0, window_bounds = array<i64: 8, 256>}, {transform_indices = @transform_1, window_bounds = array<i64: 256, 128>}, {transform_indices = @transform_2, window_bounds = array<i64: 1, 128>}, {transform_indices = @transform_3, window_bounds = array<i64: 8, 128>}]} {
    %c0_i32 = arith.constant 0 : i32
    %0 = arith.cmpi eq, %arg2, %c0_i32 : i32
    %1 = arith.extui %0 : i1 to i32
    %c0_i32_0 = arith.constant 0 : i32
    %2 = arith.cmpi ne, %1, %c0_i32_0 : i32
    scf.if %2 {
      %cst_10 = arith.constant 0.000000e+00 : f32
      %13 = vector.broadcast %cst_10 : f32 to vector<8x128xf32>
      %c0_11 = arith.constant 0 : index
      %c0_12 = arith.constant 0 : index
      %14 = vector.load %arg7[%c0_11, %c0_12] : memref<8x128xf32, #tpu.memory_space<vmem>>, vector<8x128xf32>
      tpu.vector_store %arg7[%c0_11, %c0_12], %13 {strides = array<i32>} : memref<8x128xf32, #tpu.memory_space<vmem>>, vector<8x128xf32>,
    } else {
    }
    %c0 = arith.constant 0 : index
    %c0_1 = arith.constant 0 : index
    %3 = vector.load %arg7[%c0, %c0_1] : memref<8x128xf32, #tpu.memory_space<vmem>>, vector<8x128xf32>
    %c0_2 = arith.constant 0 : index
    %c0_3 = arith.constant 0 : index
    %4 = vector.load %arg3[%c0_2, %c0_3] : memref<8x256xf32, #tpu.memory_space<vmem>>, vector<8x256xf32>
    %5 = arith.truncf %4 : vector<8x256xf32> to vector<8x256xbf16>
    %c0_4 = arith.constant 0 : index
    %c0_5 = arith.constant 0 : index
    %6 = vector.load %arg4[%c0_4, %c0_5] : memref<256x128xbf16, #tpu.memory_space<vmem>>, vector<256x128xbf16>
    %cst = arith.constant dense<0.000000e+00> : vector<8x128xf32>
    %7 = tpu.matmul %5, %6, %cst {dimension_numbers = #tpu.dot_dimension_numbers<[1], [0], [0], [1], [0, 0, 1, 1], [], []>} : vector<8x256xbf16>, vector<256x128xbf16>, vector<8x128xf32> -> vector<8x128xf32>
    %8 = arith.addf %3, %7 : vector<8x128xf32>
    %c0_6 = arith.constant 0 : index
    %c0_7 = arith.constant 0 : index
    %9 = vector.load %arg7[%c0_6, %c0_7] : memref<8x128xf32, #tpu.memory_space<vmem>>, vector<8x128xf32>
    tpu.vector_store %arg7[%c0_6, %c0_7], %8 {strides = array<i32>} : memref<8x128xf32, #tpu.memory_space<vmem>>, vector<8x128xf32>,
    %c0_i32_8 = arith.constant 0 : i32
    %10 = arith.cmpi eq, %arg2, %c0_i32_8 : i32
    %11 = arith.extui %10 : i1 to i32
    %c0_i32_9 = arith.constant 0 : i32
    %12 = arith.cmpi ne, %11, %c0_i32_9 : i32
    scf.if %12 {
      %c0_10 = arith.constant 0 : index
      %c0_11 = arith.constant 0 : index
      %13 = vector.load %arg7[%c0_10, %c0_11] : memref<8x128xf32, #tpu.memory_space<vmem>>, vector<8x128xf32>
      %c0_12 = arith.constant 0 : index
      %c0_13 = arith.constant 0 : index
      %14 = vector.load %arg5[%c0_12, %c0_13] : memref<1x128xf32, #tpu.memory_space<vmem>>, vector<1x128xf32>
      %15 = vector.broadcast %14 : vector<1x128xf32> to vector<8x128xf32>
      %16 = arith.addf %13, %15 : vector<8x128xf32>
      %17 = math.tanh %16 : vector<8x128xf32>
      %c0_14 = arith.constant 0 : index
      %c0_15 = arith.constant 0 : index
      %18 = vector.load %arg6[%c0_14, %c0_15] : memref<8x128xf32, #tpu.memory_space<vmem>>, vector<8x128xf32>
      tpu.vector_store %arg6[%c0_14, %c0_15], %17 {strides = array<i32>} : memref<8x128xf32, #tpu.memory_space<vmem>>, vector<8x128xf32>,
    } else {
    }
    return
  }
  func.func @transform_0(%arg0: i32, %arg1: i32, %arg2: i32) -> (i32, i32) {
    %c0_i32 = arith.constant 0 : i32
    return %arg0, %arg2 : i32, i32
  }
  func.func @transform_1(%arg0: i32, %arg1: i32, %arg2: i32) -> (i32, i32) {
    %c0_i32 = arith.constant 0 : i32
    return %arg2, %arg1 : i32, i32
  }
  func.func @transform_2(%arg0: i32, %arg1: i32, %arg2: i32) -> (i32, i32) {
    %c0_i32 = arith.constant 0 : i32
    %c0_i32_0 = arith.constant 0 : i32
    return %c0_i32, %arg1 : i32, i32
  }
  func.func @transform_3(%arg0: i32, %arg1: i32, %arg2: i32) -> (i32, i32) {
    %c0_i32 = arith.constant 0 : i32
    return %arg0, %arg1 : i32, i32
  }
}

module attributes {stable_mosaic.version = 11 : i64} {
  func.func @_proj_logsoftmax_kernel(%arg0: i32, %arg1: memref<64x128xbf16, #tpu.memory_space<vmem>>, %arg2: memref<128x128xbf16, #tpu.memory_space<vmem>>, %arg3: memref<1x128xf32, #tpu.memory_space<vmem>>, %arg4: memref<64x128xf32, #tpu.memory_space<vmem>>) attributes {dimension_semantics = [#tpu.dimension_semantics<parallel>], iteration_bounds = array<i64: 1>, scalar_prefetch = 0 : i64, scratch_operands = 0 : i64, tpu.core_type = #tpu.core_type<tc>, window_params = [{transform_indices = @transform_0, window_bounds = array<i64: 64, 128>}, {pipeline_mode = #tpu.pipeline_mode<synchronous>, transform_indices = @transform_1, window_bounds = array<i64: 128, 128>}, {pipeline_mode = #tpu.pipeline_mode<synchronous>, transform_indices = @transform_2, window_bounds = array<i64: 1, 128>}, {transform_indices = @transform_3, window_bounds = array<i64: 64, 128>}]} {
    %c0 = arith.constant 0 : index
    %c0_0 = arith.constant 0 : index
    %0 = vector.load %arg1[%c0, %c0_0] : memref<64x128xbf16, #tpu.memory_space<vmem>>, vector<64x128xbf16>
    %c0_1 = arith.constant 0 : index
    %c0_2 = arith.constant 0 : index
    %1 = vector.load %arg2[%c0_1, %c0_2] : memref<128x128xbf16, #tpu.memory_space<vmem>>, vector<128x128xbf16>
    %cst = arith.constant dense<0.000000e+00> : vector<64x128xf32>
    %2 = tpu.matmul %0, %1, %cst {dimension_numbers = #tpu.dot_dimension_numbers<[1], [0], [0], [1], [0, 0, 1, 1], [], []>} : vector<64x128xbf16>, vector<128x128xbf16>, vector<64x128xf32> -> vector<64x128xf32>
    %c0_3 = arith.constant 0 : index
    %c0_4 = arith.constant 0 : index
    %3 = vector.load %arg3[%c0_3, %c0_4] : memref<1x128xf32, #tpu.memory_space<vmem>>, vector<1x128xf32>
    %4 = vector.broadcast %3 : vector<1x128xf32> to vector<64x128xf32>
    %5 = arith.addf %2, %4 : vector<64x128xf32>
    %cst_5 = arith.constant dense<0xFF800000> : vector<64xf32>
    %6 = vector.multi_reduction <maximumf>, %5, %cst_5 [1] : vector<64x128xf32> to vector<64xf32>
    %7 = vector.shape_cast %6 : vector<64xf32> to vector<64x1xf32>
    %8 = vector.broadcast %7 : vector<64x1xf32> to vector<64x128xf32>
    %9 = arith.subf %5, %8 : vector<64x128xf32>
    %10 = math.exp %9 : vector<64x128xf32>
    %cst_6 = arith.constant dense<0.000000e+00> : vector<64xf32>
    %11 = vector.multi_reduction <add>, %10, %cst_6 [1] : vector<64x128xf32> to vector<64xf32>
    %12 = vector.shape_cast %11 : vector<64xf32> to vector<64x1xf32>
    %13 = math.log %12 : vector<64x1xf32>
    %14 = vector.broadcast %13 : vector<64x1xf32> to vector<64x128xf32>
    %15 = arith.subf %9, %14 : vector<64x128xf32>
    %c0_7 = arith.constant 0 : index
    %c0_8 = arith.constant 0 : index
    %16 = vector.load %arg4[%c0_7, %c0_8] : memref<64x128xf32, #tpu.memory_space<vmem>>, vector<64x128xf32>
    tpu.vector_store %arg4[%c0_7, %c0_8], %15 {strides = array<i32>} : memref<64x128xf32, #tpu.memory_space<vmem>>, vector<64x128xf32>,
    return
  }
  func.func @transform_0(%arg0: i32) -> (i32, i32) {
    %c0_i32 = arith.constant 0 : i32
    %c0_i32_0 = arith.constant 0 : i32
    return %arg0, %c0_i32 : i32, i32
  }
  func.func @transform_1(%arg0: i32) -> (i32, i32) {
    %c0_i32 = arith.constant 0 : i32
    %c0_i32_0 = arith.constant 0 : i32
    %c0_i32_1 = arith.constant 0 : i32
    return %c0_i32, %c0_i32_0 : i32, i32
  }
  func.func @transform_2(%arg0: i32) -> (i32, i32) {
    %c0_i32 = arith.constant 0 : i32
    %c0_i32_0 = arith.constant 0 : i32
    %c0_i32_1 = arith.constant 0 : i32
    return %c0_i32, %c0_i32_0 : i32, i32
  }
  func.func @transform_3(%arg0: i32) -> (i32, i32) {
    %c0_i32 = arith.constant 0 : i32
    %c0_i32_0 = arith.constant 0 : i32
    return %arg0, %c0_i32 : i32, i32
  }
}

</mosaic_0001>

<llo_original>
// kernel: dcuelm_forward.7
$region0: #{dcuelm_forward.7}
  #allocation0 [shape = 'u32[]', space=smem, size = 0x4, offset = 0x4, fixed_abs, tag = 'smem constant byte address 0x4 - core index']
  #allocation1 [shape = 'u32[144,128]{1,0:T(1,128)}', space=vmem, size = 0x12000, scoped, tag = 'internal scratch']
  #allocation2 [shape = 'f32[8,128]{1,0:T(8,128)}', space=vmem, size = 0x1000, scoped, tag = 'scratch operand']
  %s0 = inlined_call_operand.vmem [shape: f32[8,128], index: 0, kind: input, shape index: {}]
  %s1 = inlined_call_operand.vmem [shape: bf16[128,128], index: 1, kind: input, shape index: {}]
  %s2 = inlined_call_operand.vmem [shape: f32[1,128], index: 2, kind: input, shape index: {}]
  %s3 = inlined_call_operand.vmem [shape: f32[8,128], index: 3, kind: output, shape index: {}]
  %s4 = sld [smem:[#allocation0]]
  $region30: #{dcuelm_forward.7} parent=0
    _
  %s6 = ssub.s32 1, %s4
  %s7 = scalar_select 0, %s6, %s4
  // Predicated region
  $region2: #{dcuelm_forward.7} parent=0 // pred_check
    _
  $region3: #{dcuelm_forward.7} parent=0 // pred_check_branch
    %9 = sbr.rel (0) target = $region5
  $region4: #{dcuelm_forward.7} parent=0 // pred_region
    _
  $region5: #{dcuelm_forward.7} parent=0 // pred_fallthru
    _
  // Predicated region
  $region6: #{dcuelm_forward.7} parent=0 // pred_check
    _
  $region7: #{dcuelm_forward.7} parent=0 // pred_check_branch
    %11 = sbr.rel (0) target = $region9
  $region8: #{dcuelm_forward.7} parent=0 // pred_region
    _
  $region9: #{dcuelm_forward.7} parent=0 // pred_fallthru
    _
  // Predicated region
  $region10: #{dcuelm_forward.7} parent=0 // pred_check
    _
  $region11: #{dcuelm_forward.7} parent=0 // pred_check_branch
    %13 = sbr.rel (0) target = $region13
  $region12: #{dcuelm_forward.7} parent=0 // pred_region
    _
  $region13: #{dcuelm_forward.7} parent=0 // pred_fallthru
    _
  %p15 = scmp.eq.s32.totalorder 0, 0
  // Predicated region
  $region14: #{dcuelm_forward.7} parent=0 // pred_check
    %p16 = pneg %p15
  $region15: #{dcuelm_forward.7} parent=0 // pred_check_branch
    %18 = sbr.rel (%p16) target = $region17
  $region16: #{dcuelm_forward.7} parent=0 // pred_region
    %19 = vst [vmem:[#allocation2] sm:$0xff] 0.0
  $region17: #{dcuelm_forward.7} parent=0 // pred_fallthru
    _
  %v20 = vld [vmem:[#allocation2] sm:$0xff]
  %v21 = vld [vmem:[%s0] sm:$0xff]
  %v22 = vpack.c.bf16 %v21, %v21
  %v23 = vld [vmem:[%s1] sm:$0xf]
  %v24 = vld [vmem:[%s1 + $0x4] sm:$0xf]
  %v25 = vld [vmem:[%s1 + $0x8] sm:$0xf]
  %v26 = vld [vmem:[%s1 + $0xc] sm:$0xf]
  %v27 = vld [vmem:[%s1 + $0x10] sm:$0xf]
  %v28 = vld [vmem:[%s1 + $0x14] sm:$0xf]
  %v29 = vld [vmem:[%s1 + $0x18] sm:$0xf]
  %v30 = vld [vmem:[%s1 + $0x1c] sm:$0xf]
  %v31 = vld [vmem:[%s1 + $0x20] sm:$0xf]
  %v32 = vld [vmem:[%s1 + $0x24] sm:$0xf]
  %v33 = vld [vmem:[%s1 + $0x28] sm:$0xf]
  %v34 = vld [vmem:[%s1 + $0x2c] sm:$0xf]
  %v35 = vld [vmem:[%s1 + $0x30] sm:$0xf]
  %v36 = vld [vmem:[%s1 + $0x34] sm:$0xf]
  %v37 = vld [vmem:[%s1 + $0x38] sm:$0xf]
  %v38 = vld [vmem:[%s1 + $0x3c] sm:$0xf]
  %v55 = vunpack.c.l.b16 %v23
  %v56 = vunpack.c.l.b16 %v24
  %v57 = vunpack.c.l.b16 %v25
  %v58 = vunpack.c.l.b16 %v26
  %v59 = vunpack.c.l.b16 %v27
  %v60 = vunpack.c.l.b16 %v28
  %v61 = vunpack.c.l.b16 %v29
  %v62 = vunpack.c.l.b16 %v30
  %v63 = vunpack.c.l.b16 %v31
  %v64 = vunpack.c.l.b16 %v32
  %v65 = vunpack.c.l.b16 %v33
  %v66 = vunpack.c.l.b16 %v34
  %v67 = vunpack.c.l.b16 %v35
  %v68 = vunpack.c.l.b16 %v36
  %v69 = vunpack.c.l.b16 %v37
  %v70 = vunpack.c.l.b16 %v38
  %v71 = vpack.c.b16 %v56, %v55
  %v72 = vpack.c.b16 %v58, %v57
  %v73 = vpack.c.b16 %v60, %v59
  %v74 = vpack.c.b16 %v62, %v61
  %v75 = vpack.c.b16 %v64, %v63
  %v76 = vpack.c.b16 %v66, %v65
  %v77 = vpack.c.b16 %v68, %v67
  %v78 = vpack.c.b16 %v70, %v69
  %87 = vmatprep.subr.bf16.mxu0 0
  %88 = vmatpush1.bf16.msra.mxu0 %v78
  %89 = vmatprep.subr.bf16.mxu0 0
  %90 = vmatpush1.bf16.msra.mxu0 %v77
  %91 = vmatprep.subr.bf16.mxu0 0
  %92 = vmatpush1.bf16.msra.mxu0 %v76
  %93 = vmatprep.subr.bf16.mxu0 0
  %94 = vmatpush1.bf16.msra.mxu0 %v75
  %95 = vmatprep.subr.bf16.mxu0 0
  %96 = vmatpush1.bf16.msra.mxu0 %v74
  %97 = vmatprep.subr.bf16.mxu0 0
  %98 = vmatpush1.bf16.msra.mxu0 %v73
  %99 = vmatprep.subr.bf16.mxu0 0
  %100 = vmatpush1.bf16.msra.mxu0 %v72
  %101 = vmatprep.subr.bf16.mxu0 0
  %102 = vmatpush1.bf16.msra.mxu0 %v71
  %103 = vmatprep.subr.bf16.mxu0 0
  %104 = vmatpush2.bf16.msra.mxu0 0
  %105 = vmatprep.subr.bf16.mxu0 0
  %106 = vmatpush2.bf16.msra.mxu0 0
  %107 = vmatprep.subr.bf16.mxu0 0
  %108 = vmatpush2.bf16.msra.mxu0 0
  %109 = vmatprep.subr.bf16.mxu0 0
  %110 = vmatpush2.bf16.msra.mxu0 0
  %111 = vmatprep.subr.bf16.mxu0 0
  %112 = vmatpush2.bf16.msra.mxu0 0
  %113 = vmatprep.subr.bf16.mxu0 0
  %114 = vmatpush2.bf16.msra.mxu0 0
  %115 = vmatprep.subr.bf16.mxu0 0
  %116 = vmatpush2.bf16.msra.mxu0 0
  %117 = vmatprep.subr.bf16.mxu0 0
  %118 = vmatpush2.bf16.msra.mxu0 0
  %119 = vmatprep.mubr.bf16.mxu0 0
  %120 = vmatmul.mubr.bf16.gmra.mxu0 %v22
  %v121 = vpop.f32.mrf.mxu0
  %v122 = vadd.f32 0.0, %v121
  %v123 = vpop.f32.mrf.mxu0
  %v124 = vpop.f32.mrf.mxu0
  %v125 = vpop.f32.mrf.mxu0
  %126 = vdwg.mxu0
  %v127 = vadd.f32 %v20, %v122
  %128 = vst [vmem:[#allocation2] sm:$0xff] %v127
  // Predicated region
  $region18: #{dcuelm_forward.7} parent=0 // pred_check
    %p129 = pneg %p15
  $region19: #{dcuelm_forward.7} parent=0 // pred_check_branch
    %131 = sbr.rel (%p129) target = $region21
  $region20: #{dcuelm_forward.7} parent=0 // pred_region
    %v132 = vld [vmem:[#allocation2] sm:$0xff]
    %v133 = vld [vmem:[%s2] sm:$0x1]
    %v135 = vlaneseq
    %v136 = vshrl.u32 %v135, 7
    %v137 = vsub.s32 0, %v136
    %v138 = vrot.slane %v133, %v137
    %v140 = vadd.f32 %v132, %v138
    %v141 = vtanh.pop %v140
    %142 = vst [vmem:[%s3] sm:$0xff] %v141
  $region21: #{dcuelm_forward.7} parent=0 // pred_fallthru
    _
  // Predicated region
  $region22: #{dcuelm_forward.7} parent=0 // pred_check
    _
  $region23: #{dcuelm_forward.7} parent=0 // pred_check_branch
    %144 = sbr.rel (0) target = $region25
  $region24: #{dcuelm_forward.7} parent=0 // pred_region
    _
  $region25: #{dcuelm_forward.7} parent=0 // pred_fallthru
    _
  // Predicated region
  $region26: #{dcuelm_forward.7} parent=0 // pred_check
    _
  $region27: #{dcuelm_forward.7} parent=0 // pred_check_branch
    %146 = sbr.rel (0) target = $region29
  $region28: #{dcuelm_forward.7} parent=0 // pred_region
    _
  $region29: #{dcuelm_forward.7} parent=0 // pred_fallthru
    _

// kernel: dcuelm_forward.9
$region0: #{dcuelm_forward.9}
  #allocation0 [shape = 'u32[]', space=smem, size = 0x4, offset = 0x4, fixed_abs, tag = 'smem constant byte address 0x4 - core index']
  #allocation1 [shape = 'u32[144,128]{1,0:T(1,128)}', space=vmem, size = 0x12000, scoped, tag = 'internal scratch']
  #allocation2 [shape = 'f32[8,128]{1,0:T(8,128)}', space=vmem, size = 0x1000, scoped, tag = 'scratch operand']
  %s0 = inlined_call_operand.vmem [shape: bf16[8,8,384], index: 0, kind: input, shape index: {}]
  %s1 = inlined_call_operand.vmem [shape: f32[8,128], index: 1, kind: input, shape index: {}]
  %s2 = inlined_call_operand.vmem [shape: bf16[128,384], index: 2, kind: input, shape index: {}]
  %s3 = inlined_call_operand.vmem [shape: f32[1,384], index: 3, kind: input, shape index: {}]
  %s4 = inlined_call_operand.vmem [shape: bf16[8,8,128], index: 4, kind: output, shape index: {}]
  %s5 = sld [smem:[#allocation0]]
  $region53: #{dcuelm_forward.9} parent=0
    _
  %s7 = ssub.s32 1, %s5
  %s8 = scalar_select 0, %s7, %s5
  loop: start=0, step=1, limit=10
  $region2: #{dcuelm_forward.9} parent=0 // loop_pre_header
    _
  $region3: #{dcuelm_forward.9} parent=0 // loop_header
    %s10 = sphi 0, %s14
    %p11 = scmp.ge.s32.totalorder %s10, 10
    %s20 = sphi 0, %s22
    %s23 = sphi 0, %s20
    %s24 = sphi 0, %s23
    %s40 = sphi 0, %s24
    %s44 = sphi 0, %s44
    %s46 = sphi 0, %s44
    %s47 = sphi 0, %s46
    %s61 = sphi 0, %s47
    %s65 = sphi 0, %s65
    %s67 = sphi 0, %s65
    %s68 = sphi 0, %s67
    %s82 = sphi 0, %s68
    %s86 = sphi 0, %s86
    %s88 = sphi 0, %s86
    %s89 = sphi 0, %s88
    %s103 = sphi 0, %s89
    %s109 = sphi 0, %s111
    %s112 = sphi 0, %s109
    %s113 = sphi 0, %s112
    %s129 = sphi 0, %s113
  $region4: #{dcuelm_forward.9} parent=0 // loop_header_branch
    %13 = sbr.rel (%p11) target = $region8
  $region5: #{dcuelm_forward.9} parent=0 // loop_body
    %s15 = ssub.s32 %s10, 1
    %s16 = ssub.s32 %s10, 2
    %s17 = sadd.s32 %s10, 1
    %s18 = ssub.s32 %s10, %s17
    %p19 = scmp.eq.s32.totalorder %s18, 0
    %s21 = sadd.s32 %s20, 1
    %s22 = scalar_select %p19, %s20, %s21
    %p25 = pneg %p19
    %p26 = scmp.eq.s32.totalorder %s10, 7
    %p27 = por %p25, %p26
    %p28 = scmp.ne.s32.totalorder %s20, %s23
    %p29 = scmp.eq.s32.totalorder %s10, 0
    %p30 = por %p28, %p29
    %p31 = scmp.ne.s32.totalorder %s20, %s23
    %p32 = scmp.eq.s32.totalorder %s15, 7
    %p33 = por %p31, %p32
    %p34 = scmp.ne.s32.totalorder %s23, %s24
    %p35 = scmp.eq.s32.totalorder %s15, 0
    %p36 = por %p34, %p35
    %p37 = scmp.ne.s32.totalorder %s23, %s24
    %p38 = scmp.eq.s32.totalorder %s16, 7
    %p39 = por %p37, %p38
    %p41 = scmp.ne.s32.totalorder %s24, %s40
    %p42 = scmp.eq.s32.totalorder %s16, 0
    %p43 = por %p41, %p42
    %s45 = sadd.s32 %s44, 1
    %p48 = scmp.eq.s32.totalorder %s10, 7
    %p49 = scmp.ne.s32.totalorder %s44, %s46
    %p50 = scmp.eq.s32.totalorder %s10, 0
    %p51 = por %p49, %p50
    %p52 = scmp.ne.s32.totalorder %s44, %s46
    %p53 = scmp.eq.s32.totalorder %s15, 7
    %p54 = por %p52, %p53
    %p55 = scmp.ne.s32.totalorder %s46, %s47
    %p56 = scmp.eq.s32.totalorder %s15, 0
    %p57 = por %p55, %p56
    %p58 = scmp.ne.s32.totalorder %s46, %s47
    %p59 = scmp.eq.s32.totalorder %s16, 7
    %p60 = por %p58, %p59
    %p62 = scmp.ne.s32.totalorder %s47, %s61
    %p63 = scmp.eq.s32.totalorder %s16, 0
    %p64 = por %p62, %p63
    %s66 = sadd.s32 %s65, 1
    %p69 = scmp.eq.s32.totalorder %s10, 7
    %p70 = scmp.ne.s32.totalorder %s65, %s67
    %p71 = scmp.eq.s32.totalorder %s10, 0
    %p72 = por %p70, %p71
    %p73 = scmp.ne.s32.totalorder %s65, %s67
    %p74 = scmp.eq.s32.totalorder %s15, 7
    %p75 = por %p73, %p74
    %p76 = scmp.ne.s32.totalorder %s67, %s68
    %p77 = scmp.eq.s32.totalorder %s15, 0
    %p78 = por %p76, %p77
    %p79 = scmp.ne.s32.totalorder %s67, %s68
    %p80 = scmp.eq.s32.totalorder %s16, 7
    %p81 = por %p79, %p80
    %p83 = scmp.ne.s32.totalorder %s68, %s82
    %p84 = scmp.eq.s32.totalorder %s16, 0
    %p85 = por %p83, %p84
    %s87 = sadd.s32 %s86, 1
    %p90 = scmp.eq.s32.totalorder %s10, 7
    %p91 = scmp.ne.s32.totalorder %s86, %s88
    %p92 = scmp.eq.s32.totalorder %s10, 0
    %p93 = por %p91, %p92
    %p94 = scmp.ne.s32.totalorder %s86, %s88
    %p95 = scmp.eq.s32.totalorder %s15, 7
    %p96 = por %p94, %p95
    %p97 = scmp.ne.s32.totalorder %s88, %s89
    %p98 = scmp.eq.s32.totalorder %s15, 0
    %p99 = por %p97, %p98
    %p100 = scmp.ne.s32.totalorder %s88, %s89
    %p101 = scmp.eq.s32.totalorder %s16, 7
    %p102 = por %p100, %p101
    %p104 = scmp.ne.s32.totalorder %s89, %s103
    %p105 = scmp.eq.s32.totalorder %s16, 0
    %p106 = por %p104, %p105
    %s107 = ssub.s32 %s10, %s17
    %p108 = scmp.eq.s32.totalorder %s107, 0
    %s110 = sadd.s32 %s109, 1
    %s111 = scalar_select %p108, %s109, %s110
    %p114 = pneg %p108
    %p115 = scmp.eq.s32.totalorder %s10, 7
    %p116 = por %p114, %p115
    %p117 = scmp.ne.s32.totalorder %s109, %s112
    %p118 = scmp.eq.s32.totalorder %s10, 0
    %p119 = por %p117, %p118
    %p120 = scmp.ne.s32.totalorder %s109, %s112
    %p121 = scmp.eq.s32.totalorder %s15, 7
    %p122 = por %p120, %p121
    %p123 = scmp.ne.s32.totalorder %s112, %s113
    %p124 = scmp.eq.s32.totalorder %s15, 0
    %p125 = por %p123, %p124
    %p126 = scmp.ne.s32.totalorder %s112, %s113
    %p127 = scmp.eq.s32.totalorder %s16, 7
    %p128 = por %p126, %p127
    %p130 = scmp.ne.s32.totalorder %s113, %s129
    %p131 = scmp.eq.s32.totalorder %s16, 0
    %p132 = por %p130, %p131
    %p133 = scmp.le.s32.totalorder 1, %s10
    %p134 = scmp.lt.s32.totalorder %s10, 9
    %p135 = pnand %p133, %p134
    %p136 = pneg %p135
    // Predicated region
    $region9: #{dcuelm_forward.9} parent=5 // pred_check
      _
    $region10: #{dcuelm_forward.9} parent=5 // pred_check_branch
      %138 = sbr.rel (%p135) target = $region12
    $region11: #{dcuelm_forward.9} parent=5 // pred_region
      %s139 = ssub.s32 %s10, 1
      // Predicated region
      $region13: #{dcuelm_forward.9} parent=11 // pred_check
        %p140 = pneg %p57
      $region14: #{dcuelm_forward.9} parent=11 // pred_check_branch
        %142 = sbr.rel (%p140) target = $region16
      $region15: #{dcuelm_forward.9} parent=11 // pred_region
        _
      $region16: #{dcuelm_forward.9} parent=11 // pred_fallthru
        _
      // Predicated region
      $region17: #{dcuelm_forward.9} parent=11 // pred_check
        %p143 = pneg %p78
      $region18: #{dcuelm_forward.9} parent=11 // pred_check_branch
        %145 = sbr.rel (%p143) target = $region20
      $region19: #{dcuelm_forward.9} parent=11 // pred_region
        _
      $region20: #{dcuelm_forward.9} parent=11 // pred_fallthru
        _
      // Predicated region
      $region21: #{dcuelm_forward.9} parent=11 // pred_check
        %p146 = pneg %p99
      $region22: #{dcuelm_forward.9} parent=11 // pred_check_branch
        %148 = sbr.rel (%p146) target = $region24
      $region23: #{dcuelm_forward.9} parent=11 // pred_region
        _
      $region24: #{dcuelm_forward.9} parent=11 // pred_fallthru
        _
    $region12: #{dcuelm_forward.9} parent=5 // pred_fallthru
      _
    %p149 = scmp.lt.s32.totalorder %s10, 8
    // Predicated region
    $region25: #{dcuelm_forward.9} parent=5 // pred_check
      %p150 = pneg %p149
    $region26: #{dcuelm_forward.9} parent=5 // pred_check_branch
      %152 = sbr.rel (%p150) target = $region28
    $region27: #{dcuelm_forward.9} parent=5 // pred_region
      // Predicated region
      $region29: #{dcuelm_forward.9} parent=27 // pred_check
        %p153 = pneg %p30
      $region30: #{dcuelm_forward.9} parent=27 // pred_check_branch
        %155 = sbr.rel (%p153) target = $region32
      $region31: #{dcuelm_forward.9} parent=27 // pred_region
        %p156 = scmp.lt.s32.totalorder %s10, 7
        %s157 = scalar_select %p156, %s10, 7
        %s158 = smul.addr %s157, 3
        %s159 = smul.addr %s158, 4
        %s160 = scalar_lea.vmem %s0, %s159
      $region32: #{dcuelm_forward.9} parent=27 // pred_fallthru
        _
    $region28: #{dcuelm_forward.9} parent=5 // pred_fallthru
      _
    %p161 = scmp.le.s32.totalorder 1, %s10
    %p162 = scmp.lt.s32.totalorder %s10, 9
    %p163 = pnand %p161, %p162
    %p164 = pneg %p163
    // Predicated region
    $region33: #{dcuelm_forward.9} parent=5 // pred_check
      _
    $region34: #{dcuelm_forward.9} parent=5 // pred_check_branch
      %166 = sbr.rel (%p163) target = $region36
    $region35: #{dcuelm_forward.9} parent=5 // pred_region
      %s167 = ssub.s32 %s10, 1
      %p168 = scmp.lt.s32.totalorder %s15, 7
      %s169 = scalar_select %p168, %s15, 7
      %s170 = smul.addr %s169, 3
      %s171 = smul.addr %s170, 4
      %s172 = scalar_lea.vmem %s0, %s171
      %p173 = pneg %p36
      %p174 = pneg %p33
      %p175 = pneg %p57
      %p176 = pneg %p54
      %p177 = pneg %p78
      %p178 = pneg %p75
      %p179 = pneg %p99
      %p180 = pneg %p96
      %p181 = pneg %p125
      %p182 = pneg %p122
      %p183 = scmp.lt.s32.totalorder %s15, 7
      %s184 = scalar_select %p183, %s15, 7
      %s185 = smul.addr %s184, 4
      %s186 = scalar_lea.vmem %s4, %s185
      %p187 = scmp.lt.s32.totalorder %s15, 7
      %s188 = scalar_select %p187, %s15, 7
      %s189 = smul.addr %s188, 3
      %s190 = smul.addr %s189, 4
      %s191 = scalar_lea.vmem %s0, %s190
      %p192 = scmp.lt.s32.totalorder %s15, 7
      %s193 = scalar_select %p192, %s15, 7
      %s194 = smul.addr %s193, 4
      %s195 = scalar_lea.vmem %s4, %s194
      %p197 = scmp.eq.s32.totalorder %s15, 0
      // Predicated region
      $region37: #{dcuelm_forward.9} parent=35 // pred_check
        %p198 = pneg %p197
      $region38: #{dcuelm_forward.9} parent=35 // pred_check_branch
        %200 = sbr.rel (%p198) target = $region40
      $region39: #{dcuelm_forward.9} parent=35 // pred_region
        %v201 = vld [vmem:[%s1] sm:$0xff]
        %202 = vst [vmem:[#allocation2] sm:$0xff] %v201
      $region40: #{dcuelm_forward.9} parent=35 // pred_fallthru
        _
      %v203 = vld [vmem:[#allocation2] sm:$0xff]
      %v204 = vpack.c.bf16 %v203, %v203
      %v205 = vld [vmem:[%s2] sm:$0xff]
      %v206 = vld [vmem:[%s2 + $0x8] sm:$0xf]
      %v207 = vld [vmem:[%s2 + $0xc] sm:$0xff]
      %v208 = vld [vmem:[%s2 + $0x14] sm:$0xf]
      %v209 = vld [vmem:[%s2 + $0x18] sm:$0xff]
      %v210 = vld [vmem:[%s2 + $0x20] sm:$0xf]
      %v211 = vld [vmem:[%s2 + $0x24] sm:$0xff]
      %v212 = vld [vmem:[%s2 + $0x2c] sm:$0xf]
      %v213 = vld [vmem:[%s2 + $0x30] sm:$0xff]
      %v214 = vld [vmem:[%s2 + $0x38] sm:$0xf]
      %v215 = vld [vmem:[%s2 + $0x3c] sm:$0xff]
      %v216 = vld [vmem:[%s2 + $0x44] sm:$0xf]
      %v217 = vld [vmem:[%s2 + $0x48] sm:$0xff]
      %v218 = vld [vmem:[%s2 + $0x50] sm:$0xf]
      %v219 = vld [vmem:[%s2 + $0x54] sm:$0xff]
      %v220 = vld [vmem:[%s2 + $0x5c] sm:$0xf]
      %v221 = vld [vmem:[%s2 + $0x60] sm:$0xff]
      %v222 = vld [vmem:[%s2 + $0x68] sm:$0xf]
      %v223 = vld [vmem:[%s2 + $0x6c] sm:$0xff]
      %v224 = vld [vmem:[%s2 + $0x74] sm:$0xf]
      %v225 = vld [vmem:[%s2 + $0x78] sm:$0xff]
      %v226 = vld [vmem:[%s2 + $0x80] sm:$0xf]
      %v227 = vld [vmem:[%s2 + $0x84] sm:$0xff]
      %v228 = vld [vmem:[%s2 + $0x8c] sm:$0xf]
      %v229 = vld [vmem:[%s2 + $0x90] sm:$0xff]
      %v230 = vld [vmem:[%s2 + $0x98] sm:$0xf]
      %v231 = vld [vmem:[%s2 + $0x9c] sm:$0xff]
      %v232 = vld [vmem:[%s2 + $0xa4] sm:$0xf]
      %v233 = vld [vmem:[%s2 + $0xa8] sm:$0xff]
      %v234 = vld [vmem:[%s2 + $0xb0] sm:$0xf]
      %v235 = vld [vmem:[%s2 + $0xb4] sm:$0xff]
      %v236 = vld [vmem:[%s2 + $0xbc] sm:$0xf]
      %v237 = vld [vmem:[%s3] sm:$0x7]
      %v239 = vlaneseq
      %v240 = vshrl.u32 %v239, 7
      %v241 = vsub.s32 0, %v240
      %v242 = vrot.slane %v237, %v241
      %v243 = vlaneseq
      %v244 = vshrl.u32 %v243, 7
      %v245 = vsub.s32 1, %v244
      %v246 = vrot.slane %v237, %v245
      %v247 = vlaneseq
      %v248 = vshrl.u32 %v247, 7
      %v249 = vsub.s32 2, %v248
      %v250 = vrot.slane %v237, %v249
      %v286 = vunpack.c.l.b16 %v205
      %v287 = vunpack.c.h.b16 %v205
      %v288 = vunpack.c.l.b16 %v206
      %v289 = vunpack.c.l.b16 %v207
      %v290 = vunpack.c.h.b16 %v207
      %v291 = vunpack.c.l.b16 %v208
      %v292 = vunpack.c.l.b16 %v209
      %v293 = vunpack.c.h.b16 %v209
      %v294 = vunpack.c.l.b16 %v210
      %v295 = vunpack.c.l.b16 %v211
      %v296 = vunpack.c.h.b16 %v211
      %v297 = vunpack.c.l.b16 %v212
      %v298 = vunpack.c.l.b16 %v213
      %v299 = vunpack.c.h.b16 %v213
      %v300 = vunpack.c.l.b16 %v214
      %v301 = vunpack.c.l.b16 %v215
      %v302 = vunpack.c.h.b16 %v215
      %v303 = vunpack.c.l.b16 %v216
      %v304 = vunpack.c.l.b16 %v217
      %v305 = vunpack.c.h.b16 %v217
      %v306 = vunpack.c.l.b16 %v218
      %v307 = vunpack.c.l.b16 %v219
      %v308 = vunpack.c.h.b16 %v219
      %v309 = vunpack.c.l.b16 %v220
      %v310 = vunpack.c.l.b16 %v221
      %v311 = vunpack.c.h.b16 %v221
      %v312 = vunpack.c.l.b16 %v222
      %v313 = vunpack.c.l.b16 %v223
      %v314 = vunpack.c.h.b16 %v223
      %v315 = vunpack.c.l.b16 %v224
      %v316 = vunpack.c.l.b16 %v225
      %v317 = vunpack.c.h.b16 %v225
      %v318 = vunpack.c.l.b16 %v226
      %v319 = vunpack.c.l.b16 %v227
      %v320 = vunpack.c.h.b16 %v227
      %v321 = vunpack.c.l.b16 %v228
      %v322 = vunpack.c.l.b16 %v229
      %v323 = vunpack.c.h.b16 %v229
      %v324 = vunpack.c.l.b16 %v230
      %v325 = vunpack.c.l.b16 %v231
      %v326 = vunpack.c.h.b16 %v231
      %v327 = vunpack.c.l.b16 %v232
      %v328 = vunpack.c.l.b16 %v233
      %v329 = vunpack.c.h.b16 %v233
      %v330 = vunpack.c.l.b16 %v234
      %v331 = vunpack.c.l.b16 %v235
      %v332 = vunpack.c.h.b16 %v235
      %v333 = vunpack.c.l.b16 %v236
      %v334 = vpack.c.b16 %v289, %v286
      %v335 = vpack.c.b16 %v290, %v287
      %v336 = vpack.c.b16 %v291, %v288
      %v337 = vpack.c.b16 %v295, %v292
      %v338 = vpack.c.b16 %v296, %v293
      %v339 = vpack.c.b16 %v297, %v294
      %v340 = vpack.c.b16 %v301, %v298
      %v341 = vpack.c.b16 %v302, %v299
      %v342 = vpack.c.b16 %v303, %v300
      %v343 = vpack.c.b16 %v307, %v304
      %v344 = vpack.c.b16 %v308, %v305
      %v345 = vpack.c.b16 %v309, %v306
      %v346 = vpack.c.b16 %v313, %v310
      %v347 = vpack.c.b16 %v314, %v311
      %v348 = vpack.c.b16 %v315, %v312
      %v349 = vpack.c.b16 %v319, %v316
      %v350 = vpack.c.b16 %v320, %v317
      %v351 = vpack.c.b16 %v321, %v318
      %v352 = vpack.c.b16 %v325, %v322
      %v353 = vpack.c.b16 %v326, %v323
      %v354 = vpack.c.b16 %v327, %v324
      %v355 = vpack.c.b16 %v331, %v328
      %v356 = vpack.c.b16 %v332, %v329
      %v357 = vpack.c.b16 %v333, %v330
      %382 = vmatprep.subr.bf16.mxu0 %v356
      %383 = vmatpush1.bf16.msra.mxu0 %v355
      %384 = vmatprep.subr.bf16.mxu0 %v353
      %385 = vmatpush1.bf16.msra.mxu0 %v352
      %386 = vmatprep.subr.bf16.mxu0 %v350
      %387 = vmatpush1.bf16.msra.mxu0 %v349
      %388 = vmatprep.subr.bf16.mxu0 %v347
      %389 = vmatpush1.bf16.msra.mxu0 %v346
      %390 = vmatprep.subr.bf16.mxu0 %v344
      %391 = vmatpush1.bf16.msra.mxu0 %v343
      %392 = vmatprep.subr.bf16.mxu0 %v341
      %393 = vmatpush1.bf16.msra.mxu0 %v340
      %394 = vmatprep.subr.bf16.mxu0 %v338
      %395 = vmatpush1.bf16.msra.mxu0 %v337
      %396 = vmatprep.subr.bf16.mxu0 %v335
      %397 = vmatpush1.bf16.msra.mxu0 %v334
      %398 = vmatprep.subr.bf16.mxu0 0
      %399 = vmatpush2.bf16.msra.mxu0 0
      %400 = vmatprep.subr.bf16.mxu0 0
      %401 = vmatpush2.bf16.msra.mxu0 0
      %402 = vmatprep.subr.bf16.mxu0 0
      %403 = vmatpush2.bf16.msra.mxu0 0
      %404 = vmatprep.subr.bf16.mxu0 0
      %405 = vmatpush2.bf16.msra.mxu0 0
      %406 = vmatprep.subr.bf16.mxu0 0
      %407 = vmatpush2.bf16.msra.mxu0 0
      %408 = vmatprep.subr.bf16.mxu0 0
      %409 = vmatpush2.bf16.msra.mxu0 0
      %410 = vmatprep.subr.bf16.mxu0 0
      %411 = vmatpush2.bf16.msra.mxu0 0
      %412 = vmatprep.subr.bf16.mxu0 0
      %413 = vmatpush2.bf16.msra.mxu0 0
      %414 = vmatprep.mubr.bf16.mxu0 0
      %415 = vmatmul.mubr.bf16.gmra.mxu0 %v204
      %v416 = vpop.f32.mrf.mxu0
      %v417 = vadd.f32 %v242, %v416
      %v418 = vpop.f32.mrf.mxu0
      %v419 = vadd.f32 %v246, %v418
      %v420 = vpop.f32.mrf.mxu0
      %v421 = vpop.f32.mrf.mxu0
      %422 = vdwg.mxu0
      %423 = vmatprep.subr.bf16.mxu0 0
      %424 = vmatpush1.bf16.msra.mxu0 %v357
      %425 = vmatprep.subr.bf16.mxu0 0
      %426 = vmatpush1.bf16.msra.mxu0 %v354
      %427 = vmatprep.subr.bf16.mxu0 0
      %428 = vmatpush1.bf16.msra.mxu0 %v351
      %429 = vmatprep.subr.bf16.mxu0 0
      %430 = vmatpush1.bf16.msra.mxu0 %v348
      %431 = vmatprep.subr.bf16.mxu0 0
      %432 = vmatpush1.bf16.msra.mxu0 %v345
      %433 = vmatprep.subr.bf16.mxu0 0
      %434 = vmatpush1.bf16.msra.mxu0 %v342
      %435 = vmatprep.subr.bf16.mxu0 0
      %436 = vmatpush1.bf16.msra.mxu0 %v339
      %437 = vmatprep.subr.bf16.mxu0 0
      %438 = vmatpush1.bf16.msra.mxu0 %v336
      %439 = vmatprep.subr.bf16.mxu0 0
      %440 = vmatpush2.bf16.msra.mxu0 0
      %441 = vmatprep.subr.bf16.mxu0 0
      %442 = vmatpush2.bf16.msra.mxu0 0
      %443 = vmatprep.subr.bf16.mxu0 0
      %444 = vmatpush2.bf16.msra.mxu0 0
      %445 = vmatprep.subr.bf16.mxu0 0
      %446 = vmatpush2.bf16.msra.mxu0 0
      %447 = vmatprep.subr.bf16.mxu0 0
      %448 = vmatpush2.bf16.msra.mxu0 0
      %449 = vmatprep.subr.bf16.mxu0 0
      %450 = vmatpush2.bf16.msra.mxu0 0
      %451 = vmatprep.subr.bf16.mxu0 0
      %452 = vmatpush2.bf16.msra.mxu0 0
      %453 = vmatprep.subr.bf16.mxu0 0
      %454 = vmatpush2.bf16.msra.mxu0 0
      %455 = vmatprep.mubr.bf16.mxu0 0
      %456 = vmatmul.mubr.bf16.gmra.mxu0 %v204
      %v457 = vpop.f32.mrf.mxu0
      %v458 = vadd.f32 %v250, %v457
      %v459 = vpop.f32.mrf.mxu0
      %v460 = vpop.f32.mrf.mxu0
      %v461 = vpop.f32.mrf.mxu0
      %462 = vdwg.mxu0
      %v463 = vld [vmem:[%s191] sm:$0xff]
      %v464 = vld [vmem:[%s191 + $0x8] sm:$0xf]
      %v465 = vunpack.c.l.bf16 %v463
      %v466 = vunpack.c.h.bf16 %v463
      %v467 = vunpack.c.l.bf16 %v464
      %v468 = vadd.f32 %v465, %v417
      %v469 = vxor.u32 %v468, 2147483648
      %v470 = vmul.f32 %v469, 1.442695
      %v471 = vpow.pop %v470
      %v472 = vadd.f32 %v471, 1.0
      %v473 = vrcp.pop %v472
      %v474 = vmul.f32 1.0, %v473
      %v475 = vadd.f32 %v466, %v419
      %v476 = vxor.u32 %v475, 2147483648
      %v477 = vmul.f32 %v476, 1.442695
      %v478 = vpow.pop %v477
      %v479 = vadd.f32 %v478, 1.0
      %v480 = vrcp.pop %v479
      %v481 = vmul.f32 1.0, %v480
      %v482 = vmul.f32 %v474, %v458
      %v483 = vadd.f32 %v467, %v482
      %v484 = vtanh.pop %v483
      %v485 = vsub.f32 1.0, %v481
      %v486 = vmul.f32 %v485, %v484
      %v487 = vmul.f32 %v481, %v203
      %v488 = vadd.f32 %v486, %v487
      %489 = vst [vmem:[#allocation2] sm:$0xff] %v488
      %v490 = vpack.c.bf16 %v488, %v488
      %491 = vst [vmem:[%s195] sm:$0xf] %v490
      %p492 = scmp.lt.s32.totalorder %s15, 7
      %s493 = scalar_select %p492, %s15, 7
      %s494 = smul.addr %s493, 4
      %s495 = scalar_lea.vmem %s4, %s494
      // Predicated region
      $region41: #{dcuelm_forward.9} parent=35 // pred_check
        %p496 = pneg %p122
      $region42: #{dcuelm_forward.9} parent=35 // pred_check_branch
        %498 = sbr.rel (%p496) target = $region44
      $region43: #{dcuelm_forward.9} parent=35 // pred_region
        _
      $region44: #{dcuelm_forward.9} parent=35 // pred_fallthru
        _
    $region36: #{dcuelm_forward.9} parent=5 // pred_fallthru
      _
    %p499 = scmp.le.s32.totalorder 2, %s10
    // Predicated region
    $region45: #{dcuelm_forward.9} parent=5 // pred_check
      %p500 = pneg %p499
    $region46: #{dcuelm_forward.9} parent=5 // pred_check_branch
      %502 = sbr.rel (%p500) target = $region48
    $region47: #{dcuelm_forward.9} parent=5 // pred_region
      %s503 = ssub.s32 %s10, 2
      // Predicated region
      $region49: #{dcuelm_forward.9} parent=47 // pred_check
        %p504 = pneg %p128
      $region50: #{dcuelm_forward.9} parent=47 // pred_check_branch
        %506 = sbr.rel (%p504) target = $region52
      $region51: #{dcuelm_forward.9} parent=47 // pred_region
        %p507 = scmp.lt.s32.totalorder %s16, 7
        %s508 = scalar_select %p507, %s16, 7
        %s509 = smul.addr %s508, 4
        %s510 = scalar_lea.vmem %s4, %s509
      $region52: #{dcuelm_forward.9} parent=47 // pred_fallthru
        _
    $region48: #{dcuelm_forward.9} parent=5 // pred_fallthru
      _
  $region6: #{dcuelm_forward.9} parent=0 // loop_footer
    %s14 = sadd.s32 1, %s10
  $region7: #{dcuelm_forward.9} parent=0 // loop_footer_branch
    %9 = sbr.rel target = $region3
  $region8: #{dcuelm_forward.9} parent=0 // loop_exit
    _

// kernel: dcuelm_forward.8
$region0: #{dcuelm_forward.8}
  #allocation0 [shape = 'u32[]', space=smem, size = 0x4, offset = 0x4, fixed_abs, tag = 'smem constant byte address 0x4 - core index']
  #allocation1 [shape = 'u32[144,128]{1,0:T(1,128)}', space=vmem, size = 0x12000, scoped, tag = 'internal scratch']
  #allocation2 [shape = 'f32[64,384]{1,0:T(8,128)}', space=vmem, size = 0x18000, scoped, tag = 'scratch operand']
  %s0 = inlined_call_operand.vmem [shape: f32[64,32], index: 0, kind: input, shape index: {}]
  %s1 = inlined_call_operand.vmem [shape: bf16[32,384], index: 1, kind: input, shape index: {}]
  %s2 = inlined_call_operand.vmem [shape: f32[1,384], index: 2, kind: input, shape index: {}]
  %s3 = inlined_call_operand.vmem [shape: bf16[64,384], index: 3, kind: output, shape index: {}]
  %s4 = sld [smem:[#allocation0]]
  $region30: #{dcuelm_forward.8} parent=0
    _
  %s6 = ssub.s32 1, %s4
  %s7 = scalar_select 0, %s6, %s4
  // Predicated region
  $region2: #{dcuelm_forward.8} parent=0 // pred_check
    _
  $region3: #{dcuelm_forward.8} parent=0 // pred_check_branch
    %9 = sbr.rel (0) target = $region5
  $region4: #{dcuelm_forward.8} parent=0 // pred_region
    _
  $region5: #{dcuelm_forward.8} parent=0 // pred_fallthru
    _
  // Predicated region
  $region6: #{dcuelm_forward.8} parent=0 // pred_check
    _
  $region7: #{dcuelm_forward.8} parent=0 // pred_check_branch
    %11 = sbr.rel (0) target = $region9
  $region8: #{dcuelm_forward.8} parent=0 // pred_region
    _
  $region9: #{dcuelm_forward.8} parent=0 // pred_fallthru
    _
  // Predicated region
  $region10: #{dcuelm_forward.8} parent=0 // pred_check
    _
  $region11: #{dcuelm_forward.8} parent=0 // pred_check_branch
    %13 = sbr.rel (0) target = $region13
  $region12: #{dcuelm_forward.8} parent=0 // pred_region
    _
  $region13: #{dcuelm_forward.8} parent=0 // pred_fallthru
    _
  %p15 = scmp.eq.s32.totalorder 0, 0
  // Predicated region
  $region14: #{dcuelm_forward.8} parent=0 // pred_check
    %p16 = pneg %p15
  $region15: #{dcuelm_forward.8} parent=0 // pred_check_branch
    %18 = sbr.rel (%p16) target = $region17
  $region16: #{dcuelm_forward.8} parent=0 // pred_region
    %19 = vst [vmem:[#allocation2] sm:$0xff] 0.0
    %20 = vst [vmem:[#allocation2 + $0x8] sm:$0xff] 0.0
    %21 = vst [vmem:[#allocation2 + $0x10] sm:$0xff] 0.0
    %22 = vst [vmem:[#allocation2 + $0x18] sm:$0xff] 0.0
    %23 = vst [vmem:[#allocation2 + $0x20] sm:$0xff] 0.0
    %24 = vst [vmem:[#allocation2 + $0x28] sm:$0xff] 0.0
    %25 = vst [vmem:[#allocation2 + $0x30] sm:$0xff] 0.0
    %26 = vst [vmem:[#allocation2 + $0x38] sm:$0xff] 0.0
    %27 = vst [vmem:[#allocation2 + $0x40] sm:$0xff] 0.0
    %28 = vst [vmem:[#allocation2 + $0x48] sm:$0xff] 0.0
    %29 = vst [vmem:[#allocation2 + $0x50] sm:$0xff] 0.0
    %30 = vst [vmem:[#allocation2 + $0x58] sm:$0xff] 0.0
    %31 = vst [vmem:[#allocation2 + $0x60] sm:$0xff] 0.0
    %32 = vst [vmem:[#allocation2 + $0x68] sm:$0xff] 0.0
    %33 = vst [vmem:[#allocation2 + $0x70] sm:$0xff] 0.0
    %34 = vst [vmem:[#allocation2 + $0x78] sm:$0xff] 0.0
    %35 = vst [vmem:[#allocation2 + $0x80] sm:$0xff] 0.0
    %36 = vst [vmem:[#allocation2 + $0x88] sm:$0xff] 0.0
    %37 = vst [vmem:[#allocation2 + $0x90] sm:$0xff] 0.0
    %38 = vst [vmem:[#allocation2 + $0x98] sm:$0xff] 0.0
    %39 = vst [vmem:[#allocation2 + $0xa0] sm:$0xff] 0.0
    %40 = vst [vmem:[#allocation2 + $0xa8] sm:$0xff] 0.0
    %41 = vst [vmem:[#allocation2 + $0xb0] sm:$0xff] 0.0
    %42 = vst [vmem:[#allocation2 + $0xb8] sm:$0xff] 0.0
  $region17: #{dcuelm_forward.8} parent=0 // pred_fallthru
    _
  %v43 = vld [vmem:[#allocation2] sm:$0xff]
  %v44 = vld [vmem:[#allocation2 + $0x8] sm:$0xff]
  %v45 = vld [vmem:[#allocation2 + $0x10] sm:$0xff]
  %v46 = vld [vmem:[#allocation2 + $0x18] sm:$0xff]
  %v47 = vld [vmem:[#allocation2 + $0x20] sm:$0xff]
  %v48 = vld [vmem:[#allocation2 + $0x28] sm:$0xff]
  %v49 = vld [vmem:[#allocation2 + $0x30] sm:$0xff]
  %v50 = vld [vmem:[#allocation2 + $0x38] sm:$0xff]
  %v51 = vld [vmem:[#allocation2 + $0x40] sm:$0xff]
  %v52 = vld [vmem:[#allocation2 + $0x48] sm:$0xff]
  %v53 = vld [vmem:[#allocation2 + $0x50] sm:$0xff]
  %v54 = vld [vmem:[#allocation2 + $0x58] sm:$0xff]
  %v55 = vld [vmem:[#allocation2 + $0x60] sm:$0xff]
  %v56 = vld [vmem:[#allocation2 + $0x68] sm:$0xff]
  %v57 = vld [vmem:[#allocation2 + $0x70] sm:$0xff]
  %v58 = vld [vmem:[#allocation2 + $0x78] sm:$0xff]
  %v59 = vld [vmem:[#allocation2 + $0x80] sm:$0xff]
  %v60 = vld [vmem:[#allocation2 + $0x88] sm:$0xff]
  %v61 = vld [vmem:[#allocation2 + $0x90] sm:$0xff]
  %v62 = vld [vmem:[#allocation2 + $0x98] sm:$0xff]
  %v63 = vld [vmem:[#allocation2 + $0xa0] sm:$0xff]
  %v64 = vld [vmem:[#allocation2 + $0xa8] sm:$0xff]
  %v65 = vld [vmem:[#allocation2 + $0xb0] sm:$0xff]
  %v66 = vld [vmem:[#allocation2 + $0xb8] sm:$0xff]
  %v67 = vld [vmem:[%s0] sm:$0xff]
  %v68 = vld [vmem:[%s0 + $0x8] sm:$0xff]
  %v69 = vld [vmem:[%s0 + $0x10] sm:$0xff]
  %v70 = vld [vmem:[%s0 + $0x18] sm:$0xff]
  %v71 = vld [vmem:[%s0 + $0x20] sm:$0xff]
  %v72 = vld [vmem:[%s0 + $0x28] sm:$0xff]
  %v73 = vld [vmem:[%s0 + $0x30] sm:$0xff]
  %v74 = vld [vmem:[%s0 + $0x38] sm:$0xff]
  %v75 = vpack.c.bf16 %v68, %v67
  %v76 = vpack.c.bf16 %v70, %v69
  %v77 = vpack.c.bf16 %v72, %v71
  %v78 = vpack.c.bf16 %v74, %v73
  %v79 = vld [vmem:[%s1] sm:$0xff]
  %v80 = vld [vmem:[%s1 + $0x8] sm:$0xf]
  %v81 = vld [vmem:[%s1 + $0xc] sm:$0xff]
  %v82 = vld [vmem:[%s1 + $0x14] sm:$0xf]
  %v83 = vld [vmem:[%s1 + $0x18] sm:$0xff]
  %v84 = vld [vmem:[%s1 + $0x20] sm:$0xf]
  %v85 = vld [vmem:[%s1 + $0x24] sm:$0xff]
  %v86 = vld [vmem:[%s1 + $0x2c] sm:$0xf]
  %v95 = vunpack.c.l.b16 %v79
  %v96 = vunpack.c.h.b16 %v79
  %v97 = vunpack.c.l.b16 %v80
  %v98 = vunpack.c.l.b16 %v81
  %v99 = vunpack.c.h.b16 %v81
  %v100 = vunpack.c.l.b16 %v82
  %v101 = vunpack.c.l.b16 %v83
  %v102 = vunpack.c.h.b16 %v83
  %v103 = vunpack.c.l.b16 %v84
  %v104 = vunpack.c.l.b16 %v85
  %v105 = vunpack.c.h.b16 %v85
  %v106 = vunpack.c.l.b16 %v86
  %v107 = vpack.c.b16 %v98, %v95
  %v108 = vpack.c.b16 %v99, %v96
  %v109 = vpack.c.b16 %v100, %v97
  %v110 = vpack.c.b16 %v104, %v101
  %v111 = vpack.c.b16 %v105, %v102
  %v112 = vpack.c.b16 %v106, %v103
  %vm119 = vcmask 261120
  %v121 = vsel %vm119, %v75, 0
  %v124 = vsel %vm119, %v76, 0
  %v127 = vsel %vm119, %v77, 0
  %v130 = vsel %vm119, %v78, 0
  %132 = vmatprep.subr.bf16.mxu0 0
  %133 = vmatpush1.bf16.msra.mxu0 0
  %134 = vmatprep.subr.bf16.mxu0 0
  %135 = vmatpush1.bf16.msra.mxu0 0
  %136 = vmatprep.subr.bf16.mxu0 0
  %137 = vmatpush1.bf16.msra.mxu0 0
  %138 = vmatprep.subr.bf16.mxu0 0
  %139 = vmatpush1.bf16.msra.mxu0 0
  %140 = vmatprep.subr.bf16.mxu0 0
  %141 = vmatpush1.bf16.msra.mxu0 0
  %142 = vmatprep.subr.bf16.mxu0 0
  %143 = vmatpush1.bf16.msra.mxu0 0
  %144 = vmatprep.subr.bf16.mxu0 %v111
  %145 = vmatpush1.bf16.msra.mxu0 %v110
  %146 = vmatprep.subr.bf16.mxu0 %v108
  %147 = vmatpush1.bf16.msra.mxu0 %v107
  %148 = vmatprep.subr.bf16.mxu0 0
  %149 = vmatpush2.bf16.msra.mxu0 0
  %150 = vmatprep.subr.bf16.mxu0 0
  %151 = vmatpush2.bf16.msra.mxu0 0
  %152 = vmatprep.subr.bf16.mxu0 0
  %153 = vmatpush2.bf16.msra.mxu0 0
  %154 = vmatprep.subr.bf16.mxu0 0
  %155 = vmatpush2.bf16.msra.mxu0 0
  %156 = vmatprep.subr.bf16.mxu0 0
  %157 = vmatpush2.bf16.msra.mxu0 0
  %158 = vmatprep.subr.bf16.mxu0 0
  %159 = vmatpush2.bf16.msra.mxu0 0
  %160 = vmatprep.subr.bf16.mxu0 0
  %161 = vmatpush2.bf16.msra.mxu0 0
  %162 = vmatprep.subr.bf16.mxu0 0
  %163 = vmatpush2.bf16.msra.mxu0 0
  %164 = vmatprep.mubr.bf16.mxu0 0
  %165 = vmatmul.mubr.bf16.gmra.mxu0 %v121
  %v166 = vpop.f32.mrf.mxu0
  %v167 = vadd.f32 0.0, %v166
  %v168 = vpop.f32.mrf.mxu0
  %v169 = vadd.f32 0.0, %v168
  %v170 = vpop.f32.mrf.mxu0
  %v171 = vadd.f32 0.0, %v170
  %v172 = vpop.f32.mrf.mxu0
  %v173 = vadd.f32 0.0, %v172
  %174 = vmatprep.mubr.bf16.mxu0 0
  %175 = vmatmul.mubr.bf16.gmra.mxu0 %v124
  %v176 = vpop.f32.mrf.mxu0
  %v177 = vadd.f32 0.0, %v176
  %v178 = vpop.f32.mrf.mxu0
  %v179 = vadd.f32 0.0, %v178
  %v180 = vpop.f32.mrf.mxu0
  %v181 = vadd.f32 0.0, %v180
  %v182 = vpop.f32.mrf.mxu0
  %v183 = vadd.f32 0.0, %v182
  %184 = vmatprep.mubr.bf16.mxu0 0
  %185 = vmatmul.mubr.bf16.gmra.mxu0 %v127
  %v186 = vpop.f32.mrf.mxu0
  %v187 = vadd.f32 0.0, %v186
  %v188 = vpop.f32.mrf.mxu0
  %v189 = vadd.f32 0.0, %v188
  %v190 = vpop.f32.mrf.mxu0
  %v191 = vadd.f32 0.0, %v190
  %v192 = vpop.f32.mrf.mxu0
  %v193 = vadd.f32 0.0, %v192
  %194 = vmatprep.mubr.bf16.mxu0 0
  %195 = vmatmul.mubr.bf16.gmra.mxu0 %v130
  %v196 = vpop.f32.mrf.mxu0
  %v197 = vadd.f32 0.0, %v196
  %v198 = vpop.f32.mrf.mxu0
  %v199 = vadd.f32 0.0, %v198
  %v200 = vpop.f32.mrf.mxu0
  %v201 = vadd.f32 0.0, %v200
  %v202 = vpop.f32.mrf.mxu0
  %v203 = vadd.f32 0.0, %v202
  %204 = vdwg.mxu0
  %205 = vmatprep.subr.bf16.mxu0 0
  %206 = vmatpush1.bf16.msra.mxu0 0
  %207 = vmatprep.subr.bf16.mxu0 0
  %208 = vmatpush1.bf16.msra.mxu0 0
  %209 = vmatprep.subr.bf16.mxu0 0
  %210 = vmatpush1.bf16.msra.mxu0 0
  %211 = vmatprep.subr.bf16.mxu0 0
  %212 = vmatpush1.bf16.msra.mxu0 0
  %213 = vmatprep.subr.bf16.mxu0 0
  %214 = vmatpush1.bf16.msra.mxu0 0
  %215 = vmatprep.subr.bf16.mxu0 0
  %216 = vmatpush1.bf16.msra.mxu0 0
  %217 = vmatprep.subr.bf16.mxu0 0
  %218 = vmatpush1.bf16.msra.mxu0 %v112
  %219 = vmatprep.subr.bf16.mxu0 0
  %220 = vmatpush1.bf16.msra.mxu0 %v109
  %221 = vmatprep.subr.bf16.mxu0 0
  %222 = vmatpush2.bf16.msra.mxu0 0
  %223 = vmatprep.subr.bf16.mxu0 0
  %224 = vmatpush2.bf16.msra.mxu0 0
  %225 = vmatprep.subr.bf16.mxu0 0
  %226 = vmatpush2.bf16.msra.mxu0 0
  %227 = vmatprep.subr.bf16.mxu0 0
  %228 = vmatpush2.bf16.msra.mxu0 0
  %229 = vmatprep.subr.bf16.mxu0 0
  %230 = vmatpush2.bf16.msra.mxu0 0
  %231 = vmatprep.subr.bf16.mxu0 0
  %232 = vmatpush2.bf16.msra.mxu0 0
  %233 = vmatprep.subr.bf16.mxu0 0
  %234 = vmatpush2.bf16.msra.mxu0 0
  %235 = vmatprep.subr.bf16.mxu0 0
  %236 = vmatpush2.bf16.msra.mxu0 0
  %237 = vmatprep.mubr.bf16.mxu0 0
  %238 = vmatmul.mubr.bf16.gmra.mxu0 %v121
  %v239 = vpop.f32.mrf.mxu0
  %v240 = vadd.f32 0.0, %v239
  %v241 = vpop.f32.mrf.mxu0
  %v242 = vpop.f32.mrf.mxu0
  %v243 = vadd.f32 0.0, %v242
  %v244 = vpop.f32.mrf.mxu0
  %245 = vmatprep.mubr.bf16.mxu0 0
  %246 = vmatmul.mubr.bf16.gmra.mxu0 %v124
  %v247 = vpop.f32.mrf.mxu0
  %v248 = vadd.f32 0.0, %v247
  %v249 = vpop.f32.mrf.mxu0
  %v250 = vpop.f32.mrf.mxu0
  %v251 = vadd.f32 0.0, %v250
  %v252 = vpop.f32.mrf.mxu0
  %253 = vmatprep.mubr.bf16.mxu0 0
  %254 = vmatmul.mubr.bf16.gmra.mxu0 %v127
  %v255 = vpop.f32.mrf.mxu0
  %v256 = vadd.f32 0.0, %v255
  %v257 = vpop.f32.mrf.mxu0
  %v258 = vpop.f32.mrf.mxu0
  %v259 = vadd.f32 0.0, %v258
  %v260 = vpop.f32.mrf.mxu0
  %261 = vmatprep.mubr.bf16.mxu0 0
  %262 = vmatmul.mubr.bf16.gmra.mxu0 %v130
  %v263 = vpop.f32.mrf.mxu0
  %v264 = vadd.f32 0.0, %v263
  %v265 = vpop.f32.mrf.mxu0
  %v266 = vpop.f32.mrf.mxu0
  %v267 = vadd.f32 0.0, %v266
  %v268 = vpop.f32.mrf.mxu0
  %269 = vdwg.mxu0
  %v270 = vadd.f32 %v43, %v167
  %v271 = vadd.f32 %v44, %v169
  %v272 = vadd.f32 %v45, %v240
  %v273 = vadd.f32 %v46, %v171
  %v274 = vadd.f32 %v47, %v173
  %v275 = vadd.f32 %v48, %v243
  %v276 = vadd.f32 %v49, %v177
  %v277 = vadd.f32 %v50, %v179
  %v278 = vadd.f32 %v51, %v248
  %v279 = vadd.f32 %v52, %v181
  %v280 = vadd.f32 %v53, %v183
  %v281 = vadd.f32 %v54, %v251
  %v282 = vadd.f32 %v55, %v187
  %v283 = vadd.f32 %v56, %v189
  %v284 = vadd.f32 %v57, %v256
  %v285 = vadd.f32 %v58, %v191
  %v286 = vadd.f32 %v59, %v193
  %v287 = vadd.f32 %v60, %v259
  %v288 = vadd.f32 %v61, %v197
  %v289 = vadd.f32 %v62, %v199
  %v290 = vadd.f32 %v63, %v264
  %v291 = vadd.f32 %v64, %v201
  %v292 = vadd.f32 %v65, %v203
  %v293 = vadd.f32 %v66, %v267
  %294 = vst [vmem:[#allocation2] sm:$0xff] %v270
  %295 = vst [vmem:[#allocation2 + $0x8] sm:$0xff] %v271
  %296 = vst [vmem:[#allocation2 + $0x10] sm:$0xff] %v272
  %297 = vst [vmem:[#allocation2 + $0x18] sm:$0xff] %v273
  %298 = vst [vmem:[#allocation2 + $0x20] sm:$0xff] %v274
  %299 = vst [vmem:[#allocation2 + $0x28] sm:$0xff] %v275
  %300 = vst [vmem:[#allocation2 + $0x30] sm:$0xff] %v276
  %301 = vst [vmem:[#allocation2 + $0x38] sm:$0xff] %v277
  %302 = vst [vmem:[#allocation2 + $0x40] sm:$0xff] %v278
  %303 = vst [vmem:[#allocation2 + $0x48] sm:$0xff] %v279
  %304 = vst [vmem:[#allocation2 + $0x50] sm:$0xff] %v280
  %305 = vst [vmem:[#allocation2 + $0x58] sm:$0xff] %v281
  %306 = vst [vmem:[#allocation2 + $0x60] sm:$0xff] %v282
  %307 = vst [vmem:[#allocation2 + $0x68] sm:$0xff] %v283
  %308 = vst [vmem:[#allocation2 + $0x70] sm:$0xff] %v284
  %309 = vst [vmem:[#allocation2 + $0x78] sm:$0xff] %v285
  %310 = vst [vmem:[#allocation2 + $0x80] sm:$0xff] %v286
  %311 = vst [vmem:[#allocation2 + $0x88] sm:$0xff] %v287
  %312 = vst [vmem:[#allocation2 + $0x90] sm:$0xff] %v288
  %313 = vst [vmem:[#allocation2 + $0x98] sm:$0xff] %v289
  %314 = vst [vmem:[#allocation2 + $0xa0] sm:$0xff] %v290
  %315 = vst [vmem:[#allocation2 + $0xa8] sm:$0xff] %v291
  %316 = vst [vmem:[#allocation2 + $0xb0] sm:$0xff] %v292
  %317 = vst [vmem:[#allocation2 + $0xb8] sm:$0xff] %v293
  // Predicated region
  $region18: #{dcuelm_forward.8} parent=0 // pred_check
    %p318 = pneg %p15
  $region19: #{dcuelm_forward.8} parent=0 // pred_check_branch
    %320 = sbr.rel (%p318) target = $region21
  $region20: #{dcuelm_forward.8} parent=0 // pred_region
    %v321 = vld [vmem:[#allocation2] sm:$0xff]
    %v322 = vld [vmem:[#allocation2 + $0x8] sm:$0xff]
    %v323 = vld [vmem:[#allocation2 + $0x10] sm:$0xff]
    %v324 = vld [vmem:[#allocation2 + $0x18] sm:$0xff]
    %v325 = vld [vmem:[#allocation2 + $0x20] sm:$0xff]
    %v326 = vld [vmem:[#allocation2 + $0x28] sm:$0xff]
    %v327 = vld [vmem:[#allocation2 + $0x30] sm:$0xff]
    %v328 = vld [vmem:[#allocation2 + $0x38] sm:$0xff]
    %v329 = vld [vmem:[#allocation2 + $0x40] sm:$0xff]
    %v330 = vld [vmem:[#allocation2 + $0x48] sm:$0xff]
    %v331 = vld [vmem:[#allocation2 + $0x50] sm:$0xff]
    %v332 = vld [vmem:[#allocation2 + $0x58] sm:$0xff]
    %v333 = vld [vmem:[#allocation2 + $0x60] sm:$0xff]
    %v334 = vld [vmem:[#allocation2 + $0x68] sm:$0xff]
    %v335 = vld [vmem:[#allocation2 + $0x70] sm:$0xff]
    %v336 = vld [vmem:[#allocation2 + $0x78] sm:$0xff]
    %v337 = vld [vmem:[#allocation2 + $0x80] sm:$0xff]
    %v338 = vld [vmem:[#allocation2 + $0x88] sm:$0xff]
    %v339 = vld [vmem:[#allocation2 + $0x90] sm:$0xff]
    %v340 = vld [vmem:[#allocation2 + $0x98] sm:$0xff]
    %v341 = vld [vmem:[#allocation2 + $0xa0] sm:$0xff]
    %v342 = vld [vmem:[#allocation2 + $0xa8] sm:$0xff]
    %v343 = vld [vmem:[#allocation2 + $0xb0] sm:$0xff]
    %v344 = vld [vmem:[#allocation2 + $0xb8] sm:$0xff]
    %v345 = vld [vmem:[%s2] sm:$0x7]
    %v347 = vlaneseq
    %v348 = vshrl.u32 %v347, 7
    %v349 = vsub.s32 0, %v348
    %v350 = vrot.slane %v345, %v349
    %v351 = vlaneseq
    %v352 = vshrl.u32 %v351, 7
    %v353 = vsub.s32 1, %v352
    %v354 = vrot.slane %v345, %v353
    %v355 = vlaneseq
    %v356 = vshrl.u32 %v355, 7
    %v357 = vsub.s32 2, %v356
    %v358 = vrot.slane %v345, %v357
    %v362 = vadd.f32 %v321, %v350
    %v363 = vadd.f32 %v322, %v354
    %v364 = vadd.f32 %v323, %v358
    %v365 = vadd.f32 %v324, %v350
    %v366 = vadd.f32 %v325, %v354
    %v367 = vadd.f32 %v326, %v358
    %v368 = vadd.f32 %v327, %v350
    %v369 = vadd.f32 %v328, %v354
    %v370 = vadd.f32 %v329, %v358
    %v371 = vadd.f32 %v330, %v350
    %v372 = vadd.f32 %v331, %v354
    %v373 = vadd.f32 %v332, %v358
    %v374 = vadd.f32 %v333, %v350
    %v375 = vadd.f32 %v334, %v354
    %v376 = vadd.f32 %v335, %v358
    %v377 = vadd.f32 %v336, %v350
    %v378 = vadd.f32 %v337, %v354
    %v379 = vadd.f32 %v338, %v358
    %v380 = vadd.f32 %v339, %v350
    %v381 = vadd.f32 %v340, %v354
    %v382 = vadd.f32 %v341, %v358
    %v383 = vadd.f32 %v342, %v350
    %v384 = vadd.f32 %v343, %v354
    %v385 = vadd.f32 %v344, %v358
    %v386 = vpack.c.bf16 %v365, %v362
    %v387 = vpack.c.bf16 %v366, %v363
    %v388 = vpack.c.bf16 %v367, %v364
    %v389 = vpack.c.bf16 %v371, %v368
    %v390 = vpack.c.bf16 %v372, %v369
    %v391 = vpack.c.bf16 %v373, %v370
    %v392 = vpack.c.bf16 %v377, %v374
    %v393 = vpack.c.bf16 %v378, %v375
    %v394 = vpack.c.bf16 %v379, %v376
    %v395 = vpack.c.bf16 %v383, %v380
    %v396 = vpack.c.bf16 %v384, %v381
    %v397 = vpack.c.bf16 %v385, %v382
    %v410 = vunpack.c.l.b16 %v386
    %v411 = vunpack.c.l.b16 %v387
    %v412 = vunpack.c.l.b16 %v388
    %v413 = vunpack.c.h.b16 %v386
    %v414 = vunpack.c.h.b16 %v387
    %v415 = vunpack.c.h.b16 %v388
    %v416 = vunpack.c.l.b16 %v389
    %v417 = vunpack.c.l.b16 %v390
    %v418 = vunpack.c.l.b16 %v391
    %v419 = vunpack.c.h.b16 %v389
    %v420 = vunpack.c.h.b16 %v390
    %v421 = vunpack.c.h.b16 %v391
    %v422 = vunpack.c.l.b16 %v392
    %v423 = vunpack.c.l.b16 %v393
    %v424 = vunpack.c.l.b16 %v394
    %v425 = vunpack.c.h.b16 %v392
    %v426 = vunpack.c.h.b16 %v393
    %v427 = vunpack.c.h.b16 %v394
    %v428 = vunpack.c.l.b16 %v395
    %v429 = vunpack.c.l.b16 %v396
    %v430 = vunpack.c.l.b16 %v397
    %v431 = vunpack.c.h.b16 %v395
    %v432 = vunpack.c.h.b16 %v396
    %v433 = vunpack.c.h.b16 %v397
    %v434 = vpack.c.b16 %v411, %v410
    %v435 = vpack.c.b16 %v412, %v412
    %v436 = vpack.c.b16 %v414, %v413
    %v437 = vpack.c.b16 %v415, %v415
    %v438 = vpack.c.b16 %v417, %v416
    %v439 = vpack.c.b16 %v418, %v418
    %v440 = vpack.c.b16 %v420, %v419
    %v441 = vpack.c.b16 %v421, %v421
    %v442 = vpack.c.b16 %v423, %v422
    %v443 = vpack.c.b16 %v424, %v424
    %v444 = vpack.c.b16 %v426, %v425
    %v445 = vpack.c.b16 %v427, %v427
    %v446 = vpack.c.b16 %v429, %v428
    %v447 = vpack.c.b16 %v430, %v430
    %v448 = vpack.c.b16 %v432, %v431
    %v449 = vpack.c.b16 %v433, %v433
    %466 = vst [vmem:[%s3] sm:$0xff] %v434
    %467 = vst [vmem:[%s3 + $0x8] sm:$0xf] %v435
    %468 = vst [vmem:[%s3 + $0xc] sm:$0xff] %v436
    %469 = vst [vmem:[%s3 + $0x14] sm:$0xf] %v437
    %470 = vst [vmem:[%s3 + $0x18] sm:$0xff] %v438
    %471 = vst [vmem:[%s3 + $0x20] sm:$0xf] %v439
    %472 = vst [vmem:[%s3 + $0x24] sm:$0xff] %v440
    %473 = vst [vmem:[%s3 + $0x2c] sm:$0xf] %v441
    %474 = vst [vmem:[%s3 + $0x30] sm:$0xff] %v442
    %475 = vst [vmem:[%s3 + $0x38] sm:$0xf] %v443
    %476 = vst [vmem:[%s3 + $0x3c] sm:$0xff] %v444
    %477 = vst [vmem:[%s3 + $0x44] sm:$0xf] %v445
    %478 = vst [vmem:[%s3 + $0x48] sm:$0xff] %v446
    %479 = vst [vmem:[%s3 + $0x50] sm:$0xf] %v447
    %480 = vst [vmem:[%s3 + $0x54] sm:$0xff] %v448
    %481 = vst [vmem:[%s3 + $0x5c] sm:$0xf] %v449
  $region21: #{dcuelm_forward.8} parent=0 // pred_fallthru
    _
  // Predicated region
  $region22: #{dcuelm_forward.8} parent=0 // pred_check
    _
  $region23: #{dcuelm_forward.8} parent=0 // pred_check_branch
    %483 = sbr.rel (0) target = $region25
  $region24: #{dcuelm_forward.8} parent=0 // pred_region
    _
  $region25: #{dcuelm_forward.8} parent=0 // pred_fallthru
    _
  // Predicated region
  $region26: #{dcuelm_forward.8} parent=0 // pred_check
    _
  $region27: #{dcuelm_forward.8} parent=0 // pred_check_branch
    %485 = sbr.rel (0) target = $region29
  $region28: #{dcuelm_forward.8} parent=0 // pred_region
    _
  $region29: #{dcuelm_forward.8} parent=0 // pred_fallthru
    _

// kernel: dcuelm_forward.6
$region0: #{dcuelm_forward.6}
  #allocation0 [shape = 'u32[]', space=smem, size = 0x4, offset = 0x4, fixed_abs, tag = 'smem constant byte address 0x4 - core index']
  #allocation1 [shape = 'u32[144,128]{1,0:T(1,128)}', space=vmem, size = 0x12000, scoped, tag = 'internal scratch']
  %s0 = inlined_call_operand.vmem [shape: f32[8,16,16], index: 0, kind: input, shape index: {}]
  %s1 = inlined_call_operand.vmem [shape: bf16[48,224], index: 1, kind: input, shape index: {}]
  %s2 = inlined_call_operand.vmem [shape: f32[1,224], index: 2, kind: input, shape index: {}]
  %s3 = inlined_call_operand.vmem [shape: bf16[224,128], index: 3, kind: input, shape index: {}]
  %s4 = inlined_call_operand.vmem [shape: f32[1,128], index: 4, kind: input, shape index: {}]
  %s5 = inlined_call_operand.vmem [shape: f32[8,128], index: 5, kind: output, shape index: {}]
  %s6 = sld [smem:[#allocation0]]
  $region30: #{dcuelm_forward.6} parent=0
    _
  %s8 = ssub.s32 1, %s6
  %s9 = scalar_select 0, %s8, %s6
  // Predicated region
  $region2: #{dcuelm_forward.6} parent=0 // pred_check
    _
  $region3: #{dcuelm_forward.6} parent=0 // pred_check_branch
    %11 = sbr.rel (0) target = $region5
  $region4: #{dcuelm_forward.6} parent=0 // pred_region
    _
  $region5: #{dcuelm_forward.6} parent=0 // pred_fallthru
    _
  // Predicated region
  $region6: #{dcuelm_forward.6} parent=0 // pred_check
    _
  $region7: #{dcuelm_forward.6} parent=0 // pred_check_branch
    %13 = sbr.rel (0) target = $region9
  $region8: #{dcuelm_forward.6} parent=0 // pred_region
    _
  $region9: #{dcuelm_forward.6} parent=0 // pred_fallthru
    _
  // Predicated region
  $region10: #{dcuelm_forward.6} parent=0 // pred_check
    _
  $region11: #{dcuelm_forward.6} parent=0 // pred_check_branch
    %15 = sbr.rel (0) target = $region13
  $region12: #{dcuelm_forward.6} parent=0 // pred_region
    _
  $region13: #{dcuelm_forward.6} parent=0 // pred_fallthru
    _
  // Predicated region
  $region14: #{dcuelm_forward.6} parent=0 // pred_check
    _
  $region15: #{dcuelm_forward.6} parent=0 // pred_check_branch
    %17 = sbr.rel (0) target = $region17
  $region16: #{dcuelm_forward.6} parent=0 // pred_region
    _
  $region17: #{dcuelm_forward.6} parent=0 // pred_fallthru
    _
  // Predicated region
  $region18: #{dcuelm_forward.6} parent=0 // pred_check
    _
  $region19: #{dcuelm_forward.6} parent=0 // pred_check_branch
    %19 = sbr.rel (0) target = $region21
  $region20: #{dcuelm_forward.6} parent=0 // pred_region
    _
  $region21: #{dcuelm_forward.6} parent=0 // pred_fallthru
    _
  %v21 = vld [vmem:[%s0] sm:$0xff]
  %v22 = vld [vmem:[%s0 + $0x8] sm:$0xff]
  %v23 = vld [vmem:[%s0 + $0x10] sm:$0xff]
  %v24 = vld [vmem:[%s0 + $0x18] sm:$0xff]
  %v25 = vld [vmem:[%s0 + $0x20] sm:$0xff]
  %v26 = vld [vmem:[%s0 + $0x28] sm:$0xff]
  %v27 = vld [vmem:[%s0 + $0x30] sm:$0xff]
  %v28 = vld [vmem:[%s0 + $0x38] sm:$0xff]
  %v29 = vld [vmem:[%s0 + $0x40] sm:$0xff]
  %v30 = vld [vmem:[%s0 + $0x48] sm:$0xff]
  %v31 = vld [vmem:[%s0 + $0x50] sm:$0xff]
  %v32 = vld [vmem:[%s0 + $0x58] sm:$0xff]
  %v33 = vld [vmem:[%s0 + $0x60] sm:$0xff]
  %v34 = vld [vmem:[%s0 + $0x68] sm:$0xff]
  %v35 = vld [vmem:[%s0 + $0x70] sm:$0xff]
  %v36 = vld [vmem:[%s0 + $0x78] sm:$0xff]
  %v37 = vld [vmem:[%s1] sm:$0xff]
  %v38 = vld [vmem:[%s1 + $0x8] sm:$0xff]
  %v39 = vld [vmem:[%s1 + $0x10] sm:$0xff]
  %v40 = vld [vmem:[%s1 + $0x18] sm:$0xff]
  %v41 = vld [vmem:[%s1 + $0x20] sm:$0xff]
  %v42 = vld [vmem:[%s1 + $0x28] sm:$0xff]
  %v43 = vld [vmem:[%s3] sm:$0xf]
  %v44 = vld [vmem:[%s3 + $0x4] sm:$0xf]
  %v45 = vld [vmem:[%s3 + $0x8] sm:$0xf]
  %v46 = vld [vmem:[%s3 + $0xc] sm:$0xf]
  %v47 = vld [vmem:[%s3 + $0x10] sm:$0xf]
  %v48 = vld [vmem:[%s3 + $0x14] sm:$0xf]
  %v49 = vld [vmem:[%s3 + $0x18] sm:$0xf]
  %v50 = vld [vmem:[%s3 + $0x1c] sm:$0xf]
  %v51 = vld [vmem:[%s3 + $0x20] sm:$0xf]
  %v52 = vld [vmem:[%s3 + $0x24] sm:$0xf]
  %v53 = vld [vmem:[%s3 + $0x28] sm:$0xf]
  %v54 = vld [vmem:[%s3 + $0x2c] sm:$0xf]
  %v55 = vld [vmem:[%s3 + $0x30] sm:$0xf]
  %v56 = vld [vmem:[%s3 + $0x34] sm:$0xf]
  %v57 = vld [vmem:[%s3 + $0x38] sm:$0xf]
  %v58 = vld [vmem:[%s3 + $0x3c] sm:$0xf]
  %v59 = vld [vmem:[%s3 + $0x40] sm:$0xf]
  %v60 = vld [vmem:[%s3 + $0x44] sm:$0xf]
  %v61 = vld [vmem:[%s3 + $0x48] sm:$0xf]
  %v62 = vld [vmem:[%s3 + $0x4c] sm:$0xf]
  %v63 = vld [vmem:[%s3 + $0x50] sm:$0xf]
  %v64 = vld [vmem:[%s3 + $0x54] sm:$0xf]
  %v65 = vld [vmem:[%s3 + $0x58] sm:$0xf]
  %v66 = vld [vmem:[%s3 + $0x5c] sm:$0xf]
  %v67 = vld [vmem:[%s3 + $0x60] sm:$0xf]
  %v68 = vld [vmem:[%s3 + $0x64] sm:$0xf]
  %v69 = vld [vmem:[%s3 + $0x68] sm:$0xf]
  %v70 = vld [vmem:[%s3 + $0x6c] sm:$0xf]
  %vm73 = vcmask 1046528
  %v74 = vrot.slane %v21, 1
  %v75 = vrot.slane %v22, 1
  %v76 = vsel %vm73, %v74, %v75
  %77 = vrot.lane.b32.xlu0 %v76, 16
  %v78 = vpop.permute.xlu0 %77
  %79 = vrot.lane.b32.xlu0 %v75, 16
  %v80 = vpop.permute.xlu0 %79
  %vm83 = vcmask 1045504
  %v84 = vrot.slane %v21, 2
  %v85 = vrot.slane %v22, 2
  %v86 = vsel %vm83, %v84, %v85
  %87 = vrot.lane.b32.xlu0 %v86, 32
  %v88 = vpop.permute.xlu0 %87
  %89 = vrot.lane.b32.xlu0 %v85, 32
  %v90 = vpop.permute.xlu0 %89
  %vm93 = vcmask 130048
  %v94 = vsel %vm93, %v21, %v78
  %v95 = vsel %vm93, %v22, %v80
  %vm96 = vcmask 261120
  %v97 = vsel %vm96, %v94, %v88
  %v98 = vsel %vm96, %v95, %v90
  %v101 = vrot.slane %v23, 1
  %v102 = vrot.slane %v24, 1
  %v103 = vsel %vm73, %v101, %v102
  %104 = vrot.lane.b32.xlu0 %v103, 16
  %v105 = vpop.permute.xlu0 %104
  %106 = vrot.lane.b32.xlu0 %v102, 16
  %v107 = vpop.permute.xlu0 %106
  %v110 = vrot.slane %v23, 2
  %v111 = vrot.slane %v24, 2
  %v112 = vsel %vm83, %v110, %v111
  %113 = vrot.lane.b32.xlu0 %v112, 32
  %v114 = vpop.permute.xlu0 %113
  %115 = vrot.lane.b32.xlu0 %v111, 32
  %v116 = vpop.permute.xlu0 %115
  %v119 = vsel %vm93, %v23, %v105
  %v120 = vsel %vm93, %v24, %v107
  %v121 = vsel %vm96, %v119, %v114
  %v122 = vsel %vm96, %v120, %v116
  %v125 = vrot.slane %v25, 1
  %v126 = vrot.slane %v26, 1
  %v127 = vsel %vm73, %v125, %v126
  %128 = vrot.lane.b32.xlu0 %v127, 16
  %v129 = vpop.permute.xlu0 %128
  %130 = vrot.lane.b32.xlu0 %v126, 16
  %v131 = vpop.permute.xlu0 %130
  %v134 = vrot.slane %v25, 2
  %v135 = vrot.slane %v26, 2
  %v136 = vsel %vm83, %v134, %v135
  %137 = vrot.lane.b32.xlu0 %v136, 32
  %v138 = vpop.permute.xlu0 %137
  %139 = vrot.lane.b32.xlu0 %v135, 32
  %v140 = vpop.permute.xlu0 %139
  %v143 = vsel %vm93, %v25, %v129
  %v144 = vsel %vm93, %v26, %v131
  %v145 = vsel %vm96, %v143, %v138
  %v146 = vsel %vm96, %v144, %v140
  %v149 = vrot.slane %v27, 1
  %v150 = vrot.slane %v28, 1
  %v151 = vsel %vm73, %v149, %v150
  %152 = vrot.lane.b32.xlu0 %v151, 16
  %v153 = vpop.permute.xlu0 %152
  %154 = vrot.lane.b32.xlu0 %v150, 16
  %v155 = vpop.permute.xlu0 %154
  %v158 = vrot.slane %v27, 2
  %v159 = vrot.slane %v28, 2
  %v160 = vsel %vm83, %v158, %v159
  %161 = vrot.lane.b32.xlu0 %v160, 32
  %v162 = vpop.permute.xlu0 %161
  %163 = vrot.lane.b32.xlu0 %v159, 32
  %v164 = vpop.permute.xlu0 %163
  %v167 = vsel %vm93, %v27, %v153
  %v168 = vsel %vm93, %v28, %v155
  %v169 = vsel %vm96, %v167, %v162
  %v170 = vsel %vm96, %v168, %v164
  %v173 = vrot.slane %v29, 1
  %v174 = vrot.slane %v30, 1
  %v175 = vsel %vm73, %v173, %v174
  %176 = vrot.lane.b32.xlu0 %v175, 16
  %v177 = vpop.permute.xlu0 %176
  %178 = vrot.lane.b32.xlu0 %v174, 16
  %v179 = vpop.permute.xlu0 %178
  %v182 = vrot.slane %v29, 2
  %v183 = vrot.slane %v30, 2
  %v184 = vsel %vm83, %v182, %v183
  %185 = vrot.lane.b32.xlu0 %v184, 32
  %v186 = vpop.permute.xlu0 %185
  %187 = vrot.lane.b32.xlu0 %v183, 32
  %v188 = vpop.permute.xlu0 %187
  %v191 = vsel %vm93, %v29, %v177
  %v192 = vsel %vm93, %v30, %v179
  %v193 = vsel %vm96, %v191, %v186
  %v194 = vsel %vm96, %v192, %v188
  %v197 = vrot.slane %v31, 1
  %v198 = vrot.slane %v32, 1
  %v199 = vsel %vm73, %v197, %v198
  %200 = vrot.lane.b32.xlu0 %v199, 16
  %v201 = vpop.permute.xlu0 %200
  %202 = vrot.lane.b32.xlu0 %v198, 16
  %v203 = vpop.permute.xlu0 %202
  %v206 = vrot.slane %v31, 2
  %v207 = vrot.slane %v32, 2
  %v208 = vsel %vm83, %v206, %v207
  %209 = vrot.lane.b32.xlu0 %v208, 32
  %v210 = vpop.permute.xlu0 %209
  %211 = vrot.lane.b32.xlu0 %v207, 32
  %v212 = vpop.permute.xlu0 %211
  %v215 = vsel %vm93, %v31, %v201
  %v216 = vsel %vm93, %v32, %v203
  %v217 = vsel %vm96, %v215, %v210
  %v218 = vsel %vm96, %v216, %v212
  %v221 = vrot.slane %v33, 1
  %v222 = vrot.slane %v34, 1
  %v223 = vsel %vm73, %v221, %v222
  %224 = vrot.lane.b32.xlu0 %v223, 16
  %v225 = vpop.permute.xlu0 %224
  %226 = vrot.lane.b32.xlu0 %v222, 16
  %v227 = vpop.permute.xlu0 %226
  %v230 = vrot.slane %v33, 2
  %v231 = vrot.slane %v34, 2
  %v232 = vsel %vm83, %v230, %v231
  %233 = vrot.lane.b32.xlu0 %v232, 32
  %v234 = vpop.permute.xlu0 %233
  %235 = vrot.lane.b32.xlu0 %v231, 32
  %v236 = vpop.permute.xlu0 %235
  %v239 = vsel %vm93, %v33, %v225
  %v240 = vsel %vm93, %v34, %v227
  %v241 = vsel %vm96, %v239, %v234
  %v242 = vsel %vm96, %v240, %v236
  %v245 = vrot.slane %v35, 1
  %v246 = vrot.slane %v36, 1
  %v247 = vsel %vm73, %v245, %v246
  %248 = vrot.lane.b32.xlu0 %v247, 16
  %v249 = vpop.permute.xlu0 %248
  %250 = vrot.lane.b32.xlu0 %v246, 16
  %v251 = vpop.permute.xlu0 %250
  %v254 = vrot.slane %v35, 2
  %v255 = vrot.slane %v36, 2
  %v256 = vsel %vm83, %v254, %v255
  %257 = vrot.lane.b32.xlu0 %v256, 32
  %v258 = vpop.permute.xlu0 %257
  %259 = vrot.lane.b32.xlu0 %v255, 32
  %v260 = vpop.permute.xlu0 %259
  %v263 = vsel %vm93, %v35, %v249
  %v264 = vsel %vm93, %v36, %v251
  %v265 = vsel %vm96, %v263, %v258
  %v266 = vsel %vm96, %v264, %v260
  %v269 = vrot.slane %v121, 2
  %v270 = vrot.slane %v122, 2
  %v271 = vsel %vm83, %v269, %v270
  %vm277 = vcmask 1043456
  %v278 = vrot.slane %v145, 4
  %v279 = vrot.slane %v146, 4
  %v280 = vsel %vm277, %v278, %v279
  %vm286 = vcmask 1041408
  %v287 = vrot.slane %v169, 6
  %v288 = vrot.slane %v170, 6
  %v289 = vsel %vm286, %v287, %v288
  %v294 = vrot.slane %v217, 2
  %v295 = vrot.slane %v218, 2
  %v296 = vsel %vm83, %v294, %v295
  %v302 = vrot.slane %v241, 4
  %v303 = vrot.slane %v242, 4
  %v304 = vsel %vm277, %v302, %v303
  %v310 = vrot.slane %v265, 6
  %v311 = vrot.slane %v266, 6
  %v312 = vsel %vm286, %v310, %v311
  %v315 = vsel %vm83, %v98, %v269
  %v316 = vsel %vm277, %v270, %v278
  %v317 = vsel %vm286, %v279, %v287
  %v318 = vsel %vm83, %v194, %v294
  %v319 = vsel %vm277, %v295, %v302
  %v320 = vsel %vm286, %v303, %v310
  %v321 = vpack.c.bf16 %v315, %v97
  %v322 = vpack.c.bf16 %v316, %v271
  %v323 = vpack.c.bf16 %v317, %v280
  %v324 = vpack.c.bf16 %v193, %v289
  %v325 = vpack.c.bf16 %v296, %v318
  %v326 = vpack.c.bf16 %v304, %v319
  %v327 = vpack.c.bf16 %v312, %v320
  %v328 = vld [vmem:[%s2] sm:$0x3]
  %v330 = vlaneseq
  %v331 = vshrl.u32 %v330, 7
  %v332 = vsub.s32 0, %v331
  %v333 = vrot.slane %v328, %v332
  %v334 = vlaneseq
  %v335 = vshrl.u32 %v334, 7
  %v336 = vsub.s32 1, %v335
  %v337 = vrot.slane %v328, %v336
  %v346 = vunpack.c.l.b16 %v37
  %v347 = vunpack.c.h.b16 %v37
  %v348 = vunpack.c.l.b16 %v38
  %v349 = vunpack.c.h.b16 %v38
  %v350 = vunpack.c.l.b16 %v39
  %v351 = vunpack.c.h.b16 %v39
  %v352 = vunpack.c.l.b16 %v40
  %v353 = vunpack.c.h.b16 %v40
  %v354 = vunpack.c.l.b16 %v41
  %v355 = vunpack.c.h.b16 %v41
  %v356 = vunpack.c.l.b16 %v42
  %v357 = vunpack.c.h.b16 %v42
  %v358 = vpack.c.b16 %v348, %v346
  %v359 = vpack.c.b16 %v349, %v347
  %v360 = vpack.c.b16 %v352, %v350
  %v361 = vpack.c.b16 %v353, %v351
  %v362 = vpack.c.b16 %v356, %v354
  %v363 = vpack.c.b16 %v357, %v355
  %vm370 = vcmask 392192
  %v372 = vsel %vm370, %v321, 0
  %v375 = vsel %vm370, %v322, 0
  %v378 = vsel %vm370, %v323, 0
  %v381 = vsel %vm370, %v324, 0
  %v384 = vsel %vm370, %v325, 0
  %v387 = vsel %vm370, %v326, 0
  %v390 = vsel %vm370, %v327, 0
  %392 = vmatprep.subr.bf16.mxu0 0
  %393 = vmatpush1.bf16.msra.mxu0 0
  %394 = vmatprep.subr.bf16.mxu0 0
  %395 = vmatpush1.bf16.msra.mxu0 0
  %396 = vmatprep.subr.bf16.mxu0 0
  %397 = vmatpush1.bf16.msra.mxu0 0
  %398 = vmatprep.subr.bf16.mxu0 0
  %399 = vmatpush1.bf16.msra.mxu0 0
  %400 = vmatprep.subr.bf16.mxu0 0
  %401 = vmatpush1.bf16.msra.mxu0 0
  %402 = vmatprep.subr.bf16.mxu0 %v363
  %403 = vmatpush1.bf16.msra.mxu0 %v362
  %404 = vmatprep.subr.bf16.mxu0 %v361
  %405 = vmatpush1.bf16.msra.mxu0 %v360
  %406 = vmatprep.subr.bf16.mxu0 %v359
  %407 = vmatpush1.bf16.msra.mxu0 %v358
  %408 = vmatprep.subr.bf16.mxu0 0
  %409 = vmatpush2.bf16.msra.mxu0 0
  %410 = vmatprep.subr.bf16.mxu0 0
  %411 = vmatpush2.bf16.msra.mxu0 0
  %412 = vmatprep.subr.bf16.mxu0 0
  %413 = vmatpush2.bf16.msra.mxu0 0
  %414 = vmatprep.subr.bf16.mxu0 0
  %415 = vmatpush2.bf16.msra.mxu0 0
  %416 = vmatprep.subr.bf16.mxu0 0
  %417 = vmatpush2.bf16.msra.mxu0 0
  %418 = vmatprep.subr.bf16.mxu0 0
  %419 = vmatpush2.bf16.msra.mxu0 0
  %420 = vmatprep.subr.bf16.mxu0 0
  %421 = vmatpush2.bf16.msra.mxu0 0
  %422 = vmatprep.subr.bf16.mxu0 0
  %423 = vmatpush2.bf16.msra.mxu0 0
  %424 = vmatprep.mubr.bf16.mxu0 0
  %425 = vmatmul.mubr.bf16.gmra.mxu0 %v372
  %v426 = vpop.f32.mrf.mxu0
  %v427 = vadd.f32 %v333, %v426
  %v428 = vpop.f32.mrf.mxu0
  %v429 = vadd.f32 %v337, %v428
  %v430 = vpop.f32.mrf.mxu0
  %v431 = vadd.f32 %v333, %v430
  %v432 = vpop.f32.mrf.mxu0
  %v433 = vadd.f32 %v337, %v432
  %434 = vmatprep.mubr.bf16.mxu0 0
  %435 = vmatmul.mubr.bf16.gmra.mxu0 %v375
  %v436 = vpop.f32.mrf.mxu0
  %v437 = vadd.f32 %v333, %v436
  %v438 = vpop.f32.mrf.mxu0
  %v439 = vadd.f32 %v337, %v438
  %v440 = vpop.f32.mrf.mxu0
  %v441 = vadd.f32 %v333, %v440
  %v442 = vpop.f32.mrf.mxu0
  %v443 = vadd.f32 %v337, %v442
  %444 = vmatprep.mubr.bf16.mxu0 0
  %445 = vmatmul.mubr.bf16.gmra.mxu0 %v378
  %v446 = vpop.f32.mrf.mxu0
  %v447 = vadd.f32 %v333, %v446
  %v448 = vpop.f32.mrf.mxu0
  %v449 = vadd.f32 %v337, %v448
  %v450 = vpop.f32.mrf.mxu0
  %v451 = vadd.f32 %v333, %v450
  %v452 = vpop.f32.mrf.mxu0
  %v453 = vadd.f32 %v337, %v452
  %454 = vmatprep.mubr.bf16.mxu0 0
  %455 = vmatmul.mubr.bf16.gmra.mxu0 %v381
  %v456 = vpop.f32.mrf.mxu0
  %v457 = vadd.f32 %v333, %v456
  %v458 = vpop.f32.mrf.mxu0
  %v459 = vadd.f32 %v337, %v458
  %v460 = vpop.f32.mrf.mxu0
  %v461 = vadd.f32 %v333, %v460
  %v462 = vpop.f32.mrf.mxu0
  %v463 = vadd.f32 %v337, %v462
  %464 = vmatprep.mubr.bf16.mxu0 0
  %465 = vmatmul.mubr.bf16.gmra.mxu0 %v384
  %v466 = vpop.f32.mrf.mxu0
  %v467 = vadd.f32 %v333, %v466
  %v468 = vpop.f32.mrf.mxu0
  %v469 = vadd.f32 %v337, %v468
  %v470 = vpop.f32.mrf.mxu0
  %v471 = vadd.f32 %v333, %v470
  %v472 = vpop.f32.mrf.mxu0
  %v473 = vadd.f32 %v337, %v472
  %474 = vmatprep.mubr.bf16.mxu0 0
  %475 = vmatmul.mubr.bf16.gmra.mxu0 %v387
  %v476 = vpop.f32.mrf.mxu0
  %v477 = vadd.f32 %v333, %v476
  %v478 = vpop.f32.mrf.mxu0
  %v479 = vadd.f32 %v337, %v478
  %v480 = vpop.f32.mrf.mxu0
  %v481 = vadd.f32 %v333, %v480
  %v482 = vpop.f32.mrf.mxu0
  %v483 = vadd.f32 %v337, %v482
  %484 = vmatprep.mubr.bf16.mxu0 0
  %485 = vmatmul.mubr.bf16.gmra.mxu0 %v390
  %v486 = vpop.f32.mrf.mxu0
  %v487 = vadd.f32 %v333, %v486
  %v488 = vpop.f32.mrf.mxu0
  %v489 = vadd.f32 %v337, %v488
  %v490 = vpop.f32.mrf.mxu0
  %v491 = vadd.f32 %v333, %v490
  %v492 = vpop.f32.mrf.mxu0
  %v493 = vadd.f32 %v337, %v492
  %494 = vdwg.mxu0
  %v495 = vmax.f32 %v427, 0.0
  %v496 = vmax.f32 %v429, 0.0
  %v497 = vmax.f32 %v431, 0.0
  %v498 = vmax.f32 %v433, 0.0
  %v499 = vmax.f32 %v437, 0.0
  %v500 = vmax.f32 %v439, 0.0
  %v501 = vmax.f32 %v441, 0.0
  %v502 = vmax.f32 %v443, 0.0
  %v503 = vmax.f32 %v447, 0.0
  %v504 = vmax.f32 %v449, 0.0
  %v505 = vmax.f32 %v451, 0.0
  %v506 = vmax.f32 %v453, 0.0
  %v507 = vmax.f32 %v457, 0.0
  %v508 = vmax.f32 %v459, 0.0
  %v509 = vmax.f32 %v461, 0.0
  %v510 = vmax.f32 %v463, 0.0
  %v511 = vmax.f32 %v467, 0.0
  %v512 = vmax.f32 %v469, 0.0
  %v513 = vmax.f32 %v471, 0.0
  %v514 = vmax.f32 %v473, 0.0
  %v515 = vmax.f32 %v477, 0.0
  %v516 = vmax.f32 %v479, 0.0
  %v517 = vmax.f32 %v481, 0.0
  %v518 = vmax.f32 %v483, 0.0
  %v519 = vmax.f32 %v487, 0.0
  %v520 = vmax.f32 %v489, 0.0
  %v521 = vmax.f32 %v491, 0.0
  %v522 = vmax.f32 %v493, 0.0
  %v523 = vsel %vm83, %v497, 0.0
  %v524 = vadd.f32 %v495, %v523
  %v525 = vrot.slane %v524, 4
  %v526 = vadd.f32 %v524, %v525
  %v527 = vrot.slane %v526, 2
  %v528 = vadd.f32 %v526, %v527
  %v529 = vrot.slane %v528, 1
  %v530 = vadd.f32 %v528, %v529
  %vm531 = vcmask 785408
  %v532 = vsel %vm531, %v496, 0.0
  %vm533 = vcmask 783360
  %v534 = vsel %vm533, %v498, 0.0
  %v535 = vadd.f32 %v532, %v534
  %v536 = vrot.slane %v535, 4
  %v537 = vadd.f32 %v535, %v536
  %v538 = vrot.slane %v537, 2
  %v539 = vadd.f32 %v537, %v538
  %v540 = vrot.slane %v539, 1
  %v541 = vadd.f32 %v539, %v540
  %v548 = vrot.slane %v497, 6
  %v549 = vrot.slane %v499, 6
  %v550 = vsel %vm286, %v548, %v549
  %v551 = vrot.slane %v498, 6
  %v552 = vrot.slane %v500, 6
  %v553 = vsel %vm286, %v551, %v552
  %v554 = vrot.slane %v501, 6
  %v555 = vsel %vm286, %v549, %v554
  %v556 = vrot.slane %v502, 6
  %v557 = vsel %vm286, %v552, %v556
  %v562 = vsel %vm83, %v555, 0.0
  %v563 = vadd.f32 %v550, %v562
  %v564 = vrot.slane %v563, 4
  %v565 = vadd.f32 %v563, %v564
  %v566 = vrot.slane %v565, 2
  %v567 = vadd.f32 %v565, %v566
  %v568 = vrot.slane %v567, 1
  %v569 = vadd.f32 %v567, %v568
  %v570 = vsel %vm531, %v553, 0.0
  %v571 = vsel %vm533, %v557, 0.0
  %v572 = vadd.f32 %v570, %v571
  %v573 = vrot.slane %v572, 4
  %v574 = vadd.f32 %v572, %v573
  %v575 = vrot.slane %v574, 2
  %v576 = vadd.f32 %v574, %v575
  %v577 = vrot.slane %v576, 1
  %v578 = vadd.f32 %v576, %v577
  %v583 = vrot.slane %v501, 4
  %v584 = vrot.slane %v503, 4
  %v585 = vsel %vm277, %v583, %v584
  %v586 = vrot.slane %v502, 4
  %v587 = vrot.slane %v504, 4
  %v588 = vsel %vm277, %v586, %v587
  %v589 = vrot.slane %v505, 4
  %v590 = vsel %vm277, %v584, %v589
  %v591 = vrot.slane %v506, 4
  %v592 = vsel %vm277, %v587, %v591
  %v597 = vsel %vm83, %v590, 0.0
  %v598 = vadd.f32 %v585, %v597
  %v599 = vrot.slane %v598, 4
  %v600 = vadd.f32 %v598, %v599
  %v601 = vrot.slane %v600, 2
  %v602 = vadd.f32 %v600, %v601
  %v603 = vrot.slane %v602, 1
  %v604 = vadd.f32 %v602, %v603
  %v605 = vsel %vm531, %v588, 0.0
  %v606 = vsel %vm533, %v592, 0.0
  %v607 = vadd.f32 %v605, %v606
  %v608 = vrot.slane %v607, 4
  %v609 = vadd.f32 %v607, %v608
  %v610 = vrot.slane %v609, 2
  %v611 = vadd.f32 %v609, %v610
  %v612 = vrot.slane %v611, 1
  %v613 = vadd.f32 %v611, %v612
  %v616 = vrot.slane %v505, 2
  %v617 = vrot.slane %v507, 2
  %v618 = vsel %vm83, %v616, %v617
  %v619 = vrot.slane %v506, 2
  %v620 = vrot.slane %v508, 2
  %v621 = vsel %vm83, %v619, %v620
  %v626 = vsel %vm83, %v617, 0.0
  %v627 = vadd.f32 %v618, %v626
  %v628 = vrot.slane %v627, 4
  %v629 = vadd.f32 %v627, %v628
  %v630 = vrot.slane %v629, 2
  %v631 = vadd.f32 %v629, %v630
  %v632 = vrot.slane %v631, 1
  %v633 = vadd.f32 %v631, %v632
  %v634 = vsel %vm531, %v621, 0.0
  %v635 = vsel %vm533, %v620, 0.0
  %v636 = vadd.f32 %v634, %v635
  %v637 = vrot.slane %v636, 4
  %v638 = vadd.f32 %v636, %v637
  %v639 = vrot.slane %v638, 2
  %v640 = vadd.f32 %v638, %v639
  %v641 = vrot.slane %v640, 1
  %v642 = vadd.f32 %v640, %v641
  %v643 = vsel %vm83, %v511, 0.0
  %v644 = vadd.f32 %v509, %v643
  %v645 = vrot.slane %v644, 4
  %v646 = vadd.f32 %v644, %v645
  %v647 = vrot.slane %v646, 2
  %v648 = vadd.f32 %v646, %v647
  %v649 = vrot.slane %v648, 1
  %v650 = vadd.f32 %v648, %v649
  %v651 = vsel %vm531, %v510, 0.0
  %v652 = vsel %vm533, %v512, 0.0
  %v653 = vadd.f32 %v651, %v652
  %v654 = vrot.slane %v653, 4
  %v655 = vadd.f32 %v653, %v654
  %v656 = vrot.slane %v655, 2
  %v657 = vadd.f32 %v655, %v656
  %v658 = vrot.slane %v657, 1
  %v659 = vadd.f32 %v657, %v658
  %v666 = vrot.slane %v511, 6
  %v667 = vrot.slane %v513, 6
  %v668 = vsel %vm286, %v666, %v667
  %v669 = vrot.slane %v512, 6
  %v670 = vrot.slane %v514, 6
  %v671 = vsel %vm286, %v669, %v670
  %v672 = vrot.slane %v515, 6
  %v673 = vsel %vm286, %v667, %v672
  %v674 = vrot.slane %v516, 6
  %v675 = vsel %vm286, %v670, %v674
  %v680 = vsel %vm83, %v673, 0.0
  %v681 = vadd.f32 %v668, %v680
  %v682 = vrot.slane %v681, 4
  %v683 = vadd.f32 %v681, %v682
  %v684 = vrot.slane %v683, 2
  %v685 = vadd.f32 %v683, %v684
  %v686 = vrot.slane %v685, 1
  %v687 = vadd.f32 %v685, %v686
  %v688 = vsel %vm531, %v671, 0.0
  %v689 = vsel %vm533, %v675, 0.0
  %v690 = vadd.f32 %v688, %v689
  %v691 = vrot.slane %v690, 4
  %v692 = vadd.f32 %v690, %v691
  %v693 = vrot.slane %v692, 2
  %v694 = vadd.f32 %v692, %v693
  %v695 = vrot.slane %v694, 1
  %v696 = vadd.f32 %v694, %v695
  %v701 = vrot.slane %v515, 4
  %v702 = vrot.slane %v517, 4
  %v703 = vsel %vm277, %v701, %v702
  %v704 = vrot.slane %v516, 4
  %v705 = vrot.slane %v518, 4
  %v706 = vsel %vm277, %v704, %v705
  %v707 = vrot.slane %v519, 4
  %v708 = vsel %vm277, %v702, %v707
  %v709 = vrot.slane %v520, 4
  %v710 = vsel %vm277, %v705, %v709
  %v715 = vsel %vm83, %v708, 0.0
  %v716 = vadd.f32 %v703, %v715
  %v717 = vrot.slane %v716, 4
  %v718 = vadd.f32 %v716, %v717
  %v719 = vrot.slane %v718, 2
  %v720 = vadd.f32 %v718, %v719
  %v721 = vrot.slane %v720, 1
  %v722 = vadd.f32 %v720, %v721
  %v723 = vsel %vm531, %v706, 0.0
  %v724 = vsel %vm533, %v710, 0.0
  %v725 = vadd.f32 %v723, %v724
  %v726 = vrot.slane %v725, 4
  %v727 = vadd.f32 %v725, %v726
  %v728 = vrot.slane %v727, 2
  %v729 = vadd.f32 %v727, %v728
  %v730 = vrot.slane %v729, 1
  %v731 = vadd.f32 %v729, %v730
  %v734 = vrot.slane %v519, 2
  %v735 = vrot.slane %v521, 2
  %v736 = vsel %vm83, %v734, %v735
  %v737 = vrot.slane %v520, 2
  %v738 = vrot.slane %v522, 2
  %v739 = vsel %vm83, %v737, %v738
  %v744 = vsel %vm83, %v735, 0.0
  %v745 = vadd.f32 %v736, %v744
  %v746 = vrot.slane %v745, 4
  %v747 = vadd.f32 %v745, %v746
  %v748 = vrot.slane %v747, 2
  %v749 = vadd.f32 %v747, %v748
  %v750 = vrot.slane %v749, 1
  %v751 = vadd.f32 %v749, %v750
  %v752 = vsel %vm531, %v739, 0.0
  %v753 = vsel %vm533, %v738, 0.0
  %v754 = vadd.f32 %v752, %v753
  %v755 = vrot.slane %v754, 4
  %v756 = vadd.f32 %v754, %v755
  %v757 = vrot.slane %v756, 2
  %v758 = vadd.f32 %v756, %v757
  %v759 = vrot.slane %v758, 1
  %v760 = vadd.f32 %v758, %v759
  %vm761 = vcmask 1040384
  %v762 = vsel %vm761, %v530, %v569
  %v763 = vsel %vm761, %v541, %v578
  %v764 = vsel %vm286, %v762, %v604
  %v765 = vsel %vm286, %v763, %v613
  %vm766 = vcmask 1042432
  %v767 = vsel %vm766, %v764, %v633
  %v768 = vsel %vm766, %v765, %v642
  %v769 = vsel %vm277, %v767, %v650
  %v770 = vsel %vm277, %v768, %v659
  %vm771 = vcmask 1044480
  %v772 = vsel %vm771, %v769, %v687
  %v773 = vsel %vm771, %v770, %v696
  %v774 = vsel %vm83, %v772, %v722
  %v775 = vsel %vm83, %v773, %v731
  %v776 = vsel %vm73, %v774, %v751
  %v777 = vsel %vm73, %v775, %v760
  %v778 = vpack.c.bf16 %v776, %v776
  %v779 = vpack.c.bf16 %v777, %v777
  %v780 = vld [vmem:[%s4] sm:$0x1]
  %v782 = vlaneseq
  %v783 = vshrl.u32 %v782, 7
  %v784 = vsub.s32 0, %v783
  %v785 = vrot.slane %v780, %v784
  %v815 = vunpack.c.l.b16 %v43
  %v816 = vunpack.c.l.b16 %v44
  %v817 = vunpack.c.l.b16 %v45
  %v818 = vunpack.c.l.b16 %v46
  %v819 = vunpack.c.l.b16 %v47
  %v820 = vunpack.c.l.b16 %v48
  %v821 = vunpack.c.l.b16 %v49
  %v822 = vunpack.c.l.b16 %v50
  %v823 = vunpack.c.l.b16 %v51
  %v824 = vunpack.c.l.b16 %v52
  %v825 = vunpack.c.l.b16 %v53
  %v826 = vunpack.c.l.b16 %v54
  %v827 = vunpack.c.l.b16 %v55
  %v828 = vunpack.c.l.b16 %v56
  %v829 = vunpack.c.l.b16 %v57
  %v830 = vunpack.c.l.b16 %v58
  %v831 = vunpack.c.l.b16 %v59
  %v832 = vunpack.c.l.b16 %v60
  %v833 = vunpack.c.l.b16 %v61
  %v834 = vunpack.c.l.b16 %v62
  %v835 = vunpack.c.l.b16 %v63
  %v836 = vunpack.c.l.b16 %v64
  %v837 = vunpack.c.l.b16 %v65
  %v838 = vunpack.c.l.b16 %v66
  %v839 = vunpack.c.l.b16 %v67
  %v840 = vunpack.c.l.b16 %v68
  %v841 = vunpack.c.l.b16 %v69
  %v842 = vunpack.c.l.b16 %v70
  %v843 = vpack.c.b16 %v816, %v815
  %v844 = vpack.c.b16 %v818, %v817
  %v845 = vpack.c.b16 %v820, %v819
  %v846 = vpack.c.b16 %v822, %v821
  %v847 = vpack.c.b16 %v824, %v823
  %v848 = vpack.c.b16 %v826, %v825
  %v849 = vpack.c.b16 %v828, %v827
  %v850 = vpack.c.b16 %v830, %v829
  %v851 = vpack.c.b16 %v832, %v831
  %v852 = vpack.c.b16 %v834, %v833
  %v853 = vpack.c.b16 %v836, %v835
  %v854 = vpack.c.b16 %v838, %v837
  %v855 = vpack.c.b16 %v840, %v839
  %v856 = vpack.c.b16 %v842, %v841
  %v872 = vsel %vm531, %v779, 0
  %874 = vmatprep.subr.bf16.mxu0 0
  %875 = vmatpush1.bf16.msra.mxu0 %v850
  %876 = vmatprep.subr.bf16.mxu0 0
  %877 = vmatpush1.bf16.msra.mxu0 %v849
  %878 = vmatprep.subr.bf16.mxu0 0
  %879 = vmatpush1.bf16.msra.mxu0 %v848
  %880 = vmatprep.subr.bf16.mxu0 0
  %881 = vmatpush1.bf16.msra.mxu0 %v847
  %882 = vmatprep.subr.bf16.mxu0 0
  %883 = vmatpush1.bf16.msra.mxu0 %v846
  %884 = vmatprep.subr.bf16.mxu0 0
  %885 = vmatpush1.bf16.msra.mxu0 %v845
  %886 = vmatprep.subr.bf16.mxu0 0
  %887 = vmatpush1.bf16.msra.mxu0 %v844
  %888 = vmatprep.subr.bf16.mxu0 0
  %889 = vmatpush1.bf16.msra.mxu0 %v843
  %890 = vmatprep.subr.bf16.mxu0 0
  %891 = vmatpush2.bf16.msra.mxu0 0
  %892 = vmatprep.subr.bf16.mxu0 0
  %893 = vmatpush2.bf16.msra.mxu0 0
  %894 = vmatprep.subr.bf16.mxu0 0
  %895 = vmatpush2.bf16.msra.mxu0 %v856
  %896 = vmatprep.subr.bf16.mxu0 0
  %897 = vmatpush2.bf16.msra.mxu0 %v855
  %898 = vmatprep.subr.bf16.mxu0 0
  %899 = vmatpush2.bf16.msra.mxu0 %v854
  %900 = vmatprep.subr.bf16.mxu0 0
  %901 = vmatpush2.bf16.msra.mxu0 %v853
  %902 = vmatprep.subr.bf16.mxu0 0
  %903 = vmatpush2.bf16.msra.mxu0 %v852
  %904 = vmatprep.subr.bf16.mxu0 0
  %905 = vmatpush2.bf16.msra.mxu0 %v851
  %906 = vmatprep.mubr.bf16.mxu0 %v872
  %907 = vmatmul.mubr.bf16.gmra.mxu0 %v778
  %v908 = vpop.f32.mrf.mxu0
  %v909 = vadd.f32 %v785, %v908
  %v910 = vpop.f32.mrf.mxu0
  %v911 = vpop.f32.mrf.mxu0
  %v912 = vpop.f32.mrf.mxu0
  %913 = vdwg.mxu0
  %914 = vst [vmem:[%s5] sm:$0xff] %v909
  // Predicated region
  $region22: #{dcuelm_forward.6} parent=0 // pred_check
    _
  $region23: #{dcuelm_forward.6} parent=0 // pred_check_branch
    %916 = sbr.rel (0) target = $region25
  $region24: #{dcuelm_forward.6} parent=0 // pred_region
    _
  $region25: #{dcuelm_forward.6} parent=0 // pred_fallthru
    _
  // Predicated region
  $region26: #{dcuelm_forward.6} parent=0 // pred_check
    _
  $region27: #{dcuelm_forward.6} parent=0 // pred_check_branch
    %918 = sbr.rel (0) target = $region29
  $region28: #{dcuelm_forward.6} parent=0 // pred_region
    _
  $region29: #{dcuelm_forward.6} parent=0 // pred_fallthru
    _

// kernel: dcuelm_forward.11
$region0: #{dcuelm_forward.11}
  #allocation0 [shape = 'u32[]', space=smem, size = 0x4, offset = 0x4, fixed_abs, tag = 'smem constant byte address 0x4 - core index']
  #allocation1 [shape = 'u32[144,128]{1,0:T(1,128)}', space=vmem, size = 0x12000, scoped, tag = 'internal scratch']
  #allocation2 [shape = 'f32[8,128]{1,0:T(8,128)}', space=vmem, size = 0x1000, scoped, tag = 'scratch operand']
  %s0 = inlined_call_operand.vmem [shape: f32[8,256], index: 0, kind: input, shape index: {}]
  %s1 = inlined_call_operand.vmem [shape: bf16[256,128], index: 1, kind: input, shape index: {}]
  %s2 = inlined_call_operand.vmem [shape: f32[1,128], index: 2, kind: input, shape index: {}]
  %s3 = inlined_call_operand.vmem [shape: f32[8,128], index: 3, kind: output, shape index: {}]
  %s4 = sld [smem:[#allocation0]]
  $region30: #{dcuelm_forward.11} parent=0
    _
  %s6 = ssub.s32 1, %s4
  %s7 = scalar_select 0, %s6, %s4
  // Predicated region
  $region2: #{dcuelm_forward.11} parent=0 // pred_check
    _
  $region3: #{dcuelm_forward.11} parent=0 // pred_check_branch
    %9 = sbr.rel (0) target = $region5
  $region4: #{dcuelm_forward.11} parent=0 // pred_region
    _
  $region5: #{dcuelm_forward.11} parent=0 // pred_fallthru
    _
  // Predicated region
  $region6: #{dcuelm_forward.11} parent=0 // pred_check
    _
  $region7: #{dcuelm_forward.11} parent=0 // pred_check_branch
    %11 = sbr.rel (0) target = $region9
  $region8: #{dcuelm_forward.11} parent=0 // pred_region
    _
  $region9: #{dcuelm_forward.11} parent=0 // pred_fallthru
    _
  // Predicated region
  $region10: #{dcuelm_forward.11} parent=0 // pred_check
    _
  $region11: #{dcuelm_forward.11} parent=0 // pred_check_branch
    %13 = sbr.rel (0) target = $region13
  $region12: #{dcuelm_forward.11} parent=0 // pred_region
    _
  $region13: #{dcuelm_forward.11} parent=0 // pred_fallthru
    _
  %p15 = scmp.eq.s32.totalorder 0, 0
  // Predicated region
  $region14: #{dcuelm_forward.11} parent=0 // pred_check
    %p16 = pneg %p15
  $region15: #{dcuelm_forward.11} parent=0 // pred_check_branch
    %18 = sbr.rel (%p16) target = $region17
  $region16: #{dcuelm_forward.11} parent=0 // pred_region
    %19 = vst [vmem:[#allocation2] sm:$0xff] 0.0
  $region17: #{dcuelm_forward.11} parent=0 // pred_fallthru
    _
  %v20 = vld [vmem:[#allocation2] sm:$0xff]
  %v21 = vld [vmem:[%s0] sm:$0xff]
  %v22 = vld [vmem:[%s0 + $0x8] sm:$0xff]
  %v23 = vpack.c.bf16 %v21, %v21
  %v24 = vpack.c.bf16 %v22, %v22
  %v25 = vld [vmem:[%s1] sm:$0xf]
  %v26 = vld [vmem:[%s1 + $0x4] sm:$0xf]
  %v27 = vld [vmem:[%s1 + $0x8] sm:$0xf]
  %v28 = vld [vmem:[%s1 + $0xc] sm:$0xf]
  %v29 = vld [vmem:[%s1 + $0x10] sm:$0xf]
  %v30 = vld [vmem:[%s1 + $0x14] sm:$0xf]
  %v31 = vld [vmem:[%s1 + $0x18] sm:$0xf]
  %v32 = vld [vmem:[%s1 + $0x1c] sm:$0xf]
  %v33 = vld [vmem:[%s1 + $0x20] sm:$0xf]
  %v34 = vld [vmem:[%s1 + $0x24] sm:$0xf]
  %v35 = vld [vmem:[%s1 + $0x28] sm:$0xf]
  %v36 = vld [vmem:[%s1 + $0x2c] sm:$0xf]
  %v37 = vld [vmem:[%s1 + $0x30] sm:$0xf]
  %v38 = vld [vmem:[%s1 + $0x34] sm:$0xf]
  %v39 = vld [vmem:[%s1 + $0x38] sm:$0xf]
  %v40 = vld [vmem:[%s1 + $0x3c] sm:$0xf]
  %v41 = vld [vmem:[%s1 + $0x40] sm:$0xf]
  %v42 = vld [vmem:[%s1 + $0x44] sm:$0xf]
  %v43 = vld [vmem:[%s1 + $0x48] sm:$0xf]
  %v44 = vld [vmem:[%s1 + $0x4c] sm:$0xf]
  %v45 = vld [vmem:[%s1 + $0x50] sm:$0xf]
  %v46 = vld [vmem:[%s1 + $0x54] sm:$0xf]
  %v47 = vld [vmem:[%s1 + $0x58] sm:$0xf]
  %v48 = vld [vmem:[%s1 + $0x5c] sm:$0xf]
  %v49 = vld [vmem:[%s1 + $0x60] sm:$0xf]
  %v50 = vld [vmem:[%s1 + $0x64] sm:$0xf]
  %v51 = vld [vmem:[%s1 + $0x68] sm:$0xf]
  %v52 = vld [vmem:[%s1 + $0x6c] sm:$0xf]
  %v53 = vld [vmem:[%s1 + $0x70] sm:$0xf]
  %v54 = vld [vmem:[%s1 + $0x74] sm:$0xf]
  %v55 = vld [vmem:[%s1 + $0x78] sm:$0xf]
  %v56 = vld [vmem:[%s1 + $0x7c] sm:$0xf]
  %v89 = vunpack.c.l.b16 %v25
  %v90 = vunpack.c.l.b16 %v26
  %v91 = vunpack.c.l.b16 %v27
  %v92 = vunpack.c.l.b16 %v28
  %v93 = vunpack.c.l.b16 %v29
  %v94 = vunpack.c.l.b16 %v30
  %v95 = vunpack.c.l.b16 %v31
  %v96 = vunpack.c.l.b16 %v32
  %v97 = vunpack.c.l.b16 %v33
  %v98 = vunpack.c.l.b16 %v34
  %v99 = vunpack.c.l.b16 %v35
  %v100 = vunpack.c.l.b16 %v36
  %v101 = vunpack.c.l.b16 %v37
  %v102 = vunpack.c.l.b16 %v38
  %v103 = vunpack.c.l.b16 %v39
  %v104 = vunpack.c.l.b16 %v40
  %v105 = vunpack.c.l.b16 %v41
  %v106 = vunpack.c.l.b16 %v42
  %v107 = vunpack.c.l.b16 %v43
  %v108 = vunpack.c.l.b16 %v44
  %v109 = vunpack.c.l.b16 %v45
  %v110 = vunpack.c.l.b16 %v46
  %v111 = vunpack.c.l.b16 %v47
  %v112 = vunpack.c.l.b16 %v48
  %v113 = vunpack.c.l.b16 %v49
  %v114 = vunpack.c.l.b16 %v50
  %v115 = vunpack.c.l.b16 %v51
  %v116 = vunpack.c.l.b16 %v52
  %v117 = vunpack.c.l.b16 %v53
  %v118 = vunpack.c.l.b16 %v54
  %v119 = vunpack.c.l.b16 %v55
  %v120 = vunpack.c.l.b16 %v56
  %v121 = vpack.c.b16 %v90, %v89
  %v122 = vpack.c.b16 %v92, %v91
  %v123 = vpack.c.b16 %v94, %v93
  %v124 = vpack.c.b16 %v96, %v95
  %v125 = vpack.c.b16 %v98, %v97
  %v126 = vpack.c.b16 %v100, %v99
  %v127 = vpack.c.b16 %v102, %v101
  %v128 = vpack.c.b16 %v104, %v103
  %v129 = vpack.c.b16 %v106, %v105
  %v130 = vpack.c.b16 %v108, %v107
  %v131 = vpack.c.b16 %v110, %v109
  %v132 = vpack.c.b16 %v112, %v111
  %v133 = vpack.c.b16 %v114, %v113
  %v134 = vpack.c.b16 %v116, %v115
  %v135 = vpack.c.b16 %v118, %v117
  %v136 = vpack.c.b16 %v120, %v119
  %153 = vmatprep.subr.bf16.mxu0 0
  %154 = vmatpush1.bf16.msra.mxu0 %v128
  %155 = vmatprep.subr.bf16.mxu0 0
  %156 = vmatpush1.bf16.msra.mxu0 %v127
  %157 = vmatprep.subr.bf16.mxu0 0
  %158 = vmatpush1.bf16.msra.mxu0 %v126
  %159 = vmatprep.subr.bf16.mxu0 0
  %160 = vmatpush1.bf16.msra.mxu0 %v125
  %161 = vmatprep.subr.bf16.mxu0 0
  %162 = vmatpush1.bf16.msra.mxu0 %v124
  %163 = vmatprep.subr.bf16.mxu0 0
  %164 = vmatpush1.bf16.msra.mxu0 %v123
  %165 = vmatprep.subr.bf16.mxu0 0
  %166 = vmatpush1.bf16.msra.mxu0 %v122
  %167 = vmatprep.subr.bf16.mxu0 0
  %168 = vmatpush1.bf16.msra.mxu0 %v121
  %169 = vmatprep.subr.bf16.mxu0 0
  %170 = vmatpush2.bf16.msra.mxu0 %v136
  %171 = vmatprep.subr.bf16.mxu0 0
  %172 = vmatpush2.bf16.msra.mxu0 %v135
  %173 = vmatprep.subr.bf16.mxu0 0
  %174 = vmatpush2.bf16.msra.mxu0 %v134
  %175 = vmatprep.subr.bf16.mxu0 0
  %176 = vmatpush2.bf16.msra.mxu0 %v133
  %177 = vmatprep.subr.bf16.mxu0 0
  %178 = vmatpush2.bf16.msra.mxu0 %v132
  %179 = vmatprep.subr.bf16.mxu0 0
  %180 = vmatpush2.bf16.msra.mxu0 %v131
  %181 = vmatprep.subr.bf16.mxu0 0
  %182 = vmatpush2.bf16.msra.mxu0 %v130
  %183 = vmatprep.subr.bf16.mxu0 0
  %184 = vmatpush2.bf16.msra.mxu0 %v129
  %185 = vmatprep.mubr.bf16.mxu0 %v24
  %186 = vmatmul.mubr.bf16.gmra.mxu0 %v23
  %v187 = vpop.f32.mrf.mxu0
  %v188 = vadd.f32 0.0, %v187
  %v189 = vpop.f32.mrf.mxu0
  %v190 = vpop.f32.mrf.mxu0
  %v191 = vpop.f32.mrf.mxu0
  %192 = vdwg.mxu0
  %v193 = vadd.f32 %v20, %v188
  %194 = vst [vmem:[#allocation2] sm:$0xff] %v193
  // Predicated region
  $region18: #{dcuelm_forward.11} parent=0 // pred_check
    %p195 = pneg %p15
  $region19: #{dcuelm_forward.11} parent=0 // pred_check_branch
    %197 = sbr.rel (%p195) target = $region21
  $region20: #{dcuelm_forward.11} parent=0 // pred_region
    %v198 = vld [vmem:[#allocation2] sm:$0xff]
    %v199 = vld [vmem:[%s2] sm:$0x1]
    %v201 = vlaneseq
    %v202 = vshrl.u32 %v201, 7
    %v203 = vsub.s32 0, %v202
    %v204 = vrot.slane %v199, %v203
    %v206 = vadd.f32 %v198, %v204
    %v207 = vtanh.pop %v206
    %208 = vst [vmem:[%s3] sm:$0xff] %v207
  $region21: #{dcuelm_forward.11} parent=0 // pred_fallthru
    _
  // Predicated region
  $region22: #{dcuelm_forward.11} parent=0 // pred_check
    _
  $region23: #{dcuelm_forward.11} parent=0 // pred_check_branch
    %210 = sbr.rel (0) target = $region25
  $region24: #{dcuelm_forward.11} parent=0 // pred_region
    _
  $region25: #{dcuelm_forward.11} parent=0 // pred_fallthru
    _
  // Predicated region
  $region26: #{dcuelm_forward.11} parent=0 // pred_check
    _
  $region27: #{dcuelm_forward.11} parent=0 // pred_check_branch
    %212 = sbr.rel (0) target = $region29
  $region28: #{dcuelm_forward.11} parent=0 // pred_region
    _
  $region29: #{dcuelm_forward.11} parent=0 // pred_fallthru
    _

// kernel: dcuelm_forward.10
$region0: #{dcuelm_forward.10}
  #allocation0 [shape = 'u32[]', space=smem, size = 0x4, offset = 0x4, fixed_abs, tag = 'smem constant byte address 0x4 - core index']
  #allocation1 [shape = 'u32[144,128]{1,0:T(1,128)}', space=vmem, size = 0x12000, scoped, tag = 'internal scratch']
  %s0 = inlined_call_operand.vmem [shape: bf16[64,128], index: 0, kind: input, shape index: {}]
  %s1 = inlined_call_operand.vmem [shape: bf16[128,128], index: 1, kind: input, shape index: {}]
  %s2 = inlined_call_operand.vmem [shape: f32[1,128], index: 2, kind: input, shape index: {}]
  %s3 = inlined_call_operand.hbm [shape: f32[64,128], index: 3, kind: output, shape index: {}]
  %s4 = sld [smem:[#allocation0]]
  $region22: #{dcuelm_forward.10} parent=0
    _
  %s6 = ssub.s32 1, %s4
  %s7 = scalar_select 0, %s6, %s4
  $region1: #{dcuelm_forward.10} parent=0
    #allocation2 [shape = 'u8[32768]{0}', space=vmem, size = 0x8000, scoped, tag = 'output window, operand 0, single buffered']
    #allocation3 [shape = 's32[1]{0}', space=sflag, size = 0x4, scoped, tag = 'scoped memory for dcuelm_forward.10']
    %8 = vsyncpa [#allocation3], 0
    // Predicated region
    $region2: #{dcuelm_forward.10} parent=1 // pred_check
      _
    $region3: #{dcuelm_forward.10} parent=1 // pred_check_branch
      %10 = sbr.rel (0) target = $region5
    $region4: #{dcuelm_forward.10} parent=1 // pred_region
      _
    $region5: #{dcuelm_forward.10} parent=1 // pred_fallthru
      _
    // Predicated region
    $region6: #{dcuelm_forward.10} parent=1 // pred_check
      _
    $region7: #{dcuelm_forward.10} parent=1 // pred_check_branch
      %12 = sbr.rel (0) target = $region9
    $region8: #{dcuelm_forward.10} parent=1 // pred_region
      _
    $region9: #{dcuelm_forward.10} parent=1 // pred_fallthru
      _
    // Predicated region
    $region10: #{dcuelm_forward.10} parent=1 // pred_check
      _
    $region11: #{dcuelm_forward.10} parent=1 // pred_check_branch
      %14 = sbr.rel (0) target = $region13
    $region12: #{dcuelm_forward.10} parent=1 // pred_region
      _
    $region13: #{dcuelm_forward.10} parent=1 // pred_fallthru
      _
    %v16 = vld [vmem:[%s0] sm:$0xf]
    %v17 = vld [vmem:[%s0 + $0x4] sm:$0xf]
    %v18 = vld [vmem:[%s0 + $0x8] sm:$0xf]
    %v19 = vld [vmem:[%s0 + $0xc] sm:$0xf]
    %v20 = vld [vmem:[%s0 + $0x10] sm:$0xf]
    %v21 = vld [vmem:[%s0 + $0x14] sm:$0xf]
    %v22 = vld [vmem:[%s0 + $0x18] sm:$0xf]
    %v23 = vld [vmem:[%s0 + $0x1c] sm:$0xf]
    %v24 = vld [vmem:[%s1] sm:$0xf]
    %v25 = vld [vmem:[%s1 + $0x4] sm:$0xf]
    %v26 = vld [vmem:[%s1 + $0x8] sm:$0xf]
    %v27 = vld [vmem:[%s1 + $0xc] sm:$0xf]
    %v28 = vld [vmem:[%s1 + $0x10] sm:$0xf]
    %v29 = vld [vmem:[%s1 + $0x14] sm:$0xf]
    %v30 = vld [vmem:[%s1 + $0x18] sm:$0xf]
    %v31 = vld [vmem:[%s1 + $0x1c] sm:$0xf]
    %v32 = vld [vmem:[%s1 + $0x20] sm:$0xf]
    %v33 = vld [vmem:[%s1 + $0x24] sm:$0xf]
    %v34 = vld [vmem:[%s1 + $0x28] sm:$0xf]
    %v35 = vld [vmem:[%s1 + $0x2c] sm:$0xf]
    %v36 = vld [vmem:[%s1 + $0x30] sm:$0xf]
    %v37 = vld [vmem:[%s1 + $0x34] sm:$0xf]
    %v38 = vld [vmem:[%s1 + $0x38] sm:$0xf]
    %v39 = vld [vmem:[%s1 + $0x3c] sm:$0xf]
    %v40 = vld [vmem:[%s2] sm:$0x1]
    %v42 = vlaneseq
    %v43 = vshrl.u32 %v42, 7
    %v44 = vsub.s32 0, %v43
    %v45 = vrot.slane %v40, %v44
    %v55 = vunpack.c.l.b16 %v16
    %v56 = vunpack.c.l.b16 %v17
    %v57 = vunpack.c.l.b16 %v18
    %v58 = vunpack.c.l.b16 %v19
    %v59 = vunpack.c.l.b16 %v20
    %v60 = vunpack.c.l.b16 %v21
    %v61 = vunpack.c.l.b16 %v22
    %v62 = vunpack.c.l.b16 %v23
    %v63 = vpack.c.b16 %v56, %v55
    %v64 = vpack.c.b16 %v58, %v57
    %v65 = vpack.c.b16 %v60, %v59
    %v66 = vpack.c.b16 %v62, %v61
    %v87 = vunpack.c.l.b16 %v24
    %v88 = vunpack.c.l.b16 %v25
    %v89 = vunpack.c.l.b16 %v26
    %v90 = vunpack.c.l.b16 %v27
    %v91 = vunpack.c.l.b16 %v28
    %v92 = vunpack.c.l.b16 %v29
    %v93 = vunpack.c.l.b16 %v30
    %v94 = vunpack.c.l.b16 %v31
    %v95 = vunpack.c.l.b16 %v32
    %v96 = vunpack.c.l.b16 %v33
    %v97 = vunpack.c.l.b16 %v34
    %v98 = vunpack.c.l.b16 %v35
    %v99 = vunpack.c.l.b16 %v36
    %v100 = vunpack.c.l.b16 %v37
    %v101 = vunpack.c.l.b16 %v38
    %v102 = vunpack.c.l.b16 %v39
    %v103 = vpack.c.b16 %v88, %v87
    %v104 = vpack.c.b16 %v90, %v89
    %v105 = vpack.c.b16 %v92, %v91
    %v106 = vpack.c.b16 %v94, %v93
    %v107 = vpack.c.b16 %v96, %v95
    %v108 = vpack.c.b16 %v98, %v97
    %v109 = vpack.c.b16 %v100, %v99
    %v110 = vpack.c.b16 %v102, %v101
    %119 = vmatprep.subr.bf16.mxu0 0
    %120 = vmatpush1.bf16.msra.mxu0 %v110
    %121 = vmatprep.subr.bf16.mxu0 0
    %122 = vmatpush1.bf16.msra.mxu0 %v109
    %123 = vmatprep.subr.bf16.mxu0 0
    %124 = vmatpush1.bf16.msra.mxu0 %v108
    %125 = vmatprep.subr.bf16.mxu0 0
    %126 = vmatpush1.bf16.msra.mxu0 %v107
    %127 = vmatprep.subr.bf16.mxu0 0
    %128 = vmatpush1.bf16.msra.mxu0 %v106
    %129 = vmatprep.subr.bf16.mxu0 0
    %130 = vmatpush1.bf16.msra.mxu0 %v105
    %131 = vmatprep.subr.bf16.mxu0 0
    %132 = vmatpush1.bf16.msra.mxu0 %v104
    %133 = vmatprep.subr.bf16.mxu0 0
    %134 = vmatpush1.bf16.msra.mxu0 %v103
    %135 = vmatprep.subr.bf16.mxu0 0
    %136 = vmatpush2.bf16.msra.mxu0 0
    %137 = vmatprep.subr.bf16.mxu0 0
    %138 = vmatpush2.bf16.msra.mxu0 0
    %139 = vmatprep.subr.bf16.mxu0 0
    %140 = vmatpush2.bf16.msra.mxu0 0
    %141 = vmatprep.subr.bf16.mxu0 0
    %142 = vmatpush2.bf16.msra.mxu0 0
    %143 = vmatprep.subr.bf16.mxu0 0
    %144 = vmatpush2.bf16.msra.mxu0 0
    %145 = vmatprep.subr.bf16.mxu0 0
    %146 = vmatpush2.bf16.msra.mxu0 0
    %147 = vmatprep.subr.bf16.mxu0 0
    %148 = vmatpush2.bf16.msra.mxu0 0
    %149 = vmatprep.subr.bf16.mxu0 0
    %150 = vmatpush2.bf16.msra.mxu0 0
    %151 = vmatprep.mubr.bf16.mxu0 0
    %152 = vmatmul.mubr.bf16.gmra.mxu0 %v63
    %v153 = vpop.f32.mrf.mxu0
    %v154 = vadd.f32 %v45, %v153
    %v155 = vpop.f32.mrf.mxu0
    %v156 = vpop.f32.mrf.mxu0
    %v157 = vadd.f32 %v45, %v156
    %v158 = vpop.f32.mrf.mxu0
    %159 = vmatprep.mubr.bf16.mxu0 0
    %160 = vmatmul.mubr.bf16.gmra.mxu0 %v64
    %v161 = vpop.f32.mrf.mxu0
    %v162 = vadd.f32 %v45, %v161
    %v163 = vpop.f32.mrf.mxu0
    %v164 = vpop.f32.mrf.mxu0
    %v165 = vadd.f32 %v45, %v164
    %v166 = vpop.f32.mrf.mxu0
    %167 = vmatprep.mubr.bf16.mxu0 0
    %168 = vmatmul.mubr.bf16.gmra.mxu0 %v65
    %v169 = vpop.f32.mrf.mxu0
    %v170 = vadd.f32 %v45, %v169
    %v171 = vpop.f32.mrf.mxu0
    %v172 = vpop.f32.mrf.mxu0
    %v173 = vadd.f32 %v45, %v172
    %v174 = vpop.f32.mrf.mxu0
    %175 = vmatprep.mubr.bf16.mxu0 0
    %176 = vmatmul.mubr.bf16.gmra.mxu0 %v66
    %v177 = vpop.f32.mrf.mxu0
    %v178 = vadd.f32 %v45, %v177
    %v179 = vpop.f32.mrf.mxu0
    %v180 = vpop.f32.mrf.mxu0
    %v181 = vadd.f32 %v45, %v180
    %v182 = vpop.f32.mrf.mxu0
    %183 = vdwg.mxu0
    %184 = vmax.xlane.f32.xlu0 %v154
    %v185 = vpop.xlane.xlu0 %184
    %186 = vmax.xlane.f32.xlu0 %v157
    %v187 = vpop.xlane.xlu0 %186
    %188 = vmax.xlane.f32.xlu0 %v162
    %v189 = vpop.xlane.xlu0 %188
    %190 = vmax.xlane.f32.xlu0 %v165
    %v191 = vpop.xlane.xlu0 %190
    %192 = vmax.xlane.f32.xlu0 %v170
    %v193 = vpop.xlane.xlu0 %192
    %194 = vmax.xlane.f32.xlu0 %v173
    %v195 = vpop.xlane.xlu0 %194
    %196 = vmax.xlane.f32.xlu0 %v178
    %v197 = vpop.xlane.xlu0 %196
    %198 = vmax.xlane.f32.xlu0 %v181
    %v199 = vpop.xlane.xlu0 %198
    %v200 = vsub.f32 %v154, %v185
    %v201 = vsub.f32 %v157, %v187
    %v202 = vsub.f32 %v162, %v189
    %v203 = vsub.f32 %v165, %v191
    %v204 = vsub.f32 %v170, %v193
    %v205 = vsub.f32 %v173, %v195
    %v206 = vsub.f32 %v178, %v197
    %v207 = vsub.f32 %v181, %v199
    %v208 = vmul.f32 %v200, 1.442695
    %v209 = vpow.pop %v208
    %v210 = vmul.f32 %v201, 1.442695
    %v211 = vpow.pop %v210
    %v212 = vmul.f32 %v202, 1.442695
    %v213 = vpow.pop %v212
    %v214 = vmul.f32 %v203, 1.442695
    %v215 = vpow.pop %v214
    %v216 = vmul.f32 %v204, 1.442695
    %v217 = vpow.pop %v216
    %v218 = vmul.f32 %v205, 1.442695
    %v219 = vpow.pop %v218
    %v220 = vmul.f32 %v206, 1.442695
    %v221 = vpow.pop %v220
    %v222 = vmul.f32 %v207, 1.442695
    %v223 = vpow.pop %v222
    %224 = vadd.xlane.f32.xlu0 %v209
    %v225 = vpop.xlane.xlu0 %224
    %226 = vadd.xlane.f32.xlu0 %v211
    %v227 = vpop.xlane.xlu0 %226
    %228 = vadd.xlane.f32.xlu0 %v213
    %v229 = vpop.xlane.xlu0 %228
    %230 = vadd.xlane.f32.xlu0 %v215
    %v231 = vpop.xlane.xlu0 %230
    %232 = vadd.xlane.f32.xlu0 %v217
    %v233 = vpop.xlane.xlu0 %232
    %234 = vadd.xlane.f32.xlu0 %v219
    %v235 = vpop.xlane.xlu0 %234
    %236 = vadd.xlane.f32.xlu0 %v221
    %v237 = vpop.xlane.xlu0 %236
    %238 = vadd.xlane.f32.xlu0 %v223
    %v239 = vpop.xlane.xlu0 %238
    %v240 = vlog2.pop %v225
    %v241 = vmul.f32 %v240, 0.6931472
    %v242 = vlog2.pop %v227
    %v243 = vmul.f32 %v242, 0.6931472
    %v244 = vlog2.pop %v229
    %v245 = vmul.f32 %v244, 0.6931472
    %v246 = vlog2.pop %v231
    %v247 = vmul.f32 %v246, 0.6931472
    %v248 = vlog2.pop %v233
    %v249 = vmul.f32 %v248, 0.6931472
    %v250 = vlog2.pop %v235
    %v251 = vmul.f32 %v250, 0.6931472
    %v252 = vlog2.pop %v237
    %v253 = vmul.f32 %v252, 0.6931472
    %v254 = vlog2.pop %v239
    %v255 = vmul.f32 %v254, 0.6931472
    %v256 = vsub.f32 %v200, %v241
    %v257 = vsub.f32 %v201, %v243
    %v258 = vsub.f32 %v202, %v245
    %v259 = vsub.f32 %v203, %v247
    %v260 = vsub.f32 %v204, %v249
    %v261 = vsub.f32 %v205, %v251
    %v262 = vsub.f32 %v206, %v253
    %v263 = vsub.f32 %v207, %v255
    %264 = vst [vmem:[#allocation2] sm:$0xff] %v256
    %265 = vst [vmem:[#allocation2 + $0x8] sm:$0xff] %v257
    %266 = vst [vmem:[#allocation2 + $0x10] sm:$0xff] %v258
    %267 = vst [vmem:[#allocation2 + $0x18] sm:$0xff] %v259
    %268 = vst [vmem:[#allocation2 + $0x20] sm:$0xff] %v260
    %269 = vst [vmem:[#allocation2 + $0x28] sm:$0xff] %v261
    %270 = vst [vmem:[#allocation2 + $0x30] sm:$0xff] %v262
    %271 = vst [vmem:[#allocation2 + $0x38] sm:$0xff] %v263
    // Predicated region
    $region14: #{dcuelm_forward.10} parent=1 // pred_check
      _
    $region15: #{dcuelm_forward.10} parent=1 // pred_check_branch
      %273 = sbr.rel (0) target = $region17
    $region16: #{dcuelm_forward.10} parent=1 // pred_region
      %s275 = ssub.s32 1024, 1024
      %276 = vsyncadd [#allocation3], %s275
      %s277 = sshll.u32 [#allocation2], 4
      %s278 = int_to_ptr.vmem [resolvable:$true] %s277
      %283 = dma.vmem_to_hbm [thread:$0]  %s278, 1024, %s3, [#allocation3], 128, 128, 8
    $region17: #{dcuelm_forward.10} parent=1 // pred_fallthru
      _
    // Predicated region
    $region18: #{dcuelm_forward.10} parent=1 // pred_check
      _
    $region19: #{dcuelm_forward.10} parent=1 // pred_check_branch
      %285 = sbr.rel (0) target = $region21
    $region20: #{dcuelm_forward.10} parent=1 // pred_region
      %286 = dma.done [#allocation3], 1024
    $region21: #{dcuelm_forward.10} parent=1 // pred_fallthru
      _
    %287 = vsyncpa [#allocation3], 1

</llo_original>
